<compile_context>
chip_gen: v5e
topology: v5e:2x2
jax: 0.10.0
libtpu: 0.0.40
codegen_flags: <defaults>
</compile_context>

<pallas_src>
import functools

import jax
import jax.numpy as jnp
from jax.experimental import pallas as pl
from jax.experimental.pallas import tpu as pltpu

EPS = 1e-5


# ---------------------------------------------------------------------------
# Pallas kernel: one grid step processes `bt` images end-to-end.
# ---------------------------------------------------------------------------
def _drb_kernel(x_ref, w1_ref, b1_ref, w2_ref, *rest,
                h, w, wp, d, bt, has_proj):
    # x_ref   : (bt, Cin, h*w)     un-padded images, spatial flattened.
    # w1_ref  : (3, Cout, 3*Cin)   conv1 weights grouped by kernel row kh,
    #                              BN1 scale folded in, columns = (kw, ci).
    # b1_ref  : (Cout, 1) f32      BN1 bias.
    # w2_ref  : (3, Cout, 3*Cout)  conv2 weights grouped by kh, BN2 folded.
    # [wsc_ref: (Cout, Cin)]       1x1 shortcut weights, BN_sc scale folded.
    # bout_ref: (Cout, 1) f32      BN2 bias (+ BN_sc bias if projection).
    # mask_ref: (1, h*wp) f32      1.0 on valid output columns, 0.0 on pad.
    # o_ref   : (bt, Cout, h*wp)   output, flattened spatial at row stride wp.
    # xs_ref  : (Cin, L)  scratch  zero-padded input image (reused per image).
    # buf_ref : (Cout, L) scratch  zero-padded conv1 output (reused per image).
    if has_proj:
        wsc_ref, bout_ref, mask_ref, o_ref, xs_ref, buf_ref = rest
    else:
        bout_ref, mask_ref, o_ref, xs_ref, buf_ref = rest

    hwp = h * wp
    ctr = d * wp + d                      # flat offset of image pixel (0, 0)
    cout = buf_ref.shape[0]
    f32 = jnp.float32
    dt = o_ref.dtype

    b1 = b1_ref[...].astype(f32)          # hoisted: read broadcasts once
    bout = bout_ref[...].astype(f32)
    mask = mask_ref[...].astype(f32)

    # Zero the padding skeleton once per grid step.  Data rows and the buf
    # interior are rewritten for every image below, so only positions that
    # must stay zero are cleared here (one image-sized xs clear + two small
    # halo strips of buf -- no full buf zero-fill per image any more).
    xs_ref[...] = jnp.zeros(xs_ref.shape, xs_ref.dtype)
    buf_ref[:, 0:ctr] = jnp.zeros((cout, ctr), buf_ref.dtype)
    buf_ref[:, ctr + hwp:ctr + hwp + ctr] = jnp.zeros((cout, ctr), buf_ref.dtype)

    def conv3x3(w_ref, src_ref):
        # One MXU call per kernel row kh (K = 3*C): 3x smaller materialized
        # tap operand than a single wide-K (9*C) call.
        acc = None
        for kh in range(3):
            base = kh * d * wp
            rhs = jnp.concatenate(
                [src_ref[:, base + kw * d:base + kw * d + hwp]
                 for kw in range(3)], axis=0)           # (3*C, hwp), in dtype
            part = jnp.dot(w_ref[kh], rhs, preferred_element_type=f32)
            acc = part if acc is None else acc + part
        return acc                                      # (Cout, hwp) f32

    for bb in range(bt):
        # ---- in-kernel zero padding: copy image rows at stride wp ---------
        # TODO(synk): use a fori_loop / row-tiled grid axis once h is large
        #             enough that the unrolled copy bloats the trace.
        for i in range(h):
            xs_ref[:, ctr + i * wp:ctr + i * wp + w] = \
                x_ref[bb, :, i * w:i * w + w]

        # ---- conv1 (3x3 dilated) + BN1 + ReLU ------------------------------
        a1 = jnp.maximum(conv3x3(w1_ref, xs_ref) + b1, 0.0) * mask
        buf_ref[:, ctr:ctr + hwp] = a1.astype(buf_ref.dtype)

        # ---- conv2 (3x3 dilated) + BN2 + shortcut + ReLU --------------------
        acc = conv3x3(w2_ref, buf_ref)
        xc = xs_ref[:, ctr:ctr + hwp]                   # (Cin, hwp), in dtype
        if has_proj:
            acc = acc + jnp.dot(wsc_ref[...], xc, preferred_element_type=f32)
        else:
            acc = acc + xc                              # identity shortcut
        # Mask so the pad columns of the stored output are exact zeros.
        o_ref[bb] = (jnp.maximum(acc + bout, 0.0) * mask).astype(dt)


# ---------------------------------------------------------------------------
# Wrapper
# ---------------------------------------------------------------------------
def _fold_bn(gamma, beta, mean, var, eps=EPS):
    scale = gamma / jnp.sqrt(var + eps)
    bias = beta - mean * scale
    return scale, bias


def _conv_weight_grouped(w_oihw, scale, dtype):
    # (O, I, 3, 3) -> (3, O, 3*I): grouped by kernel row kh, columns ordered
    # (kw, i), BN scale folded in.
    o, i = w_oihw.shape[0], w_oihw.shape[1]
    w = jnp.transpose(w_oihw, (2, 0, 3, 1)).reshape(3, o, 3 * i)
    return (w * scale[None, :, None]).astype(dtype)


def _vmem_limit_bytes():
    # Generation-aware VMEM budget (v5e/v6e: 128 MiB physical, v7x: 64 MiB).
    cap = 64 * 1024 * 1024
    try:
        cap = int(pltpu.get_tpu_info().vmem_capacity_bytes)
    except Exception:
        pass
    return int(min(cap * 3 // 4, 100 * 1024 * 1024))


def _pick_bt(n, cin, cout, h, w, wp, L, itemsize, vmem_limit):
    # Images per grid step: as many as comfortably fit the VMEM budget (the
    # x/out blocks are double-buffered by the pipeline), capped to bound the
    # unrolled trace, and forced to divide the batch.
    hwp = h * wp
    per_img = 2 * cin * h * w * itemsize + 2 * cout * hwp * itemsize
    fixed = ((cin + cout) * L * itemsize             # xs + buf scratch
             + 3 * max(cin, cout) * hwp * itemsize   # one tap-group operand
             + 4 * cout * hwp * 4                    # f32 accumulators
             + (9 * cin + 9 * cout + cin) * cout * itemsize * 2)  # weights
    budget = vmem_limit // 2
    bt = max(1, min(n, 8, (budget - fixed) // max(per_img, 1)))
    while n % bt:
        bt -= 1
    return int(bt)


def dilated_residual_block_pallas(x_nchw, p, dilation, return_padded=False):
    """Forward pass of DilatedResidualBlock (eval-mode BatchNorm), NCHW in.

    If return_padded=True the output is returned as (N, Cout, H, Wp) with the
    Wp - W pad columns zeroed in-kernel (no de-pad HBM pass for consumers
    that can take the padded layout).
    """
    n, cin, h, w = x_nchw.shape
    cout = p["w1"].shape[0]
    d = int(dilation)
    wp = w + 2 * d
    hp = h + 2 * d
    hwp = h * wp                   # flattened output width (pad cols included)
    L = hp * wp + 2 * d            # flat padded length (covers the last taps)
    dtype = x_nchw.dtype
    itemsize = jnp.dtype(dtype).itemsize

    has_proj = p.get("wsc", None) is not None
    if not has_proj and cin != cout:
        raise ValueError("identity shortcut requires in_channels == out_channels")

    vmem_limit = _vmem_limit_bytes()
    bt = _pick_bt(n, cin, cout, h, w, wp, L, itemsize, vmem_limit)

    # Input stays un-padded: only a free collapsing reshape (no HBM pad pass).
    x_flat = x_nchw.reshape(n, cin, h * w)

    # Fold BN scales into the conv / shortcut weights; keep f32 biases only.
    s1, b1 = _fold_bn(p["g1"], p["be1"], p["m1"], p["v1"])
    s2, b2 = _fold_bn(p["g2"], p["be2"], p["m2"], p["v2"])
    w1g = _conv_weight_grouped(p["w1"], s1, dtype)
    w2g = _conv_weight_grouped(p["w2"], s2, dtype)
    b1c = b1[:, None].astype(jnp.float32)
    if has_proj:
        ssc, bsc = _fold_bn(p["gsc"], p["besc"], p["msc"], p["vsc"])
        wscf = (p["wsc"][:, :, 0, 0] * ssc[:, None]).astype(dtype)
        bout = (b2 + bsc)[:, None].astype(jnp.float32)
    else:
        bout = b2[:, None].astype(jnp.float32)

    # 1.0 on valid output columns (col % wp < w), 0.0 on the pad columns.
    mask = (jnp.arange(hwp, dtype=jnp.int32) % wp < w
            ).astype(jnp.float32)[None, :]

    in_specs = [
        pl.BlockSpec((bt, cin, h * w), lambda b: (b, 0, 0)),
        pl.BlockSpec((3, cout, 3 * cin), lambda b: (0, 0, 0)),
        pl.BlockSpec((cout, 1), lambda b: (0, 0)),
        pl.BlockSpec((3, cout, 3 * cout), lambda b: (0, 0, 0)),
    ]
    args = [x_flat, w1g, b1c, w2g]
    if has_proj:
        in_specs.append(pl.BlockSpec((cout, cin), lambda b: (0, 0)))
        args.append(wscf)
    in_specs += [
        pl.BlockSpec((cout, 1), lambda b: (0, 0)),
        pl.BlockSpec((1, hwp), lambda b: (0, 0)),
    ]
    args += [bout, mask]

    out = pl.pallas_call(
        functools.partial(_drb_kernel, h=h, w=w, wp=wp, d=d, bt=bt,
                          has_proj=has_proj),
        out_shape=jax.ShapeDtypeStruct((n, cout, hwp), dtype),
        grid_spec=pltpu.PrefetchScalarGridSpec(
            num_scalar_prefetch=0, grid=(n // bt,),
            in_specs=in_specs,
            out_specs=pl.BlockSpec((bt, cout, hwp), lambda b: (b, 0, 0)),
            scratch_shapes=[pltpu.VMEM((cin, L), dtype),
                            pltpu.VMEM((cout, L), dtype)]),
        compiler_params=pltpu.CompilerParams(
            dimension_semantics=("parallel",),
            vmem_limit_bytes=vmem_limit),
    )(*args)

    out = out.reshape(n, cout, h, wp)
    if return_padded:
        return out                     # pad columns are exact zeros
    return out[:, :, :, :w]


# ---------------------------------------------------------------------------
# Pure-JAX reference (mirrors the PyTorch module in eval mode)
# ---------------------------------------------------------------------------
def _ref_forward(x, p, dil, eps=EPS):
    def conv(x, w, d, pad):
        return jax.lax.conv_general_dilated(
            x, w, window_strides=(1, 1), padding=[(pad, pad), (pad, pad)],
            rhs_dilation=(d, d), dimension_numbers=("NCHW", "OIHW", "NCHW"))

    def bn(x, g, b, m, v):
        s = (g / jnp.sqrt(v + eps))[None, :, None, None]
        return (x - m[None, :, None, None]) * s + b[None, :, None, None]

    out = jax.nn.relu(bn(conv(x, p["w1"], dil, dil),
                         p["g1"], p["be1"], p["m1"], p["v1"]))
    out = bn(conv(out, p["w2"], dil, dil),
             p["g2"], p["be2"], p["m2"], p["v2"])
    if p["wsc"] is not None:
        sc = bn(conv(x, p["wsc"], 1, 0),
                p["gsc"], p["besc"], p["msc"], p["vsc"])
    else:
        sc = x
    return jax.nn.relu(out + sc)


# ---------------------------------------------------------------------------
if __name__ == "__main__":
    def bn_init(k, c):
        k1, k2, k3, k4 = jax.random.split(k, 4)
        return (1.0 + 0.1 * jax.random.normal(k1, (c,), jnp.float32),  # gamma
                0.1 * jax.random.normal(k2, (c,), jnp.float32),        # beta
                0.1 * jax.random.normal(k3, (c,), jnp.float32),        # run mean
                jax.random.uniform(k4, (c,), jnp.float32, 0.5, 1.5))   # run var

    # --- test 1: projection shortcut (in_channels != out_channels) ----------
    N, Cin, Cout, H, W, DIL = 2, 8, 16, 16, 16, 2
    keys = jax.random.split(jax.random.PRNGKey(0), 8)
    x = jax.random.normal(keys[0], (N, Cin, H, W), jnp.float32)
    g1, be1, m1, v1 = bn_init(keys[4], Cout)
    g2, be2, m2, v2 = bn_init(keys[5], Cout)
    gsc, besc, msc, vsc = bn_init(keys[6], Cout)
    params = dict(
        w1=0.1 * jax.random.normal(keys[1], (Cout, Cin, 3, 3), jnp.float32),
        w2=0.1 * jax.random.normal(keys[2], (Cout, Cout, 3, 3), jnp.float32),
        wsc=0.1 * jax.random.normal(keys[3], (Cout, Cin, 1, 1), jnp.float32),
        g1=g1, be1=be1, m1=m1, v1=v1,
        g2=g2, be2=be2, m2=m2, v2=v2,
        gsc=gsc, besc=besc, msc=msc, vsc=vsc)

    out = jax.block_until_ready(dilated_residual_block_pallas(x, params, DIL))
    assert out.shape == (N, Cout, H, W), out.shape
    ref = _ref_forward(x, params, DIL)
    err = float(jnp.max(jnp.abs(out - ref)))
    assert jnp.allclose(out, ref, rtol=2e-3, atol=2e-3), err

    # --- test 2: identity shortcut (in_channels == out_channels) ------------
    N2, C2, H2, W2, DIL2 = 2, 16, 8, 8, 1
    keys2 = jax.random.split(jax.random.PRNGKey(1), 6)
    x2 = jax.random.normal(keys2[0], (N2, C2, H2, W2), jnp.float32)
    g1b, be1b, m1b, v1b = bn_init(keys2[3], C2)
    g2b, be2b, m2b, v2b = bn_init(keys2[4], C2)
    params2 = dict(
        w1=0.1 * jax.random.normal(keys2[1], (C2, C2, 3, 3), jnp.float32),
        w2=0.1 * jax.random.normal(keys2[2], (C2, C2, 3, 3), jnp.float32),
        wsc=None,
        g1=g1b, be1=be1b, m1=m1b, v1=v1b,
        g2=g2b, be2=be2b, m2=m2b, v2=v2b)

    out2 = jax.block_until_ready(
        dilated_residual_block_pallas(x2, params2, DIL2))
    assert out2.shape == (N2, C2, H2, W2), out2.shape
    ref2 = _ref_forward(x2, params2, DIL2)
    err2 = float(jnp.max(jnp.abs(out2 - ref2)))
    assert jnp.allclose(out2, ref2, rtol=2e-3, atol=2e-3), err2

    print("KERNEL_OK")
</pallas_src>

<mosaic_0001>
module attributes {stable_mosaic.version = 11 : i64} {
  func.func @_drb_kernel(%arg0: i32, %arg1: memref<2x8x256xf32, #tpu.memory_space<vmem>>, %arg2: memref<3x16x24xf32, #tpu.memory_space<vmem>>, %arg3: memref<16x1xf32, #tpu.memory_space<vmem>>, %arg4: memref<3x16x48xf32, #tpu.memory_space<vmem>>, %arg5: memref<16x8xf32, #tpu.memory_space<vmem>>, %arg6: memref<16x1xf32, #tpu.memory_space<vmem>>, %arg7: memref<1x320xf32, #tpu.memory_space<vmem>>, %arg8: memref<2x16x320xf32, #tpu.memory_space<vmem>>, %arg9: memref<8x404xf32, #tpu.memory_space<vmem>>, %arg10: memref<16x404xf32, #tpu.memory_space<vmem>>) attributes {dimension_semantics = [#tpu.dimension_semantics<parallel>], iteration_bounds = array<i64: 1>, scalar_prefetch = 0 : i64, scratch_operands = 2 : i64, tpu.core_type = #tpu.core_type<tc>, window_params = [{transform_indices = @transform_0, window_bounds = array<i64: 2, 8, 256>}, {pipeline_mode = #tpu.pipeline_mode<synchronous>, transform_indices = @transform_1, window_bounds = array<i64: 3, 16, 24>}, {pipeline_mode = #tpu.pipeline_mode<synchronous>, transform_indices = @transform_2, window_bounds = array<i64: 16, 1>}, {pipeline_mode = #tpu.pipeline_mode<synchronous>, transform_indices = @transform_3, window_bounds = array<i64: 3, 16, 48>}, {pipeline_mode = #tpu.pipeline_mode<synchronous>, transform_indices = @transform_4, window_bounds = array<i64: 16, 8>}, {pipeline_mode = #tpu.pipeline_mode<synchronous>, transform_indices = @transform_5, window_bounds = array<i64: 16, 1>}, {pipeline_mode = #tpu.pipeline_mode<synchronous>, transform_indices = @transform_6, window_bounds = array<i64: 1, 320>}, {transform_indices = @transform_7, window_bounds = array<i64: 2, 16, 320>}]} {
    %c0 = arith.constant 0 : index
    %c0_0 = arith.constant 0 : index
    %0 = vector.load %arg3[%c0, %c0_0] : memref<16x1xf32, #tpu.memory_space<vmem>>, vector<16x1xf32>
    %c0_1 = arith.constant 0 : index
    %c0_2 = arith.constant 0 : index
    %1 = vector.load %arg6[%c0_1, %c0_2] : memref<16x1xf32, #tpu.memory_space<vmem>>, vector<16x1xf32>
    %c0_3 = arith.constant 0 : index
    %c0_4 = arith.constant 0 : index
    %2 = vector.load %arg7[%c0_3, %c0_4] : memref<1x320xf32, #tpu.memory_space<vmem>>, vector<1x320xf32>
    %cst = arith.constant 0.000000e+00 : f32
    %3 = vector.broadcast %cst : f32 to vector<8x404xf32>
    %c0_5 = arith.constant 0 : index
    %c0_6 = arith.constant 0 : index
    %4 = vector.load %arg9[%c0_5, %c0_6] : memref<8x404xf32, #tpu.memory_space<vmem>>, vector<8x404xf32>
    tpu.vector_store %arg9[%c0_5, %c0_6], %3 {strides = array<i32>} : memref<8x404xf32, #tpu.memory_space<vmem>>, vector<8x404xf32>,
    %cst_7 = arith.constant 0.000000e+00 : f32
    %5 = vector.broadcast %cst_7 : f32 to vector<16x42xf32>
    %c0_8 = arith.constant 0 : index
    %c0_9 = arith.constant 0 : index
    %6 = vector.load %arg10[%c0_8, %c0_9] : memref<16x404xf32, #tpu.memory_space<vmem>>, vector<16x42xf32>
    tpu.vector_store %arg10[%c0_8, %c0_9], %5 {strides = array<i32>} : memref<16x404xf32, #tpu.memory_space<vmem>>, vector<16x42xf32>,
    %cst_10 = arith.constant 0.000000e+00 : f32
    %7 = vector.broadcast %cst_10 : f32 to vector<16x42xf32>
    %c0_11 = arith.constant 0 : index
    %c362 = arith.constant 362 : index
    %8 = vector.load %arg10[%c0_11, %c362] : memref<16x404xf32, #tpu.memory_space<vmem>>, vector<16x42xf32>
    tpu.vector_store %arg10[%c0_11, %c362], %7 {strides = array<i32>} : memref<16x404xf32, #tpu.memory_space<vmem>>, vector<16x42xf32>,
    %c0_12 = arith.constant 0 : index
    %c0_13 = arith.constant 0 : index
    %c0_14 = arith.constant 0 : index
    %9 = vector.load %arg1[%c0_12, %c0_13, %c0_14] : memref<2x8x256xf32, #tpu.memory_space<vmem>>, vector<1x8x16xf32>
    %10 = vector.shape_cast %9 : vector<1x8x16xf32> to vector<8x16xf32>
    %c0_15 = arith.constant 0 : index
    %c42 = arith.constant 42 : index
    %11 = vector.load %arg9[%c0_15, %c42] : memref<8x404xf32, #tpu.memory_space<vmem>>, vector<8x16xf32>
    tpu.vector_store %arg9[%c0_15, %c42], %10 {strides = array<i32>} : memref<8x404xf32, #tpu.memory_space<vmem>>, vector<8x16xf32>,
    %c0_16 = arith.constant 0 : index
    %c0_17 = arith.constant 0 : index
    %c16 = arith.constant 16 : index
    %12 = vector.load %arg1[%c0_16, %c0_17, %c16] : memref<2x8x256xf32, #tpu.memory_space<vmem>>, vector<1x8x16xf32>
    %13 = vector.shape_cast %12 : vector<1x8x16xf32> to vector<8x16xf32>
    %c0_18 = arith.constant 0 : index
    %c62 = arith.constant 62 : index
    %14 = vector.load %arg9[%c0_18, %c62] : memref<8x404xf32, #tpu.memory_space<vmem>>, vector<8x16xf32>
    tpu.vector_store %arg9[%c0_18, %c62], %13 {strides = array<i32>} : memref<8x404xf32, #tpu.memory_space<vmem>>, vector<8x16xf32>,
    %c0_19 = arith.constant 0 : index
    %c0_20 = arith.constant 0 : index
    %c32 = arith.constant 32 : index
    %15 = vector.load %arg1[%c0_19, %c0_20, %c32] : memref<2x8x256xf32, #tpu.memory_space<vmem>>, vector<1x8x16xf32>
    %16 = vector.shape_cast %15 : vector<1x8x16xf32> to vector<8x16xf32>
    %c0_21 = arith.constant 0 : index
    %c82 = arith.constant 82 : index
    %17 = vector.load %arg9[%c0_21, %c82] : memref<8x404xf32, #tpu.memory_space<vmem>>, vector<8x16xf32>
    tpu.vector_store %arg9[%c0_21, %c82], %16 {strides = array<i32>} : memref<8x404xf32, #tpu.memory_space<vmem>>, vector<8x16xf32>,
    %c0_22 = arith.constant 0 : index
    %c0_23 = arith.constant 0 : index
    %c48 = arith.constant 48 : index
    %18 = vector.load %arg1[%c0_22, %c0_23, %c48] : memref<2x8x256xf32, #tpu.memory_space<vmem>>, vector<1x8x16xf32>
    %19 = vector.shape_cast %18 : vector<1x8x16xf32> to vector<8x16xf32>
    %c0_24 = arith.constant 0 : index
    %c102 = arith.constant 102 : index
    %20 = vector.load %arg9[%c0_24, %c102] : memref<8x404xf32, #tpu.memory_space<vmem>>, vector<8x16xf32>
    tpu.vector_store %arg9[%c0_24, %c102], %19 {strides = array<i32>} : memref<8x404xf32, #tpu.memory_space<vmem>>, vector<8x16xf32>,
    %c0_25 = arith.constant 0 : index
    %c0_26 = arith.constant 0 : index
    %c64 = arith.constant 64 : index
    %21 = vector.load %arg1[%c0_25, %c0_26, %c64] : memref<2x8x256xf32, #tpu.memory_space<vmem>>, vector<1x8x16xf32>
    %22 = vector.shape_cast %21 : vector<1x8x16xf32> to vector<8x16xf32>
    %c0_27 = arith.constant 0 : index
    %c122 = arith.constant 122 : index
    %23 = vector.load %arg9[%c0_27, %c122] : memref<8x404xf32, #tpu.memory_space<vmem>>, vector<8x16xf32>
    tpu.vector_store %arg9[%c0_27, %c122], %22 {strides = array<i32>} : memref<8x404xf32, #tpu.memory_space<vmem>>, vector<8x16xf32>,
    %c0_28 = arith.constant 0 : index
    %c0_29 = arith.constant 0 : index
    %c80 = arith.constant 80 : index
    %24 = vector.load %arg1[%c0_28, %c0_29, %c80] : memref<2x8x256xf32, #tpu.memory_space<vmem>>, vector<1x8x16xf32>
    %25 = vector.shape_cast %24 : vector<1x8x16xf32> to vector<8x16xf32>
    %c0_30 = arith.constant 0 : index
    %c142 = arith.constant 142 : index
    %26 = vector.load %arg9[%c0_30, %c142] : memref<8x404xf32, #tpu.memory_space<vmem>>, vector<8x16xf32>
    tpu.vector_store %arg9[%c0_30, %c142], %25 {strides = array<i32>} : memref<8x404xf32, #tpu.memory_space<vmem>>, vector<8x16xf32>,
    %c0_31 = arith.constant 0 : index
    %c0_32 = arith.constant 0 : index
    %c96 = arith.constant 96 : index
    %27 = vector.load %arg1[%c0_31, %c0_32, %c96] : memref<2x8x256xf32, #tpu.memory_space<vmem>>, vector<1x8x16xf32>
    %28 = vector.shape_cast %27 : vector<1x8x16xf32> to vector<8x16xf32>
    %c0_33 = arith.constant 0 : index
    %c162 = arith.constant 162 : index
    %29 = vector.load %arg9[%c0_33, %c162] : memref<8x404xf32, #tpu.memory_space<vmem>>, vector<8x16xf32>
    tpu.vector_store %arg9[%c0_33, %c162], %28 {strides = array<i32>} : memref<8x404xf32, #tpu.memory_space<vmem>>, vector<8x16xf32>,
    %c0_34 = arith.constant 0 : index
    %c0_35 = arith.constant 0 : index
    %c112 = arith.constant 112 : index
    %30 = vector.load %arg1[%c0_34, %c0_35, %c112] : memref<2x8x256xf32, #tpu.memory_space<vmem>>, vector<1x8x16xf32>
    %31 = vector.shape_cast %30 : vector<1x8x16xf32> to vector<8x16xf32>
    %c0_36 = arith.constant 0 : index
    %c182 = arith.constant 182 : index
    %32 = vector.load %arg9[%c0_36, %c182] : memref<8x404xf32, #tpu.memory_space<vmem>>, vector<8x16xf32>
    tpu.vector_store %arg9[%c0_36, %c182], %31 {strides = array<i32>} : memref<8x404xf32, #tpu.memory_space<vmem>>, vector<8x16xf32>,
    %c0_37 = arith.constant 0 : index
    %c0_38 = arith.constant 0 : index
    %c128 = arith.constant 128 : index
    %33 = vector.load %arg1[%c0_37, %c0_38, %c128] : memref<2x8x256xf32, #tpu.memory_space<vmem>>, vector<1x8x16xf32>
    %34 = vector.shape_cast %33 : vector<1x8x16xf32> to vector<8x16xf32>
    %c0_39 = arith.constant 0 : index
    %c202 = arith.constant 202 : index
    %35 = vector.load %arg9[%c0_39, %c202] : memref<8x404xf32, #tpu.memory_space<vmem>>, vector<8x16xf32>
    tpu.vector_store %arg9[%c0_39, %c202], %34 {strides = array<i32>} : memref<8x404xf32, #tpu.memory_space<vmem>>, vector<8x16xf32>,
    %c0_40 = arith.constant 0 : index
    %c0_41 = arith.constant 0 : index
    %c144 = arith.constant 144 : index
    %36 = vector.load %arg1[%c0_40, %c0_41, %c144] : memref<2x8x256xf32, #tpu.memory_space<vmem>>, vector<1x8x16xf32>
    %37 = vector.shape_cast %36 : vector<1x8x16xf32> to vector<8x16xf32>
    %c0_42 = arith.constant 0 : index
    %c222 = arith.constant 222 : index
    %38 = vector.load %arg9[%c0_42, %c222] : memref<8x404xf32, #tpu.memory_space<vmem>>, vector<8x16xf32>
    tpu.vector_store %arg9[%c0_42, %c222], %37 {strides = array<i32>} : memref<8x404xf32, #tpu.memory_space<vmem>>, vector<8x16xf32>,
    %c0_43 = arith.constant 0 : index
    %c0_44 = arith.constant 0 : index
    %c160 = arith.constant 160 : index
    %39 = vector.load %arg1[%c0_43, %c0_44, %c160] : memref<2x8x256xf32, #tpu.memory_space<vmem>>, vector<1x8x16xf32>
    %40 = vector.shape_cast %39 : vector<1x8x16xf32> to vector<8x16xf32>
    %c0_45 = arith.constant 0 : index
    %c242 = arith.constant 242 : index
    %41 = vector.load %arg9[%c0_45, %c242] : memref<8x404xf32, #tpu.memory_space<vmem>>, vector<8x16xf32>
    tpu.vector_store %arg9[%c0_45, %c242], %40 {strides = array<i32>} : memref<8x404xf32, #tpu.memory_space<vmem>>, vector<8x16xf32>,
    %c0_46 = arith.constant 0 : index
    %c0_47 = arith.constant 0 : index
    %c176 = arith.constant 176 : index
    %42 = vector.load %arg1[%c0_46, %c0_47, %c176] : memref<2x8x256xf32, #tpu.memory_space<vmem>>, vector<1x8x16xf32>
    %43 = vector.shape_cast %42 : vector<1x8x16xf32> to vector<8x16xf32>
    %c0_48 = arith.constant 0 : index
    %c262 = arith.constant 262 : index
    %44 = vector.load %arg9[%c0_48, %c262] : memref<8x404xf32, #tpu.memory_space<vmem>>, vector<8x16xf32>
    tpu.vector_store %arg9[%c0_48, %c262], %43 {strides = array<i32>} : memref<8x404xf32, #tpu.memory_space<vmem>>, vector<8x16xf32>,
    %c0_49 = arith.constant 0 : index
    %c0_50 = arith.constant 0 : index
    %c192 = arith.constant 192 : index
    %45 = vector.load %arg1[%c0_49, %c0_50, %c192] : memref<2x8x256xf32, #tpu.memory_space<vmem>>, vector<1x8x16xf32>
    %46 = vector.shape_cast %45 : vector<1x8x16xf32> to vector<8x16xf32>
    %c0_51 = arith.constant 0 : index
    %c282 = arith.constant 282 : index
    %47 = vector.load %arg9[%c0_51, %c282] : memref<8x404xf32, #tpu.memory_space<vmem>>, vector<8x16xf32>
    tpu.vector_store %arg9[%c0_51, %c282], %46 {strides = array<i32>} : memref<8x404xf32, #tpu.memory_space<vmem>>, vector<8x16xf32>,
    %c0_52 = arith.constant 0 : index
    %c0_53 = arith.constant 0 : index
    %c208 = arith.constant 208 : index
    %48 = vector.load %arg1[%c0_52, %c0_53, %c208] : memref<2x8x256xf32, #tpu.memory_space<vmem>>, vector<1x8x16xf32>
    %49 = vector.shape_cast %48 : vector<1x8x16xf32> to vector<8x16xf32>
    %c0_54 = arith.constant 0 : index
    %c302 = arith.constant 302 : index
    %50 = vector.load %arg9[%c0_54, %c302] : memref<8x404xf32, #tpu.memory_space<vmem>>, vector<8x16xf32>
    tpu.vector_store %arg9[%c0_54, %c302], %49 {strides = array<i32>} : memref<8x404xf32, #tpu.memory_space<vmem>>, vector<8x16xf32>,
    %c0_55 = arith.constant 0 : index
    %c0_56 = arith.constant 0 : index
    %c224 = arith.constant 224 : index
    %51 = vector.load %arg1[%c0_55, %c0_56, %c224] : memref<2x8x256xf32, #tpu.memory_space<vmem>>, vector<1x8x16xf32>
    %52 = vector.shape_cast %51 : vector<1x8x16xf32> to vector<8x16xf32>
    %c0_57 = arith.constant 0 : index
    %c322 = arith.constant 322 : index
    %53 = vector.load %arg9[%c0_57, %c322] : memref<8x404xf32, #tpu.memory_space<vmem>>, vector<8x16xf32>
    tpu.vector_store %arg9[%c0_57, %c322], %52 {strides = array<i32>} : memref<8x404xf32, #tpu.memory_space<vmem>>, vector<8x16xf32>,
    %c0_58 = arith.constant 0 : index
    %c0_59 = arith.constant 0 : index
    %c240 = arith.constant 240 : index
    %54 = vector.load %arg1[%c0_58, %c0_59, %c240] : memref<2x8x256xf32, #tpu.memory_space<vmem>>, vector<1x8x16xf32>
    %55 = vector.shape_cast %54 : vector<1x8x16xf32> to vector<8x16xf32>
    %c0_60 = arith.constant 0 : index
    %c342 = arith.constant 342 : index
    %56 = vector.load %arg9[%c0_60, %c342] : memref<8x404xf32, #tpu.memory_space<vmem>>, vector<8x16xf32>
    tpu.vector_store %arg9[%c0_60, %c342], %55 {strides = array<i32>} : memref<8x404xf32, #tpu.memory_space<vmem>>, vector<8x16xf32>,
    %c0_61 = arith.constant 0 : index
    %c0_62 = arith.constant 0 : index
    %57 = vector.load %arg9[%c0_61, %c0_62] : memref<8x404xf32, #tpu.memory_space<vmem>>, vector<8x320xf32>
    %c0_63 = arith.constant 0 : index
    %c2 = arith.constant 2 : index
    %58 = vector.load %arg9[%c0_63, %c2] : memref<8x404xf32, #tpu.memory_space<vmem>>, vector<8x320xf32>
    %c0_64 = arith.constant 0 : index
    %c4 = arith.constant 4 : index
    %59 = vector.load %arg9[%c0_64, %c4] : memref<8x404xf32, #tpu.memory_space<vmem>>, vector<8x320xf32>
    %60 = tpu.concatenate %57, %58, %59 in 0 : vector<8x320xf32>, vector<8x320xf32>, vector<8x320xf32> -> vector<24x320xf32>
    %c0_65 = arith.constant 0 : index
    %c0_66 = arith.constant 0 : index
    %c0_67 = arith.constant 0 : index
    %61 = vector.load %arg2[%c0_65, %c0_66, %c0_67] : memref<3x16x24xf32, #tpu.memory_space<vmem>>, vector<1x16x24xf32>
    %62 = vector.shape_cast %61 : vector<1x16x24xf32> to vector<16x24xf32>
    %cst_68 = arith.constant dense<0.000000e+00> : vector<16x320xf32>
    %63 = tpu.matmul %62, %60, %cst_68 {dimension_numbers = #tpu.dot_dimension_numbers<[1], [0], [0], [1], [0, 0, 1, 1], [], []>} : vector<16x24xf32>, vector<24x320xf32>, vector<16x320xf32> -> vector<16x320xf32>
    %c0_69 = arith.constant 0 : index
    %c40 = arith.constant 40 : index
    %64 = vector.load %arg9[%c0_69, %c40] : memref<8x404xf32, #tpu.memory_space<vmem>>, vector<8x320xf32>
    %c0_70 = arith.constant 0 : index
    %c42_71 = arith.constant 42 : index
    %65 = vector.load %arg9[%c0_70, %c42_71] : memref<8x404xf32, #tpu.memory_space<vmem>>, vector<8x320xf32>
    %c0_72 = arith.constant 0 : index
    %c44 = arith.constant 44 : index
    %66 = vector.load %arg9[%c0_72, %c44] : memref<8x404xf32, #tpu.memory_space<vmem>>, vector<8x320xf32>
    %67 = tpu.concatenate %64, %65, %66 in 0 : vector<8x320xf32>, vector<8x320xf32>, vector<8x320xf32> -> vector<24x320xf32>
    %c1 = arith.constant 1 : index
    %c0_73 = arith.constant 0 : index
    %c0_74 = arith.constant 0 : index
    %68 = vector.load %arg2[%c1, %c0_73, %c0_74] : memref<3x16x24xf32, #tpu.memory_space<vmem>>, vector<1x16x24xf32>
    %69 = vector.shape_cast %68 : vector<1x16x24xf32> to vector<16x24xf32>
    %cst_75 = arith.constant dense<0.000000e+00> : vector<16x320xf32>
    %70 = tpu.matmul %69, %67, %cst_75 {dimension_numbers = #tpu.dot_dimension_numbers<[1], [0], [0], [1], [0, 0, 1, 1], [], []>} : vector<16x24xf32>, vector<24x320xf32>, vector<16x320xf32> -> vector<16x320xf32>
    %71 = arith.addf %63, %70 : vector<16x320xf32>
    %c0_76 = arith.constant 0 : index
    %c80_77 = arith.constant 80 : index
    %72 = vector.load %arg9[%c0_76, %c80_77] : memref<8x404xf32, #tpu.memory_space<vmem>>, vector<8x320xf32>
    %c0_78 = arith.constant 0 : index
    %c82_79 = arith.constant 82 : index
    %73 = vector.load %arg9[%c0_78, %c82_79] : memref<8x404xf32, #tpu.memory_space<vmem>>, vector<8x320xf32>
    %c0_80 = arith.constant 0 : index
    %c84 = arith.constant 84 : index
    %74 = vector.load %arg9[%c0_80, %c84] : memref<8x404xf32, #tpu.memory_space<vmem>>, vector<8x320xf32>
    %75 = tpu.concatenate %72, %73, %74 in 0 : vector<8x320xf32>, vector<8x320xf32>, vector<8x320xf32> -> vector<24x320xf32>
    %c2_81 = arith.constant 2 : index
    %c0_82 = arith.constant 0 : index
    %c0_83 = arith.constant 0 : index
    %76 = vector.load %arg2[%c2_81, %c0_82, %c0_83] : memref<3x16x24xf32, #tpu.memory_space<vmem>>, vector<1x16x24xf32>
    %77 = vector.shape_cast %76 : vector<1x16x24xf32> to vector<16x24xf32>
    %cst_84 = arith.constant dense<0.000000e+00> : vector<16x320xf32>
    %78 = tpu.matmul %77, %75, %cst_84 {dimension_numbers = #tpu.dot_dimension_numbers<[1], [0], [0], [1], [0, 0, 1, 1], [], []>} : vector<16x24xf32>, vector<24x320xf32>, vector<16x320xf32> -> vector<16x320xf32>
    %79 = arith.addf %71, %78 : vector<16x320xf32>
    %80 = vector.broadcast %0 : vector<16x1xf32> to vector<16x320xf32>
    %81 = arith.addf %79, %80 : vector<16x320xf32>
    %cst_85 = arith.constant 0.000000e+00 : f32
    %82 = vector.broadcast %cst_85 : f32 to vector<16x320xf32>
    %83 = arith.maximumf %81, %82 : vector<16x320xf32>
    %84 = vector.broadcast %2 : vector<1x320xf32> to vector<16x320xf32>
    %85 = arith.mulf %83, %84 : vector<16x320xf32>
    %c0_86 = arith.constant 0 : index
    %c42_87 = arith.constant 42 : index
    %86 = vector.load %arg10[%c0_86, %c42_87] : memref<16x404xf32, #tpu.memory_space<vmem>>, vector<16x320xf32>
    tpu.vector_store %arg10[%c0_86, %c42_87], %85 {strides = array<i32>} : memref<16x404xf32, #tpu.memory_space<vmem>>, vector<16x320xf32>,
    %c0_88 = arith.constant 0 : index
    %c0_89 = arith.constant 0 : index
    %87 = vector.load %arg10[%c0_88, %c0_89] : memref<16x404xf32, #tpu.memory_space<vmem>>, vector<16x320xf32>
    %c0_90 = arith.constant 0 : index
    %c2_91 = arith.constant 2 : index
    %88 = vector.load %arg10[%c0_90, %c2_91] : memref<16x404xf32, #tpu.memory_space<vmem>>, vector<16x320xf32>
    %c0_92 = arith.constant 0 : index
    %c4_93 = arith.constant 4 : index
    %89 = vector.load %arg10[%c0_92, %c4_93] : memref<16x404xf32, #tpu.memory_space<vmem>>, vector<16x320xf32>
    %90 = tpu.concatenate %87, %88, %89 in 0 : vector<16x320xf32>, vector<16x320xf32>, vector<16x320xf32> -> vector<48x320xf32>
    %c0_94 = arith.constant 0 : index
    %c0_95 = arith.constant 0 : index
    %c0_96 = arith.constant 0 : index
    %91 = vector.load %arg4[%c0_94, %c0_95, %c0_96] : memref<3x16x48xf32, #tpu.memory_space<vmem>>, vector<1x16x48xf32>
    %92 = vector.shape_cast %91 : vector<1x16x48xf32> to vector<16x48xf32>
    %cst_97 = arith.constant dense<0.000000e+00> : vector<16x320xf32>
    %93 = tpu.matmul %92, %90, %cst_97 {dimension_numbers = #tpu.dot_dimension_numbers<[1], [0], [0], [1], [0, 0, 1, 1], [], []>} : vector<16x48xf32>, vector<48x320xf32>, vector<16x320xf32> -> vector<16x320xf32>
    %c0_98 = arith.constant 0 : index
    %c40_99 = arith.constant 40 : index
    %94 = vector.load %arg10[%c0_98, %c40_99] : memref<16x404xf32, #tpu.memory_space<vmem>>, vector<16x320xf32>
    %c0_100 = arith.constant 0 : index
    %c42_101 = arith.constant 42 : index
    %95 = vector.load %arg10[%c0_100, %c42_101] : memref<16x404xf32, #tpu.memory_space<vmem>>, vector<16x320xf32>
    %c0_102 = arith.constant 0 : index
    %c44_103 = arith.constant 44 : index
    %96 = vector.load %arg10[%c0_102, %c44_103] : memref<16x404xf32, #tpu.memory_space<vmem>>, vector<16x320xf32>
    %97 = tpu.concatenate %94, %95, %96 in 0 : vector<16x320xf32>, vector<16x320xf32>, vector<16x320xf32> -> vector<48x320xf32>
    %c1_104 = arith.constant 1 : index
    %c0_105 = arith.constant 0 : index
    %c0_106 = arith.constant 0 : index
    %98 = vector.load %arg4[%c1_104, %c0_105, %c0_106] : memref<3x16x48xf32, #tpu.memory_space<vmem>>, vector<1x16x48xf32>
    %99 = vector.shape_cast %98 : vector<1x16x48xf32> to vector<16x48xf32>
    %cst_107 = arith.constant dense<0.000000e+00> : vector<16x320xf32>
    %100 = tpu.matmul %99, %97, %cst_107 {dimension_numbers = #tpu.dot_dimension_numbers<[1], [0], [0], [1], [0, 0, 1, 1], [], []>} : vector<16x48xf32>, vector<48x320xf32>, vector<16x320xf32> -> vector<16x320xf32>
    %101 = arith.addf %93, %100 : vector<16x320xf32>
    %c0_108 = arith.constant 0 : index
    %c80_109 = arith.constant 80 : index
    %102 = vector.load %arg10[%c0_108, %c80_109] : memref<16x404xf32, #tpu.memory_space<vmem>>, vector<16x320xf32>
    %c0_110 = arith.constant 0 : index
    %c82_111 = arith.constant 82 : index
    %103 = vector.load %arg10[%c0_110, %c82_111] : memref<16x404xf32, #tpu.memory_space<vmem>>, vector<16x320xf32>
    %c0_112 = arith.constant 0 : index
    %c84_113 = arith.constant 84 : index
    %104 = vector.load %arg10[%c0_112, %c84_113] : memref<16x404xf32, #tpu.memory_space<vmem>>, vector<16x320xf32>
    %105 = tpu.concatenate %102, %103, %104 in 0 : vector<16x320xf32>, vector<16x320xf32>, vector<16x320xf32> -> vector<48x320xf32>
    %c2_114 = arith.constant 2 : index
    %c0_115 = arith.constant 0 : index
    %c0_116 = arith.constant 0 : index
    %106 = vector.load %arg4[%c2_114, %c0_115, %c0_116] : memref<3x16x48xf32, #tpu.memory_space<vmem>>, vector<1x16x48xf32>
    %107 = vector.shape_cast %106 : vector<1x16x48xf32> to vector<16x48xf32>
    %cst_117 = arith.constant dense<0.000000e+00> : vector<16x320xf32>
    %108 = tpu.matmul %107, %105, %cst_117 {dimension_numbers = #tpu.dot_dimension_numbers<[1], [0], [0], [1], [0, 0, 1, 1], [], []>} : vector<16x48xf32>, vector<48x320xf32>, vector<16x320xf32> -> vector<16x320xf32>
    %109 = arith.addf %101, %108 : vector<16x320xf32>
    %c0_118 = arith.constant 0 : index
    %c42_119 = arith.constant 42 : index
    %110 = vector.load %arg9[%c0_118, %c42_119] : memref<8x404xf32, #tpu.memory_space<vmem>>, vector<8x320xf32>
    %c0_120 = arith.constant 0 : index
    %c0_121 = arith.constant 0 : index
    %111 = vector.load %arg5[%c0_120, %c0_121] : memref<16x8xf32, #tpu.memory_space<vmem>>, vector<16x8xf32>
    %cst_122 = arith.constant dense<0.000000e+00> : vector<16x320xf32>
    %112 = tpu.matmul %111, %110, %cst_122 {dimension_numbers = #tpu.dot_dimension_numbers<[1], [0], [0], [1], [0, 0, 1, 1], [], []>} : vector<16x8xf32>, vector<8x320xf32>, vector<16x320xf32> -> vector<16x320xf32>
    %113 = arith.addf %109, %112 : vector<16x320xf32>
    %114 = vector.broadcast %1 : vector<16x1xf32> to vector<16x320xf32>
    %115 = arith.addf %113, %114 : vector<16x320xf32>
    %cst_123 = arith.constant 0.000000e+00 : f32
    %116 = vector.broadcast %cst_123 : f32 to vector<16x320xf32>
    %117 = arith.maximumf %115, %116 : vector<16x320xf32>
    %118 = vector.broadcast %2 : vector<1x320xf32> to vector<16x320xf32>
    %119 = arith.mulf %117, %118 : vector<16x320xf32>
    %c0_124 = arith.constant 0 : index
    %c0_125 = arith.constant 0 : index
    %c0_126 = arith.constant 0 : index
    %120 = vector.load %arg8[%c0_124, %c0_125, %c0_126] : memref<2x16x320xf32, #tpu.memory_space<vmem>>, vector<1x16x320xf32>
    %121 = vector.shape_cast %120 : vector<1x16x320xf32> to vector<16x320xf32>
    %122 = vector.shape_cast %119 : vector<16x320xf32> to vector<1x16x320xf32>
    tpu.vector_store %arg8[%c0_124, %c0_125, %c0_126], %122 {strides = array<i32>} : memref<2x16x320xf32, #tpu.memory_space<vmem>>, vector<1x16x320xf32>,
    %c1_127 = arith.constant 1 : index
    %c0_128 = arith.constant 0 : index
    %c0_129 = arith.constant 0 : index
    %123 = vector.load %arg1[%c1_127, %c0_128, %c0_129] : memref<2x8x256xf32, #tpu.memory_space<vmem>>, vector<1x8x16xf32>
    %124 = vector.shape_cast %123 : vector<1x8x16xf32> to vector<8x16xf32>
    %c0_130 = arith.constant 0 : index
    %c42_131 = arith.constant 42 : index
    %125 = vector.load %arg9[%c0_130, %c42_131] : memref<8x404xf32, #tpu.memory_space<vmem>>, vector<8x16xf32>
    tpu.vector_store %arg9[%c0_130, %c42_131], %124 {strides = array<i32>} : memref<8x404xf32, #tpu.memory_space<vmem>>, vector<8x16xf32>,
    %c1_132 = arith.constant 1 : index
    %c0_133 = arith.constant 0 : index
    %c16_134 = arith.constant 16 : index
    %126 = vector.load %arg1[%c1_132, %c0_133, %c16_134] : memref<2x8x256xf32, #tpu.memory_space<vmem>>, vector<1x8x16xf32>
    %127 = vector.shape_cast %126 : vector<1x8x16xf32> to vector<8x16xf32>
    %c0_135 = arith.constant 0 : index
    %c62_136 = arith.constant 62 : index
    %128 = vector.load %arg9[%c0_135, %c62_136] : memref<8x404xf32, #tpu.memory_space<vmem>>, vector<8x16xf32>
    tpu.vector_store %arg9[%c0_135, %c62_136], %127 {strides = array<i32>} : memref<8x404xf32, #tpu.memory_space<vmem>>, vector<8x16xf32>,
    %c1_137 = arith.constant 1 : index
    %c0_138 = arith.constant 0 : index
    %c32_139 = arith.constant 32 : index
    %129 = vector.load %arg1[%c1_137, %c0_138, %c32_139] : memref<2x8x256xf32, #tpu.memory_space<vmem>>, vector<1x8x16xf32>
    %130 = vector.shape_cast %129 : vector<1x8x16xf32> to vector<8x16xf32>
    %c0_140 = arith.constant 0 : index
    %c82_141 = arith.constant 82 : index
    %131 = vector.load %arg9[%c0_140, %c82_141] : memref<8x404xf32, #tpu.memory_space<vmem>>, vector<8x16xf32>
    tpu.vector_store %arg9[%c0_140, %c82_141], %130 {strides = array<i32>} : memref<8x404xf32, #tpu.memory_space<vmem>>, vector<8x16xf32>,
    %c1_142 = arith.constant 1 : index
    %c0_143 = arith.constant 0 : index
    %c48_144 = arith.constant 48 : index
    %132 = vector.load %arg1[%c1_142, %c0_143, %c48_144] : memref<2x8x256xf32, #tpu.memory_space<vmem>>, vector<1x8x16xf32>
    %133 = vector.shape_cast %132 : vector<1x8x16xf32> to vector<8x16xf32>
    %c0_145 = arith.constant 0 : index
    %c102_146 = arith.constant 102 : index
    %134 = vector.load %arg9[%c0_145, %c102_146] : memref<8x404xf32, #tpu.memory_space<vmem>>, vector<8x16xf32>
    tpu.vector_store %arg9[%c0_145, %c102_146], %133 {strides = array<i32>} : memref<8x404xf32, #tpu.memory_space<vmem>>, vector<8x16xf32>,
    %c1_147 = arith.constant 1 : index
    %c0_148 = arith.constant 0 : index
    %c64_149 = arith.constant 64 : index
    %135 = vector.load %arg1[%c1_147, %c0_148, %c64_149] : memref<2x8x256xf32, #tpu.memory_space<vmem>>, vector<1x8x16xf32>
    %136 = vector.shape_cast %135 : vector<1x8x16xf32> to vector<8x16xf32>
    %c0_150 = arith.constant 0 : index
    %c122_151 = arith.constant 122 : index
    %137 = vector.load %arg9[%c0_150, %c122_151] : memref<8x404xf32, #tpu.memory_space<vmem>>, vector<8x16xf32>
    tpu.vector_store %arg9[%c0_150, %c122_151], %136 {strides = array<i32>} : memref<8x404xf32, #tpu.memory_space<vmem>>, vector<8x16xf32>,
    %c1_152 = arith.constant 1 : index
    %c0_153 = arith.constant 0 : index
    %c80_154 = arith.constant 80 : index
    %138 = vector.load %arg1[%c1_152, %c0_153, %c80_154] : memref<2x8x256xf32, #tpu.memory_space<vmem>>, vector<1x8x16xf32>
    %139 = vector.shape_cast %138 : vector<1x8x16xf32> to vector<8x16xf32>
    %c0_155 = arith.constant 0 : index
    %c142_156 = arith.constant 142 : index
    %140 = vector.load %arg9[%c0_155, %c142_156] : memref<8x404xf32, #tpu.memory_space<vmem>>, vector<8x16xf32>
    tpu.vector_store %arg9[%c0_155, %c142_156], %139 {strides = array<i32>} : memref<8x404xf32, #tpu.memory_space<vmem>>, vector<8x16xf32>,
    %c1_157 = arith.constant 1 : index
    %c0_158 = arith.constant 0 : index
    %c96_159 = arith.constant 96 : index
    %141 = vector.load %arg1[%c1_157, %c0_158, %c96_159] : memref<2x8x256xf32, #tpu.memory_space<vmem>>, vector<1x8x16xf32>
    %142 = vector.shape_cast %141 : vector<1x8x16xf32> to vector<8x16xf32>
    %c0_160 = arith.constant 0 : index
    %c162_161 = arith.constant 162 : index
    %143 = vector.load %arg9[%c0_160, %c162_161] : memref<8x404xf32, #tpu.memory_space<vmem>>, vector<8x16xf32>
    tpu.vector_store %arg9[%c0_160, %c162_161], %142 {strides = array<i32>} : memref<8x404xf32, #tpu.memory_space<vmem>>, vector<8x16xf32>,
    %c1_162 = arith.constant 1 : index
    %c0_163 = arith.constant 0 : index
    %c112_164 = arith.constant 112 : index
    %144 = vector.load %arg1[%c1_162, %c0_163, %c112_164] : memref<2x8x256xf32, #tpu.memory_space<vmem>>, vector<1x8x16xf32>
    %145 = vector.shape_cast %144 : vector<1x8x16xf32> to vector<8x16xf32>
    %c0_165 = arith.constant 0 : index
    %c182_166 = arith.constant 182 : index
    %146 = vector.load %arg9[%c0_165, %c182_166] : memref<8x404xf32, #tpu.memory_space<vmem>>, vector<8x16xf32>
    tpu.vector_store %arg9[%c0_165, %c182_166], %145 {strides = array<i32>} : memref<8x404xf32, #tpu.memory_space<vmem>>, vector<8x16xf32>,
    %c1_167 = arith.constant 1 : index
    %c0_168 = arith.constant 0 : index
    %c128_169 = arith.constant 128 : index
    %147 = vector.load %arg1[%c1_167, %c0_168, %c128_169] : memref<2x8x256xf32, #tpu.memory_space<vmem>>, vector<1x8x16xf32>
    %148 = vector.shape_cast %147 : vector<1x8x16xf32> to vector<8x16xf32>
    %c0_170 = arith.constant 0 : index
    %c202_171 = arith.constant 202 : index
    %149 = vector.load %arg9[%c0_170, %c202_171] : memref<8x404xf32, #tpu.memory_space<vmem>>, vector<8x16xf32>
    tpu.vector_store %arg9[%c0_170, %c202_171], %148 {strides = array<i32>} : memref<8x404xf32, #tpu.memory_space<vmem>>, vector<8x16xf32>,
    %c1_172 = arith.constant 1 : index
    %c0_173 = arith.constant 0 : index
    %c144_174 = arith.constant 144 : index
    %150 = vector.load %arg1[%c1_172, %c0_173, %c144_174] : memref<2x8x256xf32, #tpu.memory_space<vmem>>, vector<1x8x16xf32>
    %151 = vector.shape_cast %150 : vector<1x8x16xf32> to vector<8x16xf32>
    %c0_175 = arith.constant 0 : index
    %c222_176 = arith.constant 222 : index
    %152 = vector.load %arg9[%c0_175, %c222_176] : memref<8x404xf32, #tpu.memory_space<vmem>>, vector<8x16xf32>
    tpu.vector_store %arg9[%c0_175, %c222_176], %151 {strides = array<i32>} : memref<8x404xf32, #tpu.memory_space<vmem>>, vector<8x16xf32>,
    %c1_177 = arith.constant 1 : index
    %c0_178 = arith.constant 0 : index
    %c160_179 = arith.constant 160 : index
    %153 = vector.load %arg1[%c1_177, %c0_178, %c160_179] : memref<2x8x256xf32, #tpu.memory_space<vmem>>, vector<1x8x16xf32>
    %154 = vector.shape_cast %153 : vector<1x8x16xf32> to vector<8x16xf32>
    %c0_180 = arith.constant 0 : index
    %c242_181 = arith.constant 242 : index
    %155 = vector.load %arg9[%c0_180, %c242_181] : memref<8x404xf32, #tpu.memory_space<vmem>>, vector<8x16xf32>
    tpu.vector_store %arg9[%c0_180, %c242_181], %154 {strides = array<i32>} : memref<8x404xf32, #tpu.memory_space<vmem>>, vector<8x16xf32>,
    %c1_182 = arith.constant 1 : index
    %c0_183 = arith.constant 0 : index
    %c176_184 = arith.constant 176 : index
    %156 = vector.load %arg1[%c1_182, %c0_183, %c176_184] : memref<2x8x256xf32, #tpu.memory_space<vmem>>, vector<1x8x16xf32>
    %157 = vector.shape_cast %156 : vector<1x8x16xf32> to vector<8x16xf32>
    %c0_185 = arith.constant 0 : index
    %c262_186 = arith.constant 262 : index
    %158 = vector.load %arg9[%c0_185, %c262_186] : memref<8x404xf32, #tpu.memory_space<vmem>>, vector<8x16xf32>
    tpu.vector_store %arg9[%c0_185, %c262_186], %157 {strides = array<i32>} : memref<8x404xf32, #tpu.memory_space<vmem>>, vector<8x16xf32>,
    %c1_187 = arith.constant 1 : index
    %c0_188 = arith.constant 0 : index
    %c192_189 = arith.constant 192 : index
    %159 = vector.load %arg1[%c1_187, %c0_188, %c192_189] : memref<2x8x256xf32, #tpu.memory_space<vmem>>, vector<1x8x16xf32>
    %160 = vector.shape_cast %159 : vector<1x8x16xf32> to vector<8x16xf32>
    %c0_190 = arith.constant 0 : index
    %c282_191 = arith.constant 282 : index
    %161 = vector.load %arg9[%c0_190, %c282_191] : memref<8x404xf32, #tpu.memory_space<vmem>>, vector<8x16xf32>
    tpu.vector_store %arg9[%c0_190, %c282_191], %160 {strides = array<i32>} : memref<8x404xf32, #tpu.memory_space<vmem>>, vector<8x16xf32>,
    %c1_192 = arith.constant 1 : index
    %c0_193 = arith.constant 0 : index
    %c208_194 = arith.constant 208 : index
    %162 = vector.load %arg1[%c1_192, %c0_193, %c208_194] : memref<2x8x256xf32, #tpu.memory_space<vmem>>, vector<1x8x16xf32>
    %163 = vector.shape_cast %162 : vector<1x8x16xf32> to vector<8x16xf32>
    %c0_195 = arith.constant 0 : index
    %c302_196 = arith.constant 302 : index
    %164 = vector.load %arg9[%c0_195, %c302_196] : memref<8x404xf32, #tpu.memory_space<vmem>>, vector<8x16xf32>
    tpu.vector_store %arg9[%c0_195, %c302_196], %163 {strides = array<i32>} : memref<8x404xf32, #tpu.memory_space<vmem>>, vector<8x16xf32>,
    %c1_197 = arith.constant 1 : index
    %c0_198 = arith.constant 0 : index
    %c224_199 = arith.constant 224 : index
    %165 = vector.load %arg1[%c1_197, %c0_198, %c224_199] : memref<2x8x256xf32, #tpu.memory_space<vmem>>, vector<1x8x16xf32>
    %166 = vector.shape_cast %165 : vector<1x8x16xf32> to vector<8x16xf32>
    %c0_200 = arith.constant 0 : index
    %c322_201 = arith.constant 322 : index
    %167 = vector.load %arg9[%c0_200, %c322_201] : memref<8x404xf32, #tpu.memory_space<vmem>>, vector<8x16xf32>
    tpu.vector_store %arg9[%c0_200, %c322_201], %166 {strides = array<i32>} : memref<8x404xf32, #tpu.memory_space<vmem>>, vector<8x16xf32>,
    %c1_202 = arith.constant 1 : index
    %c0_203 = arith.constant 0 : index
    %c240_204 = arith.constant 240 : index
    %168 = vector.load %arg1[%c1_202, %c0_203, %c240_204] : memref<2x8x256xf32, #tpu.memory_space<vmem>>, vector<1x8x16xf32>
    %169 = vector.shape_cast %168 : vector<1x8x16xf32> to vector<8x16xf32>
    %c0_205 = arith.constant 0 : index
    %c342_206 = arith.constant 342 : index
    %170 = vector.load %arg9[%c0_205, %c342_206] : memref<8x404xf32, #tpu.memory_space<vmem>>, vector<8x16xf32>
    tpu.vector_store %arg9[%c0_205, %c342_206], %169 {strides = array<i32>} : memref<8x404xf32, #tpu.memory_space<vmem>>, vector<8x16xf32>,
    %c0_207 = arith.constant 0 : index
    %c0_208 = arith.constant 0 : index
    %171 = vector.load %arg9[%c0_207, %c0_208] : memref<8x404xf32, #tpu.memory_space<vmem>>, vector<8x320xf32>
    %c0_209 = arith.constant 0 : index
    %c2_210 = arith.constant 2 : index
    %172 = vector.load %arg9[%c0_209, %c2_210] : memref<8x404xf32, #tpu.memory_space<vmem>>, vector<8x320xf32>
    %c0_211 = arith.constant 0 : index
    %c4_212 = arith.constant 4 : index
    %173 = vector.load %arg9[%c0_211, %c4_212] : memref<8x404xf32, #tpu.memory_space<vmem>>, vector<8x320xf32>
    %174 = tpu.concatenate %171, %172, %173 in 0 : vector<8x320xf32>, vector<8x320xf32>, vector<8x320xf32> -> vector<24x320xf32>
    %c0_213 = arith.constant 0 : index
    %c0_214 = arith.constant 0 : index
    %c0_215 = arith.constant 0 : index
    %175 = vector.load %arg2[%c0_213, %c0_214, %c0_215] : memref<3x16x24xf32, #tpu.memory_space<vmem>>, vector<1x16x24xf32>
    %176 = vector.shape_cast %175 : vector<1x16x24xf32> to vector<16x24xf32>
    %cst_216 = arith.constant dense<0.000000e+00> : vector<16x320xf32>
    %177 = tpu.matmul %176, %174, %cst_216 {dimension_numbers = #tpu.dot_dimension_numbers<[1], [0], [0], [1], [0, 0, 1, 1], [], []>} : vector<16x24xf32>, vector<24x320xf32>, vector<16x320xf32> -> vector<16x320xf32>
    %c0_217 = arith.constant 0 : index
    %c40_218 = arith.constant 40 : index
    %178 = vector.load %arg9[%c0_217, %c40_218] : memref<8x404xf32, #tpu.memory_space<vmem>>, vector<8x320xf32>
    %c0_219 = arith.constant 0 : index
    %c42_220 = arith.constant 42 : index
    %179 = vector.load %arg9[%c0_219, %c42_220] : memref<8x404xf32, #tpu.memory_space<vmem>>, vector<8x320xf32>
    %c0_221 = arith.constant 0 : index
    %c44_222 = arith.constant 44 : index
    %180 = vector.load %arg9[%c0_221, %c44_222] : memref<8x404xf32, #tpu.memory_space<vmem>>, vector<8x320xf32>
    %181 = tpu.concatenate %178, %179, %180 in 0 : vector<8x320xf32>, vector<8x320xf32>, vector<8x320xf32> -> vector<24x320xf32>
    %c1_223 = arith.constant 1 : index
    %c0_224 = arith.constant 0 : index
    %c0_225 = arith.constant 0 : index
    %182 = vector.load %arg2[%c1_223, %c0_224, %c0_225] : memref<3x16x24xf32, #tpu.memory_space<vmem>>, vector<1x16x24xf32>
    %183 = vector.shape_cast %182 : vector<1x16x24xf32> to vector<16x24xf32>
    %cst_226 = arith.constant dense<0.000000e+00> : vector<16x320xf32>
    %184 = tpu.matmul %183, %181, %cst_226 {dimension_numbers = #tpu.dot_dimension_numbers<[1], [0], [0], [1], [0, 0, 1, 1], [], []>} : vector<16x24xf32>, vector<24x320xf32>, vector<16x320xf32> -> vector<16x320xf32>
    %185 = arith.addf %177, %184 : vector<16x320xf32>
    %c0_227 = arith.constant 0 : index
    %c80_228 = arith.constant 80 : index
    %186 = vector.load %arg9[%c0_227, %c80_228] : memref<8x404xf32, #tpu.memory_space<vmem>>, vector<8x320xf32>
    %c0_229 = arith.constant 0 : index
    %c82_230 = arith.constant 82 : index
    %187 = vector.load %arg9[%c0_229, %c82_230] : memref<8x404xf32, #tpu.memory_space<vmem>>, vector<8x320xf32>
    %c0_231 = arith.constant 0 : index
    %c84_232 = arith.constant 84 : index
    %188 = vector.load %arg9[%c0_231, %c84_232] : memref<8x404xf32, #tpu.memory_space<vmem>>, vector<8x320xf32>
    %189 = tpu.concatenate %186, %187, %188 in 0 : vector<8x320xf32>, vector<8x320xf32>, vector<8x320xf32> -> vector<24x320xf32>
    %c2_233 = arith.constant 2 : index
    %c0_234 = arith.constant 0 : index
    %c0_235 = arith.constant 0 : index
    %190 = vector.load %arg2[%c2_233, %c0_234, %c0_235] : memref<3x16x24xf32, #tpu.memory_space<vmem>>, vector<1x16x24xf32>
    %191 = vector.shape_cast %190 : vector<1x16x24xf32> to vector<16x24xf32>
    %cst_236 = arith.constant dense<0.000000e+00> : vector<16x320xf32>
    %192 = tpu.matmul %191, %189, %cst_236 {dimension_numbers = #tpu.dot_dimension_numbers<[1], [0], [0], [1], [0, 0, 1, 1], [], []>} : vector<16x24xf32>, vector<24x320xf32>, vector<16x320xf32> -> vector<16x320xf32>
    %193 = arith.addf %185, %192 : vector<16x320xf32>
    %194 = vector.broadcast %0 : vector<16x1xf32> to vector<16x320xf32>
    %195 = arith.addf %193, %194 : vector<16x320xf32>
    %cst_237 = arith.constant 0.000000e+00 : f32
    %196 = vector.broadcast %cst_237 : f32 to vector<16x320xf32>
    %197 = arith.maximumf %195, %196 : vector<16x320xf32>
    %198 = vector.broadcast %2 : vector<1x320xf32> to vector<16x320xf32>
    %199 = arith.mulf %197, %198 : vector<16x320xf32>
    %c0_238 = arith.constant 0 : index
    %c42_239 = arith.constant 42 : index
    %200 = vector.load %arg10[%c0_238, %c42_239] : memref<16x404xf32, #tpu.memory_space<vmem>>, vector<16x320xf32>
    tpu.vector_store %arg10[%c0_238, %c42_239], %199 {strides = array<i32>} : memref<16x404xf32, #tpu.memory_space<vmem>>, vector<16x320xf32>,
    %c0_240 = arith.constant 0 : index
    %c0_241 = arith.constant 0 : index
    %201 = vector.load %arg10[%c0_240, %c0_241] : memref<16x404xf32, #tpu.memory_space<vmem>>, vector<16x320xf32>
    %c0_242 = arith.constant 0 : index
    %c2_243 = arith.constant 2 : index
    %202 = vector.load %arg10[%c0_242, %c2_243] : memref<16x404xf32, #tpu.memory_space<vmem>>, vector<16x320xf32>
    %c0_244 = arith.constant 0 : index
    %c4_245 = arith.constant 4 : index
    %203 = vector.load %arg10[%c0_244, %c4_245] : memref<16x404xf32, #tpu.memory_space<vmem>>, vector<16x320xf32>
    %204 = tpu.concatenate %201, %202, %203 in 0 : vector<16x320xf32>, vector<16x320xf32>, vector<16x320xf32> -> vector<48x320xf32>
    %c0_246 = arith.constant 0 : index
    %c0_247 = arith.constant 0 : index
    %c0_248 = arith.constant 0 : index
    %205 = vector.load %arg4[%c0_246, %c0_247, %c0_248] : memref<3x16x48xf32, #tpu.memory_space<vmem>>, vector<1x16x48xf32>
    %206 = vector.shape_cast %205 : vector<1x16x48xf32> to vector<16x48xf32>
    %cst_249 = arith.constant dense<0.000000e+00> : vector<16x320xf32>
    %207 = tpu.matmul %206, %204, %cst_249 {dimension_numbers = #tpu.dot_dimension_numbers<[1], [0], [0], [1], [0, 0, 1, 1], [], []>} : vector<16x48xf32>, vector<48x320xf32>, vector<16x320xf32> -> vector<16x320xf32>
    %c0_250 = arith.constant 0 : index
    %c40_251 = arith.constant 40 : index
    %208 = vector.load %arg10[%c0_250, %c40_251] : memref<16x404xf32, #tpu.memory_space<vmem>>, vector<16x320xf32>
    %c0_252 = arith.constant 0 : index
    %c42_253 = arith.constant 42 : index
    %209 = vector.load %arg10[%c0_252, %c42_253] : memref<16x404xf32, #tpu.memory_space<vmem>>, vector<16x320xf32>
    %c0_254 = arith.constant 0 : index
    %c44_255 = arith.constant 44 : index
    %210 = vector.load %arg10[%c0_254, %c44_255] : memref<16x404xf32, #tpu.memory_space<vmem>>, vector<16x320xf32>
    %211 = tpu.concatenate %208, %209, %210 in 0 : vector<16x320xf32>, vector<16x320xf32>, vector<16x320xf32> -> vector<48x320xf32>
    %c1_256 = arith.constant 1 : index
    %c0_257 = arith.constant 0 : index
    %c0_258 = arith.constant 0 : index
    %212 = vector.load %arg4[%c1_256, %c0_257, %c0_258] : memref<3x16x48xf32, #tpu.memory_space<vmem>>, vector<1x16x48xf32>
    %213 = vector.shape_cast %212 : vector<1x16x48xf32> to vector<16x48xf32>
    %cst_259 = arith.constant dense<0.000000e+00> : vector<16x320xf32>
    %214 = tpu.matmul %213, %211, %cst_259 {dimension_numbers = #tpu.dot_dimension_numbers<[1], [0], [0], [1], [0, 0, 1, 1], [], []>} : vector<16x48xf32>, vector<48x320xf32>, vector<16x320xf32> -> vector<16x320xf32>
    %215 = arith.addf %207, %214 : vector<16x320xf32>
    %c0_260 = arith.constant 0 : index
    %c80_261 = arith.constant 80 : index
    %216 = vector.load %arg10[%c0_260, %c80_261] : memref<16x404xf32, #tpu.memory_space<vmem>>, vector<16x320xf32>
    %c0_262 = arith.constant 0 : index
    %c82_263 = arith.constant 82 : index
    %217 = vector.load %arg10[%c0_262, %c82_263] : memref<16x404xf32, #tpu.memory_space<vmem>>, vector<16x320xf32>
    %c0_264 = arith.constant 0 : index
    %c84_265 = arith.constant 84 : index
    %218 = vector.load %arg10[%c0_264, %c84_265] : memref<16x404xf32, #tpu.memory_space<vmem>>, vector<16x320xf32>
    %219 = tpu.concatenate %216, %217, %218 in 0 : vector<16x320xf32>, vector<16x320xf32>, vector<16x320xf32> -> vector<48x320xf32>
    %c2_266 = arith.constant 2 : index
    %c0_267 = arith.constant 0 : index
    %c0_268 = arith.constant 0 : index
    %220 = vector.load %arg4[%c2_266, %c0_267, %c0_268] : memref<3x16x48xf32, #tpu.memory_space<vmem>>, vector<1x16x48xf32>
    %221 = vector.shape_cast %220 : vector<1x16x48xf32> to vector<16x48xf32>
    %cst_269 = arith.constant dense<0.000000e+00> : vector<16x320xf32>
    %222 = tpu.matmul %221, %219, %cst_269 {dimension_numbers = #tpu.dot_dimension_numbers<[1], [0], [0], [1], [0, 0, 1, 1], [], []>} : vector<16x48xf32>, vector<48x320xf32>, vector<16x320xf32> -> vector<16x320xf32>
    %223 = arith.addf %215, %222 : vector<16x320xf32>
    %c0_270 = arith.constant 0 : index
    %c42_271 = arith.constant 42 : index
    %224 = vector.load %arg9[%c0_270, %c42_271] : memref<8x404xf32, #tpu.memory_space<vmem>>, vector<8x320xf32>
    %c0_272 = arith.constant 0 : index
    %c0_273 = arith.constant 0 : index
    %225 = vector.load %arg5[%c0_272, %c0_273] : memref<16x8xf32, #tpu.memory_space<vmem>>, vector<16x8xf32>
    %cst_274 = arith.constant dense<0.000000e+00> : vector<16x320xf32>
    %226 = tpu.matmul %225, %224, %cst_274 {dimension_numbers = #tpu.dot_dimension_numbers<[1], [0], [0], [1], [0, 0, 1, 1], [], []>} : vector<16x8xf32>, vector<8x320xf32>, vector<16x320xf32> -> vector<16x320xf32>
    %227 = arith.addf %223, %226 : vector<16x320xf32>
    %228 = vector.broadcast %1 : vector<16x1xf32> to vector<16x320xf32>
    %229 = arith.addf %227, %228 : vector<16x320xf32>
    %cst_275 = arith.constant 0.000000e+00 : f32
    %230 = vector.broadcast %cst_275 : f32 to vector<16x320xf32>
    %231 = arith.maximumf %229, %230 : vector<16x320xf32>
    %232 = vector.broadcast %2 : vector<1x320xf32> to vector<16x320xf32>
    %233 = arith.mulf %231, %232 : vector<16x320xf32>
    %c1_276 = arith.constant 1 : index
    %c0_277 = arith.constant 0 : index
    %c0_278 = arith.constant 0 : index
    %234 = vector.load %arg8[%c1_276, %c0_277, %c0_278] : memref<2x16x320xf32, #tpu.memory_space<vmem>>, vector<1x16x320xf32>
    %235 = vector.shape_cast %234 : vector<1x16x320xf32> to vector<16x320xf32>
    %236 = vector.shape_cast %233 : vector<16x320xf32> to vector<1x16x320xf32>
    tpu.vector_store %arg8[%c1_276, %c0_277, %c0_278], %236 {strides = array<i32>} : memref<2x16x320xf32, #tpu.memory_space<vmem>>, vector<1x16x320xf32>,
    return
  }
  func.func @transform_0(%arg0: i32) -> (i32, i32, i32) {
    %c0_i32 = arith.constant 0 : i32
    %c0_i32_0 = arith.constant 0 : i32
    %c0_i32_1 = arith.constant 0 : i32
    return %arg0, %c0_i32, %c0_i32_0 : i32, i32, i32
  }
  func.func @transform_1(%arg0: i32) -> (i32, i32, i32) {
    %c0_i32 = arith.constant 0 : i32
    %c0_i32_0 = arith.constant 0 : i32
    %c0_i32_1 = arith.constant 0 : i32
    %c0_i32_2 = arith.constant 0 : i32
    return %c0_i32, %c0_i32_0, %c0_i32_1 : i32, i32, i32
  }
  func.func @transform_2(%arg0: i32) -> (i32, i32) {
    %c0_i32 = arith.constant 0 : i32
    %c0_i32_0 = arith.constant 0 : i32
    %c0_i32_1 = arith.constant 0 : i32
    return %c0_i32, %c0_i32_0 : i32, i32
  }
  func.func @transform_3(%arg0: i32) -> (i32, i32, i32) {
    %c0_i32 = arith.constant 0 : i32
    %c0_i32_0 = arith.constant 0 : i32
    %c0_i32_1 = arith.constant 0 : i32
    %c0_i32_2 = arith.constant 0 : i32
    return %c0_i32, %c0_i32_0, %c0_i32_1 : i32, i32, i32
  }
  func.func @transform_4(%arg0: i32) -> (i32, i32) {
    %c0_i32 = arith.constant 0 : i32
    %c0_i32_0 = arith.constant 0 : i32
    %c0_i32_1 = arith.constant 0 : i32
    return %c0_i32, %c0_i32_0 : i32, i32
  }
  func.func @transform_5(%arg0: i32) -> (i32, i32) {
    %c0_i32 = arith.constant 0 : i32
    %c0_i32_0 = arith.constant 0 : i32
    %c0_i32_1 = arith.constant 0 : i32
    return %c0_i32, %c0_i32_0 : i32, i32
  }
  func.func @transform_6(%arg0: i32) -> (i32, i32) {
    %c0_i32 = arith.constant 0 : i32
    %c0_i32_0 = arith.constant 0 : i32
    %c0_i32_1 = arith.constant 0 : i32
    return %c0_i32, %c0_i32_0 : i32, i32
  }
  func.func @transform_7(%arg0: i32) -> (i32, i32, i32) {
    %c0_i32 = arith.constant 0 : i32
    %c0_i32_0 = arith.constant 0 : i32
    %c0_i32_1 = arith.constant 0 : i32
    return %arg0, %c0_i32, %c0_i32_0 : i32, i32, i32
  }
}

</mosaic_0001>

<llo_original>
// kernel: tpu_custom_call.1
$region0: #{tpu_custom_call.1}
  #allocation0 [shape = 'u32[]', space=smem, size = 0x4, offset = 0x4, fixed_abs, tag = 'smem constant byte address 0x4 - core index']
  #allocation1 [shape = 'u32[72,128]{1,0:T(1,128)}', space=vmem, size = 0x9000, scoped, tag = 'internal scratch']
  #allocation2 [shape = 'f32[8,404]{1,0:T(8,128)}', space=vmem, size = 0x4000, scoped, tag = 'scratch operand']
  #allocation3 [shape = 'f32[16,404]{1,0:T(8,128)}', space=vmem, size = 0x8000, scoped, tag = 'scratch operand']
  %s0 = inlined_call_operand.vmem [shape: f32[2,8,256], index: 0, kind: input, shape index: {}]
  %s1 = inlined_call_operand.hbm [shape: f32[3,16,24], index: 1, kind: input, shape index: {}]
  %s2 = inlined_call_operand.vmem [shape: f32[16,1], index: 2, kind: input, shape index: {}]
  %s3 = inlined_call_operand.hbm [shape: f32[3,16,48], index: 3, kind: input, shape index: {}]
  %s4 = inlined_call_operand.vmem [shape: f32[16,8], index: 4, kind: input, shape index: {}]
  %s5 = inlined_call_operand.vmem [shape: f32[16,1], index: 5, kind: input, shape index: {}]
  %s6 = inlined_call_operand.vmem [shape: f32[1,320], index: 6, kind: input, shape index: {}]
  %s7 = inlined_call_operand.hbm [shape: f32[2,16,320], index: 7, kind: output, shape index: {}]
  %s8 = sld [smem:[#allocation0]]
  $region46: #{tpu_custom_call.1} parent=0
    _
  %s10 = ssub.s32 1, %s8
  %s11 = scalar_select 0, %s10, %s8
  $region1: #{tpu_custom_call.1} parent=0
    #allocation4 [shape = 'u8[24576]{0}', space=vmem, size = 0x6000, scoped, tag = 'input window, operand 1, single buffered']
    #allocation5 [shape = 's32[1]{0}', space=sflag, size = 0x4, scoped, tag = 'scoped memory for tpu_custom_call.1']
    #allocation6 [shape = 's32[1]{0}', space=sflag, size = 0x4, scoped, tag = 'scoped memory for tpu_custom_call.1']
    #allocation7 [shape = 'u8[24576]{0}', space=vmem, size = 0x6000, scoped, tag = 'input window, operand 3, single buffered']
    #allocation8 [shape = 's32[1]{0}', space=sflag, size = 0x4, scoped, tag = 'scoped memory for tpu_custom_call.1']
    #allocation9 [shape = 'u8[49152]{0}', space=vmem, size = 0xc000, scoped, tag = 'output window, operand 0, single buffered']
    %12 = vsyncpa [#allocation5], 0
    %13 = vsyncpa [#allocation8], 0
    %14 = vsyncpa [#allocation6], 0
    // Predicated region
    $region2: #{tpu_custom_call.1} parent=1 // pred_check
      _
    $region3: #{tpu_custom_call.1} parent=1 // pred_check_branch
      %16 = sbr.rel (0) target = $region5
    $region4: #{tpu_custom_call.1} parent=1 // pred_region
      _
    $region5: #{tpu_custom_call.1} parent=1 // pred_fallthru
      _
    // Predicated region
    $region6: #{tpu_custom_call.1} parent=1 // pred_check
      _
    $region7: #{tpu_custom_call.1} parent=1 // pred_check_branch
      %18 = sbr.rel (0) target = $region9
    $region8: #{tpu_custom_call.1} parent=1 // pred_region
      %20 = vsyncadd [#allocation5], 0
      %s21 = sshll.u32 %s1, 4
      %s22 = int_to_ptr.hbm [resolvable:$true] %s21
      %s23 = sshll.u32 [#allocation4], 4
      %s24 = int_to_ptr.vmem [resolvable:$true] %s23
      %29 = dma.hbm_to_vmem [thread:$0]  %s22, 768, %s24, [#allocation5], 128, 128, 8
    $region9: #{tpu_custom_call.1} parent=1 // pred_fallthru
      _
    // Predicated region
    $region10: #{tpu_custom_call.1} parent=1 // pred_check
      _
    $region11: #{tpu_custom_call.1} parent=1 // pred_check_branch
      %31 = sbr.rel (0) target = $region13
    $region12: #{tpu_custom_call.1} parent=1 // pred_region
      _
    $region13: #{tpu_custom_call.1} parent=1 // pred_fallthru
      _
    // Predicated region
    $region14: #{tpu_custom_call.1} parent=1 // pred_check
      _
    $region15: #{tpu_custom_call.1} parent=1 // pred_check_branch
      %33 = sbr.rel (0) target = $region17
    $region16: #{tpu_custom_call.1} parent=1 // pred_region
      %35 = vsyncadd [#allocation8], 0
      %s36 = sshll.u32 %s3, 4
      %s37 = int_to_ptr.hbm [resolvable:$true] %s36
      %s38 = sshll.u32 [#allocation7], 4
      %s39 = int_to_ptr.vmem [resolvable:$true] %s38
      %44 = dma.hbm_to_vmem [thread:$0]  %s37, 768, %s39, [#allocation8], 128, 128, 8
    $region17: #{tpu_custom_call.1} parent=1 // pred_fallthru
      _
    // Predicated region
    $region18: #{tpu_custom_call.1} parent=1 // pred_check
      _
    $region19: #{tpu_custom_call.1} parent=1 // pred_check_branch
      %46 = sbr.rel (0) target = $region21
    $region20: #{tpu_custom_call.1} parent=1 // pred_region
      _
    $region21: #{tpu_custom_call.1} parent=1 // pred_fallthru
      _
    // Predicated region
    $region22: #{tpu_custom_call.1} parent=1 // pred_check
      _
    $region23: #{tpu_custom_call.1} parent=1 // pred_check_branch
      %48 = sbr.rel (0) target = $region25
    $region24: #{tpu_custom_call.1} parent=1 // pred_region
      _
    $region25: #{tpu_custom_call.1} parent=1 // pred_fallthru
      _
    // Predicated region
    $region26: #{tpu_custom_call.1} parent=1 // pred_check
      _
    $region27: #{tpu_custom_call.1} parent=1 // pred_check_branch
      %50 = sbr.rel (0) target = $region29
    $region28: #{tpu_custom_call.1} parent=1 // pred_region
      _
    $region29: #{tpu_custom_call.1} parent=1 // pred_fallthru
      _
    // Predicated region
    $region30: #{tpu_custom_call.1} parent=1 // pred_check
      _
    $region31: #{tpu_custom_call.1} parent=1 // pred_check_branch
      %52 = sbr.rel (0) target = $region33
    $region32: #{tpu_custom_call.1} parent=1 // pred_region
      %54 = dma.done [#allocation5], 768
    $region33: #{tpu_custom_call.1} parent=1 // pred_fallthru
      _
    // Predicated region
    $region34: #{tpu_custom_call.1} parent=1 // pred_check
      _
    $region35: #{tpu_custom_call.1} parent=1 // pred_check_branch
      %56 = sbr.rel (0) target = $region37
    $region36: #{tpu_custom_call.1} parent=1 // pred_region
      %58 = dma.done [#allocation8], 768
    $region37: #{tpu_custom_call.1} parent=1 // pred_fallthru
      _
    %v59 = vld [vmem:[%s2] sm:$0xff]
    %v60 = vld [vmem:[%s2 + $0x8] sm:$0xff]
    %v61 = vld [vmem:[%s5] sm:$0xff]
    %v62 = vld [vmem:[%s5 + $0x8] sm:$0xff]
    %v63 = vld [vmem:[%s6] sm:$0x7]
    %64 = vst [vmem:[#allocation2] sm:$0xff] 0.0
    %65 = vst [vmem:[#allocation2 + $0x8] sm:$0xff] 0.0
    %66 = vst [vmem:[#allocation2 + $0x10] sm:$0xff] 0.0
    %vm67 = vcmask 162816
    %68 = vst.msk [vmem:[#allocation2 + $0x18] sm:$0xff] %vm67, 0.0
    %vm69 = vcmask 343040
    %70 = vst.msk [vmem:[#allocation3] sm:$0xff] %vm69, 0.0
    %71 = vst.msk [vmem:[#allocation3 + $0x20] sm:$0xff] %vm69, 0.0
    %vm72 = vcmask 1048400
    %73 = vst.msk [vmem:[#allocation3 + $0x10] sm:$0xff] %vm72, 0.0
    %74 = vst.msk [vmem:[#allocation3 + $0x18] sm:$0xff] %vm67, 0.0
    %75 = vst.msk [vmem:[#allocation3 + $0x30] sm:$0xff] %vm72, 0.0
    %76 = vst.msk [vmem:[#allocation3 + $0x38] sm:$0xff] %vm67, 0.0
    %v77 = vld [vmem:[%s0] sm:$0xff]
    %79 = vrot.lane.b32.xlu0 %v77, 42
    %v80 = vpop.permute.xlu0 %79
    %vm82 = vcmask 474448
    %83 = vst.msk [vmem:[#allocation2] sm:$0xff] %vm82, %v80
    %v84 = vld [vmem:[%s0] sm:$0xff]
    %86 = vrot.lane.b32.xlu0 %v84, 46
    %v87 = vpop.permute.xlu0 %86
    %vm89 = vcmask 638448
    %90 = vst.msk [vmem:[#allocation2] sm:$0xff] %vm89, %v87
    %v91 = vld [vmem:[%s0] sm:$0xff]
    %93 = vrot.lane.b32.xlu0 %v91, 50
    %v94 = vpop.permute.xlu0 %93
    %vm96 = vcmask 802448
    %97 = vst.msk [vmem:[#allocation2] sm:$0xff] %vm96, %v94
    %v98 = vld [vmem:[%s0] sm:$0xff]
    %100 = vrot.lane.b32.xlu0 %v98, 54
    %v101 = vpop.permute.xlu0 %100
    %vm103 = vcmask 966448
    %104 = vst.msk [vmem:[#allocation2] sm:$0xff] %vm103, %v101
    %v105 = vld [vmem:[%s0] sm:$0xff]
    %107 = vrot.lane.b32.xlu0 %v105, 58
    %v108 = vpop.permute.xlu0 %107
    %vm110 = vcmask 1048528
    %111 = vst.msk [vmem:[#allocation2] sm:$0xff] %vm110, %v108
    %vm112 = vcmask 80896
    %113 = vst.msk [vmem:[#allocation2 + $0x8] sm:$0xff] %vm112, %v108
    %v114 = vld [vmem:[%s0] sm:$0xff]
    %116 = vrot.lane.b32.xlu0 %v114, 62
    %v117 = vpop.permute.xlu0 %116
    %vm119 = vcmask 244848
    %120 = vst.msk [vmem:[#allocation2 + $0x8] sm:$0xff] %vm119, %v117
    %v121 = vld [vmem:[%s0] sm:$0xff]
    %123 = vrot.lane.b32.xlu0 %v121, 66
    %v124 = vpop.permute.xlu0 %123
    %vm126 = vcmask 408848
    %127 = vst.msk [vmem:[#allocation2 + $0x8] sm:$0xff] %vm126, %v124
    %v128 = vld [vmem:[%s0] sm:$0xff]
    %130 = vrot.lane.b32.xlu0 %v128, 70
    %v131 = vpop.permute.xlu0 %130
    %vm133 = vcmask 572848
    %134 = vst.msk [vmem:[#allocation2 + $0x8] sm:$0xff] %vm133, %v131
    %v135 = vld [vmem:[%s0 + $0x8] sm:$0xff]
    %137 = vrot.lane.b32.xlu0 %v135, 74
    %v138 = vpop.permute.xlu0 %137
    %vm140 = vcmask 736848
    %141 = vst.msk [vmem:[#allocation2 + $0x8] sm:$0xff] %vm140, %v138
    %v142 = vld [vmem:[%s0 + $0x8] sm:$0xff]
    %144 = vrot.lane.b32.xlu0 %v142, 78
    %v145 = vpop.permute.xlu0 %144
    %vm147 = vcmask 900848
    %148 = vst.msk [vmem:[#allocation2 + $0x8] sm:$0xff] %vm147, %v145
    %v149 = vld [vmem:[%s0 + $0x8] sm:$0xff]
    %151 = vrot.lane.b32.xlu0 %v149, 82
    %v152 = vpop.permute.xlu0 %151
    %vm154 = vcmask 1048464
    %155 = vst.msk [vmem:[#allocation2 + $0x8] sm:$0xff] %vm154, %v152
    %vm156 = vcmask 15360
    %157 = vst.msk [vmem:[#allocation2 + $0x10] sm:$0xff] %vm156, %v152
    %v158 = vld [vmem:[%s0 + $0x8] sm:$0xff]
    %160 = vrot.lane.b32.xlu0 %v158, 86
    %v161 = vpop.permute.xlu0 %160
    %vm163 = vcmask 179248
    %164 = vst.msk [vmem:[#allocation2 + $0x10] sm:$0xff] %vm163, %v161
    %v165 = vld [vmem:[%s0 + $0x8] sm:$0xff]
    %167 = vrot.lane.b32.xlu0 %v165, 90
    %v168 = vpop.permute.xlu0 %167
    %vm170 = vcmask 343248
    %171 = vst.msk [vmem:[#allocation2 + $0x10] sm:$0xff] %vm170, %v168
    %v172 = vld [vmem:[%s0 + $0x8] sm:$0xff]
    %174 = vrot.lane.b32.xlu0 %v172, 94
    %v175 = vpop.permute.xlu0 %174
    %vm177 = vcmask 507248
    %178 = vst.msk [vmem:[#allocation2 + $0x10] sm:$0xff] %vm177, %v175
    %v179 = vld [vmem:[%s0 + $0x8] sm:$0xff]
    %181 = vrot.lane.b32.xlu0 %v179, 98
    %v182 = vpop.permute.xlu0 %181
    %vm184 = vcmask 671248
    %185 = vst.msk [vmem:[#allocation2 + $0x10] sm:$0xff] %vm184, %v182
    %v186 = vld [vmem:[%s0 + $0x8] sm:$0xff]
    %188 = vrot.lane.b32.xlu0 %v186, 102
    %v189 = vpop.permute.xlu0 %188
    %vm191 = vcmask 835248
    %192 = vst.msk [vmem:[#allocation2 + $0x10] sm:$0xff] %vm191, %v189
    %v193 = vld [vmem:[#allocation2] sm:$0xff]
    %v194 = vld [vmem:[#allocation2 + $0x8] sm:$0xff]
    %v195 = vld [vmem:[#allocation2 + $0x10] sm:$0xff]
    %199 = vrot.lane.b32.xlu0 %v193, 126
    %v200 = vpop.permute.xlu0 %199
    %201 = vrot.lane.b32.xlu0 %v194, 126
    %v202 = vpop.permute.xlu0 %201
    %203 = vrot.lane.b32.xlu0 %v195, 126
    %v204 = vpop.permute.xlu0 %203
    %vm205 = vcmask 1031168
    %v206 = vsel %vm205, %v200, %v202
    %v207 = vsel %vm205, %v202, %v204
    %211 = vrot.lane.b32.xlu0 %v193, 124
    %v212 = vpop.permute.xlu0 %211
    %213 = vrot.lane.b32.xlu0 %v194, 124
    %v214 = vpop.permute.xlu0 %213
    %215 = vrot.lane.b32.xlu0 %v195, 124
    %v216 = vpop.permute.xlu0 %215
    %vm217 = vcmask 1014784
    %v218 = vsel %vm217, %v212, %v214
    %v219 = vsel %vm217, %v214, %v216
    %v223 = vld [vmem:[#allocation4] sm:$0xff]
    %v224 = vld [vmem:[#allocation4 + $0x8] sm:$0xff]
    %s225 = scalar_lea.vmem [#allocation4], 16
    %v226 = vld [vmem:[%s225] sm:$0xff]
    %v227 = vld [vmem:[%s225 + $0x8] sm:$0xff]
    %228 = vrot.lane.b32.xlu0 %v193, 88
    %v229 = vpop.permute.xlu0 %228
    %230 = vrot.lane.b32.xlu0 %v194, 88
    %v231 = vpop.permute.xlu0 %230
    %232 = vrot.lane.b32.xlu0 %v195, 88
    %v233 = vpop.permute.xlu0 %232
    %234 = vrot.lane.b32.xlu0 %v206, 88
    %v235 = vpop.permute.xlu0 %234
    %236 = vrot.lane.b32.xlu0 %v207, 88
    %v237 = vpop.permute.xlu0 %236
    %238 = vrot.lane.b32.xlu0 %v204, 88
    %v239 = vpop.permute.xlu0 %238
    %240 = vrot.lane.b32.xlu0 %v218, 88
    %v241 = vpop.permute.xlu0 %240
    %242 = vrot.lane.b32.xlu0 %v219, 88
    %v243 = vpop.permute.xlu0 %242
    %244 = vrot.lane.b32.xlu0 %v216, 88
    %v245 = vpop.permute.xlu0 %244
    %vm246 = vcmask 719872
    %v247 = vsel %vm246, %v229, %v231
    %v248 = vsel %vm246, %v231, %v233
    %v249 = vsel %vm246, %v235, %v237
    %v250 = vsel %vm246, %v237, %v239
    %v251 = vsel %vm246, %v241, %v243
    %v252 = vsel %vm246, %v243, %v245
    %vm262 = vcmask 195584
    %v264 = vsel %vm262, %v226, 0
    %v267 = vsel %vm262, %v227, 0
    %269 = vmatpush.msra.mxu0 0.0
    %270 = vmatpush.msra.mxu0 0.0
    %271 = vmatpush.msra.mxu0 0.0
    %272 = vmatpush.msra.mxu0 0.0
    %273 = vmatpush.msra.mxu0 0.0
    %274 = vmatpush.msra.mxu0 0.0
    %275 = vmatpush.msra.mxu0 0.0
    %276 = vmatpush.msra.mxu0 0.0
    %277 = vmatpush.msra.mxu0 0.0
    %278 = vmatpush.msra.mxu0 0.0
    %279 = vmatpush.msra.mxu0 0.0
    %280 = vmatpush.msra.mxu0 0.0
    %281 = vmatpush.msra.mxu0 0.0
    %282 = vmatpush.msra.mxu0 %v251
    %283 = vmatpush.msra.mxu0 %v249
    %284 = vmatpush.msra.mxu0 %v247
    %285 = vmatmul.f32.gmra.mxu0 %v264
    %v286 = vpop.f32.mrf.mxu0
    %v287 = vadd.f32 0.0, %v286
    %288 = vmatmul.f32.gmra.mxu0 %v267
    %v289 = vpop.f32.mrf.mxu0
    %v290 = vadd.f32 0.0, %v289
    %291 = vdwg.mxu0
    %292 = vmatpush.msra.mxu0 0.0
    %293 = vmatpush.msra.mxu0 0.0
    %294 = vmatpush.msra.mxu0 0.0
    %295 = vmatpush.msra.mxu0 0.0
    %296 = vmatpush.msra.mxu0 0.0
    %297 = vmatpush.msra.mxu0 0.0
    %298 = vmatpush.msra.mxu0 0.0
    %299 = vmatpush.msra.mxu0 0.0
    %300 = vmatpush.msra.mxu0 0.0
    %301 = vmatpush.msra.mxu0 0.0
    %302 = vmatpush.msra.mxu0 0.0
    %303 = vmatpush.msra.mxu0 0.0
    %304 = vmatpush.msra.mxu0 0.0
    %305 = vmatpush.msra.mxu0 %v252
    %306 = vmatpush.msra.mxu0 %v250
    %307 = vmatpush.msra.mxu0 %v248
    %308 = vmatmul.f32.gmra.mxu0 %v264
    %v309 = vpop.f32.mrf.mxu0
    %v310 = vadd.f32 0.0, %v309
    %311 = vmatmul.f32.gmra.mxu0 %v267
    %v312 = vpop.f32.mrf.mxu0
    %v313 = vadd.f32 0.0, %v312
    %314 = vdwg.mxu0
    %315 = vmatpush.msra.mxu0 0.0
    %316 = vmatpush.msra.mxu0 0.0
    %317 = vmatpush.msra.mxu0 0.0
    %318 = vmatpush.msra.mxu0 0.0
    %319 = vmatpush.msra.mxu0 0.0
    %320 = vmatpush.msra.mxu0 0.0
    %321 = vmatpush.msra.mxu0 0.0
    %322 = vmatpush.msra.mxu0 0.0
    %323 = vmatpush.msra.mxu0 0.0
    %324 = vmatpush.msra.mxu0 0.0
    %325 = vmatpush.msra.mxu0 0.0
    %326 = vmatpush.msra.mxu0 0.0
    %327 = vmatpush.msra.mxu0 0.0
    %328 = vmatpush.msra.mxu0 %v245
    %329 = vmatpush.msra.mxu0 %v239
    %330 = vmatpush.msra.mxu0 %v233
    %331 = vmatmul.f32.gmra.mxu0 %v264
    %v332 = vpop.f32.mrf.mxu0
    %v333 = vadd.f32 0.0, %v332
    %334 = vmatmul.f32.gmra.mxu0 %v267
    %v335 = vpop.f32.mrf.mxu0
    %v336 = vadd.f32 0.0, %v335
    %337 = vdwg.mxu0
    %v339 = vsel %vm262, %v223, 0
    %v342 = vsel %vm262, %v224, 0
    %344 = vmatpush.msra.mxu0 0.0
    %345 = vmatpush.msra.mxu0 0.0
    %346 = vmatpush.msra.mxu0 0.0
    %347 = vmatpush.msra.mxu0 0.0
    %348 = vmatpush.msra.mxu0 0.0
    %349 = vmatpush.msra.mxu0 0.0
    %350 = vmatpush.msra.mxu0 0.0
    %351 = vmatpush.msra.mxu0 0.0
    %352 = vmatpush.msra.mxu0 0.0
    %353 = vmatpush.msra.mxu0 0.0
    %354 = vmatpush.msra.mxu0 0.0
    %355 = vmatpush.msra.mxu0 0.0
    %356 = vmatpush.msra.mxu0 0.0
    %357 = vmatpush.msra.mxu0 %v218
    %358 = vmatpush.msra.mxu0 %v206
    %359 = vmatpush.msra.mxu0 %v193
    %360 = vmatmul.f32.gmra.mxu0 %v339
    %v361 = vpop.f32.mrf.mxu0
    %v362 = vadd.f32 %v287, %v361
    %363 = vmatmul.f32.gmra.mxu0 %v342
    %v364 = vpop.f32.mrf.mxu0
    %v365 = vadd.f32 %v290, %v364
    %366 = vdwg.mxu0
    %367 = vmatpush.msra.mxu0 0.0
    %368 = vmatpush.msra.mxu0 0.0
    %369 = vmatpush.msra.mxu0 0.0
    %370 = vmatpush.msra.mxu0 0.0
    %371 = vmatpush.msra.mxu0 0.0
    %372 = vmatpush.msra.mxu0 0.0
    %373 = vmatpush.msra.mxu0 0.0
    %374 = vmatpush.msra.mxu0 0.0
    %375 = vmatpush.msra.mxu0 0.0
    %376 = vmatpush.msra.mxu0 0.0
    %377 = vmatpush.msra.mxu0 0.0
    %378 = vmatpush.msra.mxu0 0.0
    %379 = vmatpush.msra.mxu0 0.0
    %380 = vmatpush.msra.mxu0 %v219
    %381 = vmatpush.msra.mxu0 %v207
    %382 = vmatpush.msra.mxu0 %v194
    %383 = vmatmul.f32.gmra.mxu0 %v339
    %v384 = vpop.f32.mrf.mxu0
    %v385 = vadd.f32 %v310, %v384
    %386 = vmatmul.f32.gmra.mxu0 %v342
    %v387 = vpop.f32.mrf.mxu0
    %v388 = vadd.f32 %v313, %v387
    %389 = vdwg.mxu0
    %390 = vmatpush.msra.mxu0 0.0
    %391 = vmatpush.msra.mxu0 0.0
    %392 = vmatpush.msra.mxu0 0.0
    %393 = vmatpush.msra.mxu0 0.0
    %394 = vmatpush.msra.mxu0 0.0
    %395 = vmatpush.msra.mxu0 0.0
    %396 = vmatpush.msra.mxu0 0.0
    %397 = vmatpush.msra.mxu0 0.0
    %398 = vmatpush.msra.mxu0 0.0
    %399 = vmatpush.msra.mxu0 0.0
    %400 = vmatpush.msra.mxu0 0.0
    %401 = vmatpush.msra.mxu0 0.0
    %402 = vmatpush.msra.mxu0 0.0
    %403 = vmatpush.msra.mxu0 %v216
    %404 = vmatpush.msra.mxu0 %v204
    %405 = vmatpush.msra.mxu0 %v195
    %406 = vmatmul.f32.gmra.mxu0 %v339
    %v407 = vpop.f32.mrf.mxu0
    %v408 = vadd.f32 %v333, %v407
    %409 = vmatmul.f32.gmra.mxu0 %v342
    %v410 = vpop.f32.mrf.mxu0
    %v411 = vadd.f32 %v336, %v410
    %412 = vdwg.mxu0
    %v413 = vld [vmem:[#allocation2] sm:$0xff]
    %v414 = vld [vmem:[#allocation2 + $0x8] sm:$0xff]
    %v415 = vld [vmem:[#allocation2 + $0x10] sm:$0xff]
    %v416 = vld [vmem:[#allocation2 + $0x18] sm:$0xff]
    %421 = vrot.lane.b32.xlu0 %v413, 126
    %v422 = vpop.permute.xlu0 %421
    %423 = vrot.lane.b32.xlu0 %v414, 126
    %v424 = vpop.permute.xlu0 %423
    %425 = vrot.lane.b32.xlu0 %v415, 126
    %v426 = vpop.permute.xlu0 %425
    %427 = vrot.lane.b32.xlu0 %v416, 126
    %v428 = vpop.permute.xlu0 %427
    %v429 = vsel %vm205, %v422, %v424
    %v430 = vsel %vm205, %v424, %v426
    %v431 = vsel %vm205, %v426, %v428
    %432 = vrot.lane.b32.xlu0 %v413, 124
    %v433 = vpop.permute.xlu0 %432
    %434 = vrot.lane.b32.xlu0 %v414, 124
    %v435 = vpop.permute.xlu0 %434
    %436 = vrot.lane.b32.xlu0 %v415, 124
    %v437 = vpop.permute.xlu0 %436
    %438 = vrot.lane.b32.xlu0 %v416, 124
    %v439 = vpop.permute.xlu0 %438
    %v440 = vsel %vm217, %v433, %v435
    %v441 = vsel %vm217, %v435, %v437
    %v442 = vsel %vm217, %v437, %v439
    %s443 = scalar_lea.vmem [#allocation4], 32
    %v444 = vld [vmem:[%s443] sm:$0xff]
    %v445 = vld [vmem:[%s443 + $0x8] sm:$0xff]
    %446 = vrot.lane.b32.xlu0 %v413, 48
    %v447 = vpop.permute.xlu0 %446
    %448 = vrot.lane.b32.xlu0 %v414, 48
    %v449 = vpop.permute.xlu0 %448
    %450 = vrot.lane.b32.xlu0 %v415, 48
    %v451 = vpop.permute.xlu0 %450
    %452 = vrot.lane.b32.xlu0 %v416, 48
    %v453 = vpop.permute.xlu0 %452
    %454 = vrot.lane.b32.xlu0 %v429, 48
    %v455 = vpop.permute.xlu0 %454
    %456 = vrot.lane.b32.xlu0 %v430, 48
    %v457 = vpop.permute.xlu0 %456
    %458 = vrot.lane.b32.xlu0 %v431, 48
    %v459 = vpop.permute.xlu0 %458
    %460 = vrot.lane.b32.xlu0 %v428, 48
    %v461 = vpop.permute.xlu0 %460
    %462 = vrot.lane.b32.xlu0 %v440, 48
    %v463 = vpop.permute.xlu0 %462
    %464 = vrot.lane.b32.xlu0 %v441, 48
    %v465 = vpop.permute.xlu0 %464
    %466 = vrot.lane.b32.xlu0 %v442, 48
    %v467 = vpop.permute.xlu0 %466
    %468 = vrot.lane.b32.xlu0 %v439, 48
    %v469 = vpop.permute.xlu0 %468
    %vm470 = vcmask 392192
    %v471 = vsel %vm470, %v447, %v449
    %v472 = vsel %vm470, %v449, %v451
    %v473 = vsel %vm470, %v451, %v453
    %v474 = vsel %vm470, %v455, %v457
    %v475 = vsel %vm470, %v457, %v459
    %v476 = vsel %vm470, %v459, %v461
    %v477 = vsel %vm470, %v463, %v465
    %v478 = vsel %vm470, %v465, %v467
    %v479 = vsel %vm470, %v467, %v469
    %v490 = vsel %vm262, %v444, 0
    %v493 = vsel %vm262, %v445, 0
    %495 = vmatpush.msra.mxu0 0.0
    %496 = vmatpush.msra.mxu0 0.0
    %497 = vmatpush.msra.mxu0 0.0
    %498 = vmatpush.msra.mxu0 0.0
    %499 = vmatpush.msra.mxu0 0.0
    %500 = vmatpush.msra.mxu0 0.0
    %501 = vmatpush.msra.mxu0 0.0
    %502 = vmatpush.msra.mxu0 0.0
    %503 = vmatpush.msra.mxu0 0.0
    %504 = vmatpush.msra.mxu0 0.0
    %505 = vmatpush.msra.mxu0 0.0
    %506 = vmatpush.msra.mxu0 0.0
    %507 = vmatpush.msra.mxu0 0.0
    %508 = vmatpush.msra.mxu0 %v477
    %509 = vmatpush.msra.mxu0 %v474
    %510 = vmatpush.msra.mxu0 %v471
    %511 = vmatmul.f32.gmra.mxu0 %v490
    %v512 = vpop.f32.mrf.mxu0
    %v513 = vadd.f32 0.0, %v512
    %514 = vmatmul.f32.gmra.mxu0 %v493
    %v515 = vpop.f32.mrf.mxu0
    %v516 = vadd.f32 0.0, %v515
    %517 = vdwg.mxu0
    %518 = vmatpush.msra.mxu0 0.0
    %519 = vmatpush.msra.mxu0 0.0
    %520 = vmatpush.msra.mxu0 0.0
    %521 = vmatpush.msra.mxu0 0.0
    %522 = vmatpush.msra.mxu0 0.0
    %523 = vmatpush.msra.mxu0 0.0
    %524 = vmatpush.msra.mxu0 0.0
    %525 = vmatpush.msra.mxu0 0.0
    %526 = vmatpush.msra.mxu0 0.0
    %527 = vmatpush.msra.mxu0 0.0
    %528 = vmatpush.msra.mxu0 0.0
    %529 = vmatpush.msra.mxu0 0.0
    %530 = vmatpush.msra.mxu0 0.0
    %531 = vmatpush.msra.mxu0 %v478
    %532 = vmatpush.msra.mxu0 %v475
    %533 = vmatpush.msra.mxu0 %v472
    %534 = vmatmul.f32.gmra.mxu0 %v490
    %v535 = vpop.f32.mrf.mxu0
    %v536 = vadd.f32 0.0, %v535
    %537 = vmatmul.f32.gmra.mxu0 %v493
    %v538 = vpop.f32.mrf.mxu0
    %v539 = vadd.f32 0.0, %v538
    %540 = vdwg.mxu0
    %541 = vmatpush.msra.mxu0 0.0
    %542 = vmatpush.msra.mxu0 0.0
    %543 = vmatpush.msra.mxu0 0.0
    %544 = vmatpush.msra.mxu0 0.0
    %545 = vmatpush.msra.mxu0 0.0
    %546 = vmatpush.msra.mxu0 0.0
    %547 = vmatpush.msra.mxu0 0.0
    %548 = vmatpush.msra.mxu0 0.0
    %549 = vmatpush.msra.mxu0 0.0
    %550 = vmatpush.msra.mxu0 0.0
    %551 = vmatpush.msra.mxu0 0.0
    %552 = vmatpush.msra.mxu0 0.0
    %553 = vmatpush.msra.mxu0 0.0
    %554 = vmatpush.msra.mxu0 %v479
    %555 = vmatpush.msra.mxu0 %v476
    %556 = vmatpush.msra.mxu0 %v473
    %557 = vmatmul.f32.gmra.mxu0 %v490
    %v558 = vpop.f32.mrf.mxu0
    %v559 = vadd.f32 0.0, %v558
    %560 = vmatmul.f32.gmra.mxu0 %v493
    %v561 = vpop.f32.mrf.mxu0
    %v562 = vadd.f32 0.0, %v561
    %563 = vdwg.mxu0
    %v564 = vadd.f32 %v362, %v513
    %v565 = vadd.f32 %v385, %v536
    %v566 = vadd.f32 %v408, %v559
    %v567 = vadd.f32 %v365, %v516
    %v568 = vadd.f32 %v388, %v539
    %v569 = vadd.f32 %v411, %v562
    %571 = vset.pattern.permute.xlu0 0
    %572 = vperm.xlu0 %571, %v59
    %v573 = vpop.permute.xlu0 %572
    %576 = vset.pattern.permute.xlu0 0
    %577 = vperm.xlu0 %576, %v60
    %v578 = vpop.permute.xlu0 %577
    %v580 = vadd.f32 %v564, %v573
    %v581 = vadd.f32 %v565, %v573
    %v582 = vadd.f32 %v566, %v573
    %v583 = vadd.f32 %v567, %v578
    %v584 = vadd.f32 %v568, %v578
    %v585 = vadd.f32 %v569, %v578
    %v586 = vmax.f32 %v580, 0.0
    %v587 = vmax.f32 %v581, 0.0
    %v588 = vmax.f32 %v582, 0.0
    %v589 = vmax.f32 %v583, 0.0
    %v590 = vmax.f32 %v584, 0.0
    %v591 = vmax.f32 %v585, 0.0
    %v593 = vperm.slane %v63, 0
    %v594 = vperm.slane %v63, 1
    %v595 = vperm.slane %v63, 2
    %v599 = vmul.f32 %v586, %v593
    %v600 = vmul.f32 %v587, %v594
    %v601 = vmul.f32 %v588, %v595
    %v602 = vmul.f32 %v589, %v593
    %v603 = vmul.f32 %v590, %v594
    %v604 = vmul.f32 %v591, %v595
    %611 = vrot.lane.b32.xlu0 %v599, 42
    %v612 = vpop.permute.xlu0 %611
    %613 = vrot.lane.b32.xlu0 %v600, 42
    %v614 = vpop.permute.xlu0 %613
    %615 = vrot.lane.b32.xlu0 %v601, 42
    %v616 = vpop.permute.xlu0 %615
    %617 = vrot.lane.b32.xlu0 %v602, 42
    %v618 = vpop.permute.xlu0 %617
    %619 = vrot.lane.b32.xlu0 %v603, 42
    %v620 = vpop.permute.xlu0 %619
    %621 = vrot.lane.b32.xlu0 %v604, 42
    %v622 = vpop.permute.xlu0 %621
    %v623 = vsel %vm69, %v612, %v614
    %v624 = vsel %vm69, %v614, %v616
    %v625 = vsel %vm69, %v618, %v620
    %v626 = vsel %vm69, %v620, %v622
    %vm633 = vcmask 1047888
    %634 = vst.msk [vmem:[#allocation3] sm:$0xff] %vm633, %v612
    %635 = vst [vmem:[#allocation3 + $0x8] sm:$0xff] %v623
    %vm636 = vcmask 867328
    %637 = vst.msk [vmem:[#allocation3 + $0x10] sm:$0xff] %vm636, %v624
    %638 = vst.msk [vmem:[#allocation3 + $0x20] sm:$0xff] %vm633, %v618
    %639 = vst [vmem:[#allocation3 + $0x28] sm:$0xff] %v625
    %640 = vst.msk [vmem:[#allocation3 + $0x30] sm:$0xff] %vm636, %v626
    %v641 = vld [vmem:[#allocation3] sm:$0xff]
    %v642 = vld [vmem:[#allocation3 + $0x8] sm:$0xff]
    %v643 = vld [vmem:[#allocation3 + $0x10] sm:$0xff]
    %v644 = vld [vmem:[#allocation3 + $0x20] sm:$0xff]
    %v645 = vld [vmem:[#allocation3 + $0x28] sm:$0xff]
    %v646 = vld [vmem:[#allocation3 + $0x30] sm:$0xff]
    %653 = vrot.lane.b32.xlu0 %v641, 126
    %v654 = vpop.permute.xlu0 %653
    %655 = vrot.lane.b32.xlu0 %v642, 126
    %v656 = vpop.permute.xlu0 %655
    %657 = vrot.lane.b32.xlu0 %v643, 126
    %v658 = vpop.permute.xlu0 %657
    %659 = vrot.lane.b32.xlu0 %v644, 126
    %v660 = vpop.permute.xlu0 %659
    %661 = vrot.lane.b32.xlu0 %v645, 126
    %v662 = vpop.permute.xlu0 %661
    %663 = vrot.lane.b32.xlu0 %v646, 126
    %v664 = vpop.permute.xlu0 %663
    %v665 = vsel %vm205, %v654, %v656
    %v666 = vsel %vm205, %v656, %v658
    %v667 = vsel %vm205, %v660, %v662
    %v668 = vsel %vm205, %v662, %v664
    %675 = vrot.lane.b32.xlu0 %v641, 124
    %v676 = vpop.permute.xlu0 %675
    %677 = vrot.lane.b32.xlu0 %v642, 124
    %v678 = vpop.permute.xlu0 %677
    %679 = vrot.lane.b32.xlu0 %v643, 124
    %v680 = vpop.permute.xlu0 %679
    %681 = vrot.lane.b32.xlu0 %v644, 124
    %v682 = vpop.permute.xlu0 %681
    %683 = vrot.lane.b32.xlu0 %v645, 124
    %v684 = vpop.permute.xlu0 %683
    %685 = vrot.lane.b32.xlu0 %v646, 124
    %v686 = vpop.permute.xlu0 %685
    %v687 = vsel %vm217, %v676, %v678
    %v688 = vsel %vm217, %v678, %v680
    %v689 = vsel %vm217, %v682, %v684
    %v690 = vsel %vm217, %v684, %v686
    %v697 = vld [vmem:[#allocation7] sm:$0xff]
    %v698 = vld [vmem:[#allocation7 + $0x8] sm:$0xff]
    %s699 = scalar_lea.vmem [#allocation7], 16
    %v700 = vld [vmem:[%s699] sm:$0xff]
    %v701 = vld [vmem:[%s699 + $0x8] sm:$0xff]
    %702 = vrot.lane.b32.xlu0 %v641, 88
    %v703 = vpop.permute.xlu0 %702
    %704 = vrot.lane.b32.xlu0 %v642, 88
    %v705 = vpop.permute.xlu0 %704
    %706 = vrot.lane.b32.xlu0 %v643, 88
    %v707 = vpop.permute.xlu0 %706
    %708 = vrot.lane.b32.xlu0 %v644, 88
    %v709 = vpop.permute.xlu0 %708
    %710 = vrot.lane.b32.xlu0 %v645, 88
    %v711 = vpop.permute.xlu0 %710
    %712 = vrot.lane.b32.xlu0 %v646, 88
    %v713 = vpop.permute.xlu0 %712
    %714 = vrot.lane.b32.xlu0 %v665, 88
    %v715 = vpop.permute.xlu0 %714
    %716 = vrot.lane.b32.xlu0 %v666, 88
    %v717 = vpop.permute.xlu0 %716
    %718 = vrot.lane.b32.xlu0 %v658, 88
    %v719 = vpop.permute.xlu0 %718
    %720 = vrot.lane.b32.xlu0 %v667, 88
    %v721 = vpop.permute.xlu0 %720
    %722 = vrot.lane.b32.xlu0 %v668, 88
    %v723 = vpop.permute.xlu0 %722
    %724 = vrot.lane.b32.xlu0 %v664, 88
    %v725 = vpop.permute.xlu0 %724
    %726 = vrot.lane.b32.xlu0 %v687, 88
    %v727 = vpop.permute.xlu0 %726
    %728 = vrot.lane.b32.xlu0 %v688, 88
    %v729 = vpop.permute.xlu0 %728
    %730 = vrot.lane.b32.xlu0 %v680, 88
    %v731 = vpop.permute.xlu0 %730
    %732 = vrot.lane.b32.xlu0 %v689, 88
    %v733 = vpop.permute.xlu0 %732
    %734 = vrot.lane.b32.xlu0 %v690, 88
    %v735 = vpop.permute.xlu0 %734
    %736 = vrot.lane.b32.xlu0 %v686, 88
    %v737 = vpop.permute.xlu0 %736
    %v738 = vsel %vm246, %v703, %v705
    %v739 = vsel %vm246, %v705, %v707
    %v740 = vsel %vm246, %v709, %v711
    %v741 = vsel %vm246, %v711, %v713
    %v742 = vsel %vm246, %v715, %v717
    %v743 = vsel %vm246, %v717, %v719
    %v744 = vsel %vm246, %v721, %v723
    %v745 = vsel %vm246, %v723, %v725
    %v746 = vsel %vm246, %v727, %v729
    %v747 = vsel %vm246, %v729, %v731
    %v748 = vsel %vm246, %v733, %v735
    %v749 = vsel %vm246, %v735, %v737
    %v769 = vsel %vm470, %v700, 0
    %v772 = vsel %vm470, %v701, 0
    %774 = vmatpush.msra.mxu0 0.0
    %775 = vmatpush.msra.mxu0 0.0
    %776 = vmatpush.msra.mxu0 0.0
    %777 = vmatpush.msra.mxu0 0.0
    %778 = vmatpush.msra.mxu0 0.0
    %779 = vmatpush.msra.mxu0 0.0
    %780 = vmatpush.msra.mxu0 0.0
    %781 = vmatpush.msra.mxu0 0.0
    %782 = vmatpush.msra.mxu0 0.0
    %783 = vmatpush.msra.mxu0 0.0
    %784 = vmatpush.msra.mxu0 %v748
    %785 = vmatpush.msra.mxu0 %v746
    %786 = vmatpush.msra.mxu0 %v744
    %787 = vmatpush.msra.mxu0 %v742
    %788 = vmatpush.msra.mxu0 %v740
    %789 = vmatpush.msra.mxu0 %v738
    %790 = vmatmul.f32.gmra.mxu0 %v769
    %v791 = vpop.f32.mrf.mxu0
    %v792 = vadd.f32 0.0, %v791
    %793 = vmatmul.f32.gmra.mxu0 %v772
    %v794 = vpop.f32.mrf.mxu0
    %v795 = vadd.f32 0.0, %v794
    %796 = vdwg.mxu0
    %797 = vmatpush.msra.mxu0 0.0
    %798 = vmatpush.msra.mxu0 0.0
    %799 = vmatpush.msra.mxu0 0.0
    %800 = vmatpush.msra.mxu0 0.0
    %801 = vmatpush.msra.mxu0 0.0
    %802 = vmatpush.msra.mxu0 0.0
    %803 = vmatpush.msra.mxu0 0.0
    %804 = vmatpush.msra.mxu0 0.0
    %805 = vmatpush.msra.mxu0 0.0
    %806 = vmatpush.msra.mxu0 0.0
    %807 = vmatpush.msra.mxu0 %v749
    %808 = vmatpush.msra.mxu0 %v747
    %809 = vmatpush.msra.mxu0 %v745
    %810 = vmatpush.msra.mxu0 %v743
    %811 = vmatpush.msra.mxu0 %v741
    %812 = vmatpush.msra.mxu0 %v739
    %813 = vmatmul.f32.gmra.mxu0 %v769
    %v814 = vpop.f32.mrf.mxu0
    %v815 = vadd.f32 0.0, %v814
    %816 = vmatmul.f32.gmra.mxu0 %v772
    %v817 = vpop.f32.mrf.mxu0
    %v818 = vadd.f32 0.0, %v817
    %819 = vdwg.mxu0
    %820 = vmatpush.msra.mxu0 0.0
    %821 = vmatpush.msra.mxu0 0.0
    %822 = vmatpush.msra.mxu0 0.0
    %823 = vmatpush.msra.mxu0 0.0
    %824 = vmatpush.msra.mxu0 0.0
    %825 = vmatpush.msra.mxu0 0.0
    %826 = vmatpush.msra.mxu0 0.0
    %827 = vmatpush.msra.mxu0 0.0
    %828 = vmatpush.msra.mxu0 0.0
    %829 = vmatpush.msra.mxu0 0.0
    %830 = vmatpush.msra.mxu0 %v737
    %831 = vmatpush.msra.mxu0 %v731
    %832 = vmatpush.msra.mxu0 %v725
    %833 = vmatpush.msra.mxu0 %v719
    %834 = vmatpush.msra.mxu0 %v713
    %835 = vmatpush.msra.mxu0 %v707
    %836 = vmatmul.f32.gmra.mxu0 %v769
    %v837 = vpop.f32.mrf.mxu0
    %v838 = vadd.f32 0.0, %v837
    %839 = vmatmul.f32.gmra.mxu0 %v772
    %v840 = vpop.f32.mrf.mxu0
    %v841 = vadd.f32 0.0, %v840
    %842 = vdwg.mxu0
    %v844 = vsel %vm470, %v697, 0
    %v847 = vsel %vm470, %v698, 0
    %849 = vmatpush.msra.mxu0 0.0
    %850 = vmatpush.msra.mxu0 0.0
    %851 = vmatpush.msra.mxu0 0.0
    %852 = vmatpush.msra.mxu0 0.0
    %853 = vmatpush.msra.mxu0 0.0
    %854 = vmatpush.msra.mxu0 0.0
    %855 = vmatpush.msra.mxu0 0.0
    %856 = vmatpush.msra.mxu0 0.0
    %857 = vmatpush.msra.mxu0 0.0
    %858 = vmatpush.msra.mxu0 0.0
    %859 = vmatpush.msra.mxu0 %v689
    %860 = vmatpush.msra.mxu0 %v687
    %861 = vmatpush.msra.mxu0 %v667
    %862 = vmatpush.msra.mxu0 %v665
    %863 = vmatpush.msra.mxu0 %v644
    %864 = vmatpush.msra.mxu0 %v641
    %865 = vmatmul.f32.gmra.mxu0 %v844
    %v866 = vpop.f32.mrf.mxu0
    %v867 = vadd.f32 %v792, %v866
    %868 = vmatmul.f32.gmra.mxu0 %v847
    %v869 = vpop.f32.mrf.mxu0
    %v870 = vadd.f32 %v795, %v869
    %871 = vdwg.mxu0
    %872 = vmatpush.msra.mxu0 0.0
    %873 = vmatpush.msra.mxu0 0.0
    %874 = vmatpush.msra.mxu0 0.0
    %875 = vmatpush.msra.mxu0 0.0
    %876 = vmatpush.msra.mxu0 0.0
    %877 = vmatpush.msra.mxu0 0.0
    %878 = vmatpush.msra.mxu0 0.0
    %879 = vmatpush.msra.mxu0 0.0
    %880 = vmatpush.msra.mxu0 0.0
    %881 = vmatpush.msra.mxu0 0.0
    %882 = vmatpush.msra.mxu0 %v690
    %883 = vmatpush.msra.mxu0 %v688
    %884 = vmatpush.msra.mxu0 %v668
    %885 = vmatpush.msra.mxu0 %v666
    %886 = vmatpush.msra.mxu0 %v645
    %887 = vmatpush.msra.mxu0 %v642
    %888 = vmatmul.f32.gmra.mxu0 %v844
    %v889 = vpop.f32.mrf.mxu0
    %v890 = vadd.f32 %v815, %v889
    %891 = vmatmul.f32.gmra.mxu0 %v847
    %v892 = vpop.f32.mrf.mxu0
    %v893 = vadd.f32 %v818, %v892
    %894 = vdwg.mxu0
    %895 = vmatpush.msra.mxu0 0.0
    %896 = vmatpush.msra.mxu0 0.0
    %897 = vmatpush.msra.mxu0 0.0
    %898 = vmatpush.msra.mxu0 0.0
    %899 = vmatpush.msra.mxu0 0.0
    %900 = vmatpush.msra.mxu0 0.0
    %901 = vmatpush.msra.mxu0 0.0
    %902 = vmatpush.msra.mxu0 0.0
    %903 = vmatpush.msra.mxu0 0.0
    %904 = vmatpush.msra.mxu0 0.0
    %905 = vmatpush.msra.mxu0 %v686
    %906 = vmatpush.msra.mxu0 %v680
    %907 = vmatpush.msra.mxu0 %v664
    %908 = vmatpush.msra.mxu0 %v658
    %909 = vmatpush.msra.mxu0 %v646
    %910 = vmatpush.msra.mxu0 %v643
    %911 = vmatmul.f32.gmra.mxu0 %v844
    %v912 = vpop.f32.mrf.mxu0
    %v913 = vadd.f32 %v838, %v912
    %914 = vmatmul.f32.gmra.mxu0 %v847
    %v915 = vpop.f32.mrf.mxu0
    %v916 = vadd.f32 %v841, %v915
    %917 = vdwg.mxu0
    %v918 = vld [vmem:[#allocation3] sm:$0xff]
    %v919 = vld [vmem:[#allocation3 + $0x8] sm:$0xff]
    %v920 = vld [vmem:[#allocation3 + $0x10] sm:$0xff]
    %v921 = vld [vmem:[#allocation3 + $0x18] sm:$0xff]
    %v922 = vld [vmem:[#allocation3 + $0x20] sm:$0xff]
    %v923 = vld [vmem:[#allocation3 + $0x28] sm:$0xff]
    %v924 = vld [vmem:[#allocation3 + $0x30] sm:$0xff]
    %v925 = vld [vmem:[#allocation3 + $0x38] sm:$0xff]
    %934 = vrot.lane.b32.xlu0 %v918, 126
    %v935 = vpop.permute.xlu0 %934
    %936 = vrot.lane.b32.xlu0 %v919, 126
    %v937 = vpop.permute.xlu0 %936
    %938 = vrot.lane.b32.xlu0 %v920, 126
    %v939 = vpop.permute.xlu0 %938
    %940 = vrot.lane.b32.xlu0 %v921, 126
    %v941 = vpop.permute.xlu0 %940
    %942 = vrot.lane.b32.xlu0 %v922, 126
    %v943 = vpop.permute.xlu0 %942
    %944 = vrot.lane.b32.xlu0 %v923, 126
    %v945 = vpop.permute.xlu0 %944
    %946 = vrot.lane.b32.xlu0 %v924, 126
    %v947 = vpop.permute.xlu0 %946
    %948 = vrot.lane.b32.xlu0 %v925, 126
    %v949 = vpop.permute.xlu0 %948
    %v950 = vsel %vm205, %v935, %v937
    %v951 = vsel %vm205, %v937, %v939
    %v952 = vsel %vm205, %v939, %v941
    %v953 = vsel %vm205, %v943, %v945
    %v954 = vsel %vm205, %v945, %v947
    %v955 = vsel %vm205, %v947, %v949
    %956 = vrot.lane.b32.xlu0 %v918, 124
    %v957 = vpop.permute.xlu0 %956
    %958 = vrot.lane.b32.xlu0 %v919, 124
    %v959 = vpop.permute.xlu0 %958
    %960 = vrot.lane.b32.xlu0 %v920, 124
    %v961 = vpop.permute.xlu0 %960
    %962 = vrot.lane.b32.xlu0 %v921, 124
    %v963 = vpop.permute.xlu0 %962
    %964 = vrot.lane.b32.xlu0 %v922, 124
    %v965 = vpop.permute.xlu0 %964
    %966 = vrot.lane.b32.xlu0 %v923, 124
    %v967 = vpop.permute.xlu0 %966
    %968 = vrot.lane.b32.xlu0 %v924, 124
    %v969 = vpop.permute.xlu0 %968
    %970 = vrot.lane.b32.xlu0 %v925, 124
    %v971 = vpop.permute.xlu0 %970
    %v972 = vsel %vm217, %v957, %v959
    %v973 = vsel %vm217, %v959, %v961
    %v974 = vsel %vm217, %v961, %v963
    %v975 = vsel %vm217, %v965, %v967
    %v976 = vsel %vm217, %v967, %v969
    %v977 = vsel %vm217, %v969, %v971
    %s978 = scalar_lea.vmem [#allocation7], 32
    %v979 = vld [vmem:[%s978] sm:$0xff]
    %v980 = vld [vmem:[%s978 + $0x8] sm:$0xff]
    %981 = vrot.lane.b32.xlu0 %v918, 48
    %v982 = vpop.permute.xlu0 %981
    %983 = vrot.lane.b32.xlu0 %v919, 48
    %v984 = vpop.permute.xlu0 %983
    %985 = vrot.lane.b32.xlu0 %v920, 48
    %v986 = vpop.permute.xlu0 %985
    %987 = vrot.lane.b32.xlu0 %v921, 48
    %v988 = vpop.permute.xlu0 %987
    %989 = vrot.lane.b32.xlu0 %v922, 48
    %v990 = vpop.permute.xlu0 %989
    %991 = vrot.lane.b32.xlu0 %v923, 48
    %v992 = vpop.permute.xlu0 %991
    %993 = vrot.lane.b32.xlu0 %v924, 48
    %v994 = vpop.permute.xlu0 %993
    %995 = vrot.lane.b32.xlu0 %v925, 48
    %v996 = vpop.permute.xlu0 %995
    %997 = vrot.lane.b32.xlu0 %v950, 48
    %v998 = vpop.permute.xlu0 %997
    %999 = vrot.lane.b32.xlu0 %v951, 48
    %v1000 = vpop.permute.xlu0 %999
    %1001 = vrot.lane.b32.xlu0 %v952, 48
    %v1002 = vpop.permute.xlu0 %1001
    %1003 = vrot.lane.b32.xlu0 %v941, 48
    %v1004 = vpop.permute.xlu0 %1003
    %1005 = vrot.lane.b32.xlu0 %v953, 48
    %v1006 = vpop.permute.xlu0 %1005
    %1007 = vrot.lane.b32.xlu0 %v954, 48
    %v1008 = vpop.permute.xlu0 %1007
    %1009 = vrot.lane.b32.xlu0 %v955, 48
    %v1010 = vpop.permute.xlu0 %1009
    %1011 = vrot.lane.b32.xlu0 %v949, 48
    %v1012 = vpop.permute.xlu0 %1011
    %1013 = vrot.lane.b32.xlu0 %v972, 48
    %v1014 = vpop.permute.xlu0 %1013
    %1015 = vrot.lane.b32.xlu0 %v973, 48
    %v1016 = vpop.permute.xlu0 %1015
    %1017 = vrot.lane.b32.xlu0 %v974, 48
    %v1018 = vpop.permute.xlu0 %1017
    %1019 = vrot.lane.b32.xlu0 %v963, 48
    %v1020 = vpop.permute.xlu0 %1019
    %1021 = vrot.lane.b32.xlu0 %v975, 48
    %v1022 = vpop.permute.xlu0 %1021
    %1023 = vrot.lane.b32.xlu0 %v976, 48
    %v1024 = vpop.permute.xlu0 %1023
    %1025 = vrot.lane.b32.xlu0 %v977, 48
    %v1026 = vpop.permute.xlu0 %1025
    %1027 = vrot.lane.b32.xlu0 %v971, 48
    %v1028 = vpop.permute.xlu0 %1027
    %v1029 = vsel %vm470, %v982, %v984
    %v1030 = vsel %vm470, %v984, %v986
    %v1031 = vsel %vm470, %v986, %v988
    %v1032 = vsel %vm470, %v990, %v992
    %v1033 = vsel %vm470, %v992, %v994
    %v1034 = vsel %vm470, %v994, %v996
    %v1035 = vsel %vm470, %v998, %v1000
    %v1036 = vsel %vm470, %v1000, %v1002
    %v1037 = vsel %vm470, %v1002, %v1004
    %v1038 = vsel %vm470, %v1006, %v1008
    %v1039 = vsel %vm470, %v1008, %v1010
    %v1040 = vsel %vm470, %v1010, %v1012
    %v1041 = vsel %vm470, %v1014, %v1016
    %v1042 = vsel %vm470, %v1016, %v1018
    %v1043 = vsel %vm470, %v1018, %v1020
    %v1044 = vsel %vm470, %v1022, %v1024
    %v1045 = vsel %vm470, %v1024, %v1026
    %v1046 = vsel %vm470, %v1026, %v1028
    %v1066 = vsel %vm470, %v979, 0
    %v1069 = vsel %vm470, %v980, 0
    %1071 = vmatpush.msra.mxu0 0.0
    %1072 = vmatpush.msra.mxu0 0.0
    %1073 = vmatpush.msra.mxu0 0.0
    %1074 = vmatpush.msra.mxu0 0.0
    %1075 = vmatpush.msra.mxu0 0.0
    %1076 = vmatpush.msra.mxu0 0.0
    %1077 = vmatpush.msra.mxu0 0.0
    %1078 = vmatpush.msra.mxu0 0.0
    %1079 = vmatpush.msra.mxu0 0.0
    %1080 = vmatpush.msra.mxu0 0.0
    %1081 = vmatpush.msra.mxu0 %v1044
    %1082 = vmatpush.msra.mxu0 %v1041
    %1083 = vmatpush.msra.mxu0 %v1038
    %1084 = vmatpush.msra.mxu0 %v1035
    %1085 = vmatpush.msra.mxu0 %v1032
    %1086 = vmatpush.msra.mxu0 %v1029
    %1087 = vmatmul.f32.gmra.mxu0 %v1066
    %v1088 = vpop.f32.mrf.mxu0
    %v1089 = vadd.f32 0.0, %v1088
    %1090 = vmatmul.f32.gmra.mxu0 %v1069
    %v1091 = vpop.f32.mrf.mxu0
    %v1092 = vadd.f32 0.0, %v1091
    %1093 = vdwg.mxu0
    %1094 = vmatpush.msra.mxu0 0.0
    %1095 = vmatpush.msra.mxu0 0.0
    %1096 = vmatpush.msra.mxu0 0.0
    %1097 = vmatpush.msra.mxu0 0.0
    %1098 = vmatpush.msra.mxu0 0.0
    %1099 = vmatpush.msra.mxu0 0.0
    %1100 = vmatpush.msra.mxu0 0.0
    %1101 = vmatpush.msra.mxu0 0.0
    %1102 = vmatpush.msra.mxu0 0.0
    %1103 = vmatpush.msra.mxu0 0.0
    %1104 = vmatpush.msra.mxu0 %v1045
    %1105 = vmatpush.msra.mxu0 %v1042
    %1106 = vmatpush.msra.mxu0 %v1039
    %1107 = vmatpush.msra.mxu0 %v1036
    %1108 = vmatpush.msra.mxu0 %v1033
    %1109 = vmatpush.msra.mxu0 %v1030
    %1110 = vmatmul.f32.gmra.mxu0 %v1066
    %v1111 = vpop.f32.mrf.mxu0
    %v1112 = vadd.f32 0.0, %v1111
    %1113 = vmatmul.f32.gmra.mxu0 %v1069
    %v1114 = vpop.f32.mrf.mxu0
    %v1115 = vadd.f32 0.0, %v1114
    %1116 = vdwg.mxu0
    %1117 = vmatpush.msra.mxu0 0.0
    %1118 = vmatpush.msra.mxu0 0.0
    %1119 = vmatpush.msra.mxu0 0.0
    %1120 = vmatpush.msra.mxu0 0.0
    %1121 = vmatpush.msra.mxu0 0.0
    %1122 = vmatpush.msra.mxu0 0.0
    %1123 = vmatpush.msra.mxu0 0.0
    %1124 = vmatpush.msra.mxu0 0.0
    %1125 = vmatpush.msra.mxu0 0.0
    %1126 = vmatpush.msra.mxu0 0.0
    %1127 = vmatpush.msra.mxu0 %v1046
    %1128 = vmatpush.msra.mxu0 %v1043
    %1129 = vmatpush.msra.mxu0 %v1040
    %1130 = vmatpush.msra.mxu0 %v1037
    %1131 = vmatpush.msra.mxu0 %v1034
    %1132 = vmatpush.msra.mxu0 %v1031
    %1133 = vmatmul.f32.gmra.mxu0 %v1066
    %v1134 = vpop.f32.mrf.mxu0
    %v1135 = vadd.f32 0.0, %v1134
    %1136 = vmatmul.f32.gmra.mxu0 %v1069
    %v1137 = vpop.f32.mrf.mxu0
    %v1138 = vadd.f32 0.0, %v1137
    %1139 = vdwg.mxu0
    %v1140 = vadd.f32 %v867, %v1089
    %v1141 = vadd.f32 %v890, %v1112
    %v1142 = vadd.f32 %v913, %v1135
    %v1143 = vadd.f32 %v870, %v1092
    %v1144 = vadd.f32 %v893, %v1115
    %v1145 = vadd.f32 %v916, %v1138
    %v1146 = vld [vmem:[#allocation2] sm:$0xff]
    %v1147 = vld [vmem:[#allocation2 + $0x8] sm:$0xff]
    %v1148 = vld [vmem:[#allocation2 + $0x10] sm:$0xff]
    %v1149 = vld [vmem:[%s4] sm:$0xff]
    %v1150 = vld [vmem:[%s4 + $0x8] sm:$0xff]
    %1154 = vrot.lane.b32.xlu0 %v1146, 86
    %v1155 = vpop.permute.xlu0 %1154
    %1156 = vrot.lane.b32.xlu0 %v1147, 86
    %v1157 = vpop.permute.xlu0 %1156
    %1158 = vrot.lane.b32.xlu0 %v1148, 86
    %v1159 = vpop.permute.xlu0 %1158
    %vm1160 = vcmask 703488
    %v1161 = vsel %vm1160, %v1155, %v1157
    %v1162 = vsel %vm1160, %v1157, %v1159
    %vm1166 = vcmask 64512
    %v1168 = vsel %vm1166, %v1149, 0
    %v1171 = vsel %vm1166, %v1150, 0
    %1173 = vmatpush.msra.mxu0 0.0
    %1174 = vmatpush.msra.mxu0 0.0
    %1175 = vmatpush.msra.mxu0 0.0
    %1176 = vmatpush.msra.mxu0 0.0
    %1177 = vmatpush.msra.mxu0 0.0
    %1178 = vmatpush.msra.mxu0 0.0
    %1179 = vmatpush.msra.mxu0 0.0
    %1180 = vmatpush.msra.mxu0 0.0
    %1181 = vmatpush.msra.mxu0 0.0
    %1182 = vmatpush.msra.mxu0 0.0
    %1183 = vmatpush.msra.mxu0 0.0
    %1184 = vmatpush.msra.mxu0 0.0
    %1185 = vmatpush.msra.mxu0 0.0
    %1186 = vmatpush.msra.mxu0 0.0
    %1187 = vmatpush.msra.mxu0 0.0
    %1188 = vmatpush.msra.mxu0 %v1161
    %1189 = vmatmul.f32.gmra.mxu0 %v1168
    %v1190 = vpop.f32.mrf.mxu0
    %v1191 = vadd.f32 0.0, %v1190
    %1192 = vmatmul.f32.gmra.mxu0 %v1171
    %v1193 = vpop.f32.mrf.mxu0
    %v1194 = vadd.f32 0.0, %v1193
    %1195 = vdwg.mxu0
    %1196 = vmatpush.msra.mxu0 0.0
    %1197 = vmatpush.msra.mxu0 0.0
    %1198 = vmatpush.msra.mxu0 0.0
    %1199 = vmatpush.msra.mxu0 0.0
    %1200 = vmatpush.msra.mxu0 0.0
    %1201 = vmatpush.msra.mxu0 0.0
    %1202 = vmatpush.msra.mxu0 0.0
    %1203 = vmatpush.msra.mxu0 0.0
    %1204 = vmatpush.msra.mxu0 0.0
    %1205 = vmatpush.msra.mxu0 0.0
    %1206 = vmatpush.msra.mxu0 0.0
    %1207 = vmatpush.msra.mxu0 0.0
    %1208 = vmatpush.msra.mxu0 0.0
    %1209 = vmatpush.msra.mxu0 0.0
    %1210 = vmatpush.msra.mxu0 0.0
    %1211 = vmatpush.msra.mxu0 %v1162
    %1212 = vmatmul.f32.gmra.mxu0 %v1168
    %v1213 = vpop.f32.mrf.mxu0
    %v1214 = vadd.f32 0.0, %v1213
    %1215 = vmatmul.f32.gmra.mxu0 %v1171
    %v1216 = vpop.f32.mrf.mxu0
    %v1217 = vadd.f32 0.0, %v1216
    %1218 = vdwg.mxu0
    %1219 = vmatpush.msra.mxu0 0.0
    %1220 = vmatpush.msra.mxu0 0.0
    %1221 = vmatpush.msra.mxu0 0.0
    %1222 = vmatpush.msra.mxu0 0.0
    %1223 = vmatpush.msra.mxu0 0.0
    %1224 = vmatpush.msra.mxu0 0.0
    %1225 = vmatpush.msra.mxu0 0.0
    %1226 = vmatpush.msra.mxu0 0.0
    %1227 = vmatpush.msra.mxu0 0.0
    %1228 = vmatpush.msra.mxu0 0.0
    %1229 = vmatpush.msra.mxu0 0.0
    %1230 = vmatpush.msra.mxu0 0.0
    %1231 = vmatpush.msra.mxu0 0.0
    %1232 = vmatpush.msra.mxu0 0.0
    %1233 = vmatpush.msra.mxu0 0.0
    %1234 = vmatpush.msra.mxu0 %v1159
    %1235 = vmatmul.f32.gmra.mxu0 %v1168
    %v1236 = vpop.f32.mrf.mxu0
    %v1237 = vadd.f32 0.0, %v1236
    %1238 = vmatmul.f32.gmra.mxu0 %v1171
    %v1239 = vpop.f32.mrf.mxu0
    %v1240 = vadd.f32 0.0, %v1239
    %1241 = vdwg.mxu0
    %v1242 = vadd.f32 %v1140, %v1191
    %v1243 = vadd.f32 %v1141, %v1214
    %v1244 = vadd.f32 %v1142, %v1237
    %v1245 = vadd.f32 %v1143, %v1194
    %v1246 = vadd.f32 %v1144, %v1217
    %v1247 = vadd.f32 %v1145, %v1240
    %1249 = vset.pattern.permute.xlu0 0
    %1250 = vperm.xlu0 %1249, %v61
    %v1251 = vpop.permute.xlu0 %1250
    %1254 = vset.pattern.permute.xlu0 0
    %1255 = vperm.xlu0 %1254, %v62
    %v1256 = vpop.permute.xlu0 %1255
    %v1258 = vadd.f32 %v1242, %v1251
    %v1259 = vadd.f32 %v1243, %v1251
    %v1260 = vadd.f32 %v1244, %v1251
    %v1261 = vadd.f32 %v1245, %v1256
    %v1262 = vadd.f32 %v1246, %v1256
    %v1263 = vadd.f32 %v1247, %v1256
    %v1264 = vmax.f32 %v1258, 0.0
    %v1265 = vmax.f32 %v1259, 0.0
    %v1266 = vmax.f32 %v1260, 0.0
    %v1267 = vmax.f32 %v1261, 0.0
    %v1268 = vmax.f32 %v1262, 0.0
    %v1269 = vmax.f32 %v1263, 0.0
    %v1270 = vmul.f32 %v1264, %v593
    %v1271 = vmul.f32 %v1265, %v594
    %v1272 = vmul.f32 %v1266, %v595
    %v1273 = vmul.f32 %v1267, %v593
    %v1274 = vmul.f32 %v1268, %v594
    %v1275 = vmul.f32 %v1269, %v595
    %1276 = vst [vmem:[#allocation9] sm:$0xff] %v1270
    %1277 = vst [vmem:[#allocation9 + $0x8] sm:$0xff] %v1271
    %vm1278 = vcmask 523264
    %1279 = vst.msk [vmem:[#allocation9 + $0x10] sm:$0xff] %vm1278, %v1272
    %1280 = vst [vmem:[#allocation9 + $0x18] sm:$0xff] %v1273
    %1281 = vst [vmem:[#allocation9 + $0x20] sm:$0xff] %v1274
    %1282 = vst.msk [vmem:[#allocation9 + $0x28] sm:$0xff] %vm1278, %v1275
    %s1283 = scalar_lea.vmem %s0, 16
    %v1284 = vld [vmem:[%s1283] sm:$0xff]
    %1286 = vrot.lane.b32.xlu0 %v1284, 42
    %v1287 = vpop.permute.xlu0 %1286
    %1289 = vst.msk [vmem:[#allocation2] sm:$0xff] %vm82, %v1287
    %v1290 = vld [vmem:[%s1283] sm:$0xff]
    %1292 = vrot.lane.b32.xlu0 %v1290, 46
    %v1293 = vpop.permute.xlu0 %1292
    %1295 = vst.msk [vmem:[#allocation2] sm:$0xff] %vm89, %v1293
    %v1296 = vld [vmem:[%s1283] sm:$0xff]
    %1298 = vrot.lane.b32.xlu0 %v1296, 50
    %v1299 = vpop.permute.xlu0 %1298
    %1301 = vst.msk [vmem:[#allocation2] sm:$0xff] %vm96, %v1299
    %v1302 = vld [vmem:[%s1283] sm:$0xff]
    %1304 = vrot.lane.b32.xlu0 %v1302, 54
    %v1305 = vpop.permute.xlu0 %1304
    %1307 = vst.msk [vmem:[#allocation2] sm:$0xff] %vm103, %v1305
    %v1308 = vld [vmem:[%s1283] sm:$0xff]
    %1310 = vrot.lane.b32.xlu0 %v1308, 58
    %v1311 = vpop.permute.xlu0 %1310
    %1313 = vst.msk [vmem:[#allocation2] sm:$0xff] %vm110, %v1311
    %1314 = vst.msk [vmem:[#allocation2 + $0x8] sm:$0xff] %vm112, %v1311
    %v1315 = vld [vmem:[%s1283] sm:$0xff]
    %1317 = vrot.lane.b32.xlu0 %v1315, 62
    %v1318 = vpop.permute.xlu0 %1317
    %1320 = vst.msk [vmem:[#allocation2 + $0x8] sm:$0xff] %vm119, %v1318
    %v1321 = vld [vmem:[%s1283] sm:$0xff]
    %1323 = vrot.lane.b32.xlu0 %v1321, 66
    %v1324 = vpop.permute.xlu0 %1323
    %1326 = vst.msk [vmem:[#allocation2 + $0x8] sm:$0xff] %vm126, %v1324
    %v1327 = vld [vmem:[%s1283] sm:$0xff]
    %1329 = vrot.lane.b32.xlu0 %v1327, 70
    %v1330 = vpop.permute.xlu0 %1329
    %1332 = vst.msk [vmem:[#allocation2 + $0x8] sm:$0xff] %vm133, %v1330
    %v1333 = vld [vmem:[%s1283 + $0x8] sm:$0xff]
    %1335 = vrot.lane.b32.xlu0 %v1333, 74
    %v1336 = vpop.permute.xlu0 %1335
    %1338 = vst.msk [vmem:[#allocation2 + $0x8] sm:$0xff] %vm140, %v1336
    %v1339 = vld [vmem:[%s1283 + $0x8] sm:$0xff]
    %1341 = vrot.lane.b32.xlu0 %v1339, 78
    %v1342 = vpop.permute.xlu0 %1341
    %1344 = vst.msk [vmem:[#allocation2 + $0x8] sm:$0xff] %vm147, %v1342
    %v1345 = vld [vmem:[%s1283 + $0x8] sm:$0xff]
    %1347 = vrot.lane.b32.xlu0 %v1345, 82
    %v1348 = vpop.permute.xlu0 %1347
    %1350 = vst.msk [vmem:[#allocation2 + $0x8] sm:$0xff] %vm154, %v1348
    %1351 = vst.msk [vmem:[#allocation2 + $0x10] sm:$0xff] %vm156, %v1348
    %v1352 = vld [vmem:[%s1283 + $0x8] sm:$0xff]
    %1354 = vrot.lane.b32.xlu0 %v1352, 86
    %v1355 = vpop.permute.xlu0 %1354
    %1357 = vst.msk [vmem:[#allocation2 + $0x10] sm:$0xff] %vm163, %v1355
    %v1358 = vld [vmem:[%s1283 + $0x8] sm:$0xff]
    %1360 = vrot.lane.b32.xlu0 %v1358, 90
    %v1361 = vpop.permute.xlu0 %1360
    %1363 = vst.msk [vmem:[#allocation2 + $0x10] sm:$0xff] %vm170, %v1361
    %v1364 = vld [vmem:[%s1283 + $0x8] sm:$0xff]
    %1366 = vrot.lane.b32.xlu0 %v1364, 94
    %v1367 = vpop.permute.xlu0 %1366
    %1369 = vst.msk [vmem:[#allocation2 + $0x10] sm:$0xff] %vm177, %v1367
    %v1370 = vld [vmem:[%s1283 + $0x8] sm:$0xff]
    %1372 = vrot.lane.b32.xlu0 %v1370, 98
    %v1373 = vpop.permute.xlu0 %1372
    %1375 = vst.msk [vmem:[#allocation2 + $0x10] sm:$0xff] %vm184, %v1373
    %v1376 = vld [vmem:[%s1283 + $0x8] sm:$0xff]
    %1378 = vrot.lane.b32.xlu0 %v1376, 102
    %v1379 = vpop.permute.xlu0 %1378
    %1381 = vst.msk [vmem:[#allocation2 + $0x10] sm:$0xff] %vm191, %v1379
    %v1382 = vld [vmem:[#allocation2] sm:$0xff]
    %v1383 = vld [vmem:[#allocation2 + $0x8] sm:$0xff]
    %v1384 = vld [vmem:[#allocation2 + $0x10] sm:$0xff]
    %1388 = vrot.lane.b32.xlu0 %v1382, 126
    %v1389 = vpop.permute.xlu0 %1388
    %1390 = vrot.lane.b32.xlu0 %v1383, 126
    %v1391 = vpop.permute.xlu0 %1390
    %1392 = vrot.lane.b32.xlu0 %v1384, 126
    %v1393 = vpop.permute.xlu0 %1392
    %v1394 = vsel %vm205, %v1389, %v1391
    %v1395 = vsel %vm205, %v1391, %v1393
    %1399 = vrot.lane.b32.xlu0 %v1382, 124
    %v1400 = vpop.permute.xlu0 %1399
    %1401 = vrot.lane.b32.xlu0 %v1383, 124
    %v1402 = vpop.permute.xlu0 %1401
    %1403 = vrot.lane.b32.xlu0 %v1384, 124
    %v1404 = vpop.permute.xlu0 %1403
    %v1405 = vsel %vm217, %v1400, %v1402
    %v1406 = vsel %vm217, %v1402, %v1404
    %v1410 = vld [vmem:[#allocation4] sm:$0xff]
    %v1411 = vld [vmem:[#allocation4 + $0x8] sm:$0xff]
    %v1412 = vld [vmem:[%s225] sm:$0xff]
    %v1413 = vld [vmem:[%s225 + $0x8] sm:$0xff]
    %1414 = vrot.lane.b32.xlu0 %v1382, 88
    %v1415 = vpop.permute.xlu0 %1414
    %1416 = vrot.lane.b32.xlu0 %v1383, 88
    %v1417 = vpop.permute.xlu0 %1416
    %1418 = vrot.lane.b32.xlu0 %v1384, 88
    %v1419 = vpop.permute.xlu0 %1418
    %1420 = vrot.lane.b32.xlu0 %v1394, 88
    %v1421 = vpop.permute.xlu0 %1420
    %1422 = vrot.lane.b32.xlu0 %v1395, 88
    %v1423 = vpop.permute.xlu0 %1422
    %1424 = vrot.lane.b32.xlu0 %v1393, 88
    %v1425 = vpop.permute.xlu0 %1424
    %1426 = vrot.lane.b32.xlu0 %v1405, 88
    %v1427 = vpop.permute.xlu0 %1426
    %1428 = vrot.lane.b32.xlu0 %v1406, 88
    %v1429 = vpop.permute.xlu0 %1428
    %1430 = vrot.lane.b32.xlu0 %v1404, 88
    %v1431 = vpop.permute.xlu0 %1430
    %v1432 = vsel %vm246, %v1415, %v1417
    %v1433 = vsel %vm246, %v1417, %v1419
    %v1434 = vsel %vm246, %v1421, %v1423
    %v1435 = vsel %vm246, %v1423, %v1425
    %v1436 = vsel %vm246, %v1427, %v1429
    %v1437 = vsel %vm246, %v1429, %v1431
    %v1448 = vsel %vm262, %v1412, 0
    %v1451 = vsel %vm262, %v1413, 0
    %1453 = vmatpush.msra.mxu0 0.0
    %1454 = vmatpush.msra.mxu0 0.0
    %1455 = vmatpush.msra.mxu0 0.0
    %1456 = vmatpush.msra.mxu0 0.0
    %1457 = vmatpush.msra.mxu0 0.0
    %1458 = vmatpush.msra.mxu0 0.0
    %1459 = vmatpush.msra.mxu0 0.0
    %1460 = vmatpush.msra.mxu0 0.0
    %1461 = vmatpush.msra.mxu0 0.0
    %1462 = vmatpush.msra.mxu0 0.0
    %1463 = vmatpush.msra.mxu0 0.0
    %1464 = vmatpush.msra.mxu0 0.0
    %1465 = vmatpush.msra.mxu0 0.0
    %1466 = vmatpush.msra.mxu0 %v1436
    %1467 = vmatpush.msra.mxu0 %v1434
    %1468 = vmatpush.msra.mxu0 %v1432
    %1469 = vmatmul.f32.gmra.mxu0 %v1448
    %v1470 = vpop.f32.mrf.mxu0
    %v1471 = vadd.f32 0.0, %v1470
    %1472 = vmatmul.f32.gmra.mxu0 %v1451
    %v1473 = vpop.f32.mrf.mxu0
    %v1474 = vadd.f32 0.0, %v1473
    %1475 = vdwg.mxu0
    %1476 = vmatpush.msra.mxu0 0.0
    %1477 = vmatpush.msra.mxu0 0.0
    %1478 = vmatpush.msra.mxu0 0.0
    %1479 = vmatpush.msra.mxu0 0.0
    %1480 = vmatpush.msra.mxu0 0.0
    %1481 = vmatpush.msra.mxu0 0.0
    %1482 = vmatpush.msra.mxu0 0.0
    %1483 = vmatpush.msra.mxu0 0.0
    %1484 = vmatpush.msra.mxu0 0.0
    %1485 = vmatpush.msra.mxu0 0.0
    %1486 = vmatpush.msra.mxu0 0.0
    %1487 = vmatpush.msra.mxu0 0.0
    %1488 = vmatpush.msra.mxu0 0.0
    %1489 = vmatpush.msra.mxu0 %v1437
    %1490 = vmatpush.msra.mxu0 %v1435
    %1491 = vmatpush.msra.mxu0 %v1433
    %1492 = vmatmul.f32.gmra.mxu0 %v1448
    %v1493 = vpop.f32.mrf.mxu0
    %v1494 = vadd.f32 0.0, %v1493
    %1495 = vmatmul.f32.gmra.mxu0 %v1451
    %v1496 = vpop.f32.mrf.mxu0
    %v1497 = vadd.f32 0.0, %v1496
    %1498 = vdwg.mxu0
    %1499 = vmatpush.msra.mxu0 0.0
    %1500 = vmatpush.msra.mxu0 0.0
    %1501 = vmatpush.msra.mxu0 0.0
    %1502 = vmatpush.msra.mxu0 0.0
    %1503 = vmatpush.msra.mxu0 0.0
    %1504 = vmatpush.msra.mxu0 0.0
    %1505 = vmatpush.msra.mxu0 0.0
    %1506 = vmatpush.msra.mxu0 0.0
    %1507 = vmatpush.msra.mxu0 0.0
    %1508 = vmatpush.msra.mxu0 0.0
    %1509 = vmatpush.msra.mxu0 0.0
    %1510 = vmatpush.msra.mxu0 0.0
    %1511 = vmatpush.msra.mxu0 0.0
    %1512 = vmatpush.msra.mxu0 %v1431
    %1513 = vmatpush.msra.mxu0 %v1425
    %1514 = vmatpush.msra.mxu0 %v1419
    %1515 = vmatmul.f32.gmra.mxu0 %v1448
    %v1516 = vpop.f32.mrf.mxu0
    %v1517 = vadd.f32 0.0, %v1516
    %1518 = vmatmul.f32.gmra.mxu0 %v1451
    %v1519 = vpop.f32.mrf.mxu0
    %v1520 = vadd.f32 0.0, %v1519
    %1521 = vdwg.mxu0
    %v1523 = vsel %vm262, %v1410, 0
    %v1526 = vsel %vm262, %v1411, 0
    %1528 = vmatpush.msra.mxu0 0.0
    %1529 = vmatpush.msra.mxu0 0.0
    %1530 = vmatpush.msra.mxu0 0.0
    %1531 = vmatpush.msra.mxu0 0.0
    %1532 = vmatpush.msra.mxu0 0.0
    %1533 = vmatpush.msra.mxu0 0.0
    %1534 = vmatpush.msra.mxu0 0.0
    %1535 = vmatpush.msra.mxu0 0.0
    %1536 = vmatpush.msra.mxu0 0.0
    %1537 = vmatpush.msra.mxu0 0.0
    %1538 = vmatpush.msra.mxu0 0.0
    %1539 = vmatpush.msra.mxu0 0.0
    %1540 = vmatpush.msra.mxu0 0.0
    %1541 = vmatpush.msra.mxu0 %v1405
    %1542 = vmatpush.msra.mxu0 %v1394
    %1543 = vmatpush.msra.mxu0 %v1382
    %1544 = vmatmul.f32.gmra.mxu0 %v1523
    %v1545 = vpop.f32.mrf.mxu0
    %v1546 = vadd.f32 %v1471, %v1545
    %1547 = vmatmul.f32.gmra.mxu0 %v1526
    %v1548 = vpop.f32.mrf.mxu0
    %v1549 = vadd.f32 %v1474, %v1548
    %1550 = vdwg.mxu0
    %1551 = vmatpush.msra.mxu0 0.0
    %1552 = vmatpush.msra.mxu0 0.0
    %1553 = vmatpush.msra.mxu0 0.0
    %1554 = vmatpush.msra.mxu0 0.0
    %1555 = vmatpush.msra.mxu0 0.0
    %1556 = vmatpush.msra.mxu0 0.0
    %1557 = vmatpush.msra.mxu0 0.0
    %1558 = vmatpush.msra.mxu0 0.0
    %1559 = vmatpush.msra.mxu0 0.0
    %1560 = vmatpush.msra.mxu0 0.0
    %1561 = vmatpush.msra.mxu0 0.0
    %1562 = vmatpush.msra.mxu0 0.0
    %1563 = vmatpush.msra.mxu0 0.0
    %1564 = vmatpush.msra.mxu0 %v1406
    %1565 = vmatpush.msra.mxu0 %v1395
    %1566 = vmatpush.msra.mxu0 %v1383
    %1567 = vmatmul.f32.gmra.mxu0 %v1523
    %v1568 = vpop.f32.mrf.mxu0
    %v1569 = vadd.f32 %v1494, %v1568
    %1570 = vmatmul.f32.gmra.mxu0 %v1526
    %v1571 = vpop.f32.mrf.mxu0
    %v1572 = vadd.f32 %v1497, %v1571
    %1573 = vdwg.mxu0
    %1574 = vmatpush.msra.mxu0 0.0
    %1575 = vmatpush.msra.mxu0 0.0
    %1576 = vmatpush.msra.mxu0 0.0
    %1577 = vmatpush.msra.mxu0 0.0
    %1578 = vmatpush.msra.mxu0 0.0
    %1579 = vmatpush.msra.mxu0 0.0
    %1580 = vmatpush.msra.mxu0 0.0
    %1581 = vmatpush.msra.mxu0 0.0
    %1582 = vmatpush.msra.mxu0 0.0
    %1583 = vmatpush.msra.mxu0 0.0
    %1584 = vmatpush.msra.mxu0 0.0
    %1585 = vmatpush.msra.mxu0 0.0
    %1586 = vmatpush.msra.mxu0 0.0
    %1587 = vmatpush.msra.mxu0 %v1404
    %1588 = vmatpush.msra.mxu0 %v1393
    %1589 = vmatpush.msra.mxu0 %v1384
    %1590 = vmatmul.f32.gmra.mxu0 %v1523
    %v1591 = vpop.f32.mrf.mxu0
    %v1592 = vadd.f32 %v1517, %v1591
    %1593 = vmatmul.f32.gmra.mxu0 %v1526
    %v1594 = vpop.f32.mrf.mxu0
    %v1595 = vadd.f32 %v1520, %v1594
    %1596 = vdwg.mxu0
    %v1597 = vld [vmem:[#allocation2] sm:$0xff]
    %v1598 = vld [vmem:[#allocation2 + $0x8] sm:$0xff]
    %v1599 = vld [vmem:[#allocation2 + $0x10] sm:$0xff]
    %v1600 = vld [vmem:[#allocation2 + $0x18] sm:$0xff]
    %1605 = vrot.lane.b32.xlu0 %v1597, 126
    %v1606 = vpop.permute.xlu0 %1605
    %1607 = vrot.lane.b32.xlu0 %v1598, 126
    %v1608 = vpop.permute.xlu0 %1607
    %1609 = vrot.lane.b32.xlu0 %v1599, 126
    %v1610 = vpop.permute.xlu0 %1609
    %1611 = vrot.lane.b32.xlu0 %v1600, 126
    %v1612 = vpop.permute.xlu0 %1611
    %v1613 = vsel %vm205, %v1606, %v1608
    %v1614 = vsel %vm205, %v1608, %v1610
    %v1615 = vsel %vm205, %v1610, %v1612
    %1616 = vrot.lane.b32.xlu0 %v1597, 124
    %v1617 = vpop.permute.xlu0 %1616
    %1618 = vrot.lane.b32.xlu0 %v1598, 124
    %v1619 = vpop.permute.xlu0 %1618
    %1620 = vrot.lane.b32.xlu0 %v1599, 124
    %v1621 = vpop.permute.xlu0 %1620
    %1622 = vrot.lane.b32.xlu0 %v1600, 124
    %v1623 = vpop.permute.xlu0 %1622
    %v1624 = vsel %vm217, %v1617, %v1619
    %v1625 = vsel %vm217, %v1619, %v1621
    %v1626 = vsel %vm217, %v1621, %v1623
    %v1627 = vld [vmem:[%s443] sm:$0xff]
    %v1628 = vld [vmem:[%s443 + $0x8] sm:$0xff]
    %1629 = vrot.lane.b32.xlu0 %v1597, 48
    %v1630 = vpop.permute.xlu0 %1629
    %1631 = vrot.lane.b32.xlu0 %v1598, 48
    %v1632 = vpop.permute.xlu0 %1631
    %1633 = vrot.lane.b32.xlu0 %v1599, 48
    %v1634 = vpop.permute.xlu0 %1633
    %1635 = vrot.lane.b32.xlu0 %v1600, 48
    %v1636 = vpop.permute.xlu0 %1635
    %1637 = vrot.lane.b32.xlu0 %v1613, 48
    %v1638 = vpop.permute.xlu0 %1637
    %1639 = vrot.lane.b32.xlu0 %v1614, 48
    %v1640 = vpop.permute.xlu0 %1639
    %1641 = vrot.lane.b32.xlu0 %v1615, 48
    %v1642 = vpop.permute.xlu0 %1641
    %1643 = vrot.lane.b32.xlu0 %v1612, 48
    %v1644 = vpop.permute.xlu0 %1643
    %1645 = vrot.lane.b32.xlu0 %v1624, 48
    %v1646 = vpop.permute.xlu0 %1645
    %1647 = vrot.lane.b32.xlu0 %v1625, 48
    %v1648 = vpop.permute.xlu0 %1647
    %1649 = vrot.lane.b32.xlu0 %v1626, 48
    %v1650 = vpop.permute.xlu0 %1649
    %1651 = vrot.lane.b32.xlu0 %v1623, 48
    %v1652 = vpop.permute.xlu0 %1651
    %v1653 = vsel %vm470, %v1630, %v1632
    %v1654 = vsel %vm470, %v1632, %v1634
    %v1655 = vsel %vm470, %v1634, %v1636
    %v1656 = vsel %vm470, %v1638, %v1640
    %v1657 = vsel %vm470, %v1640, %v1642
    %v1658 = vsel %vm470, %v1642, %v1644
    %v1659 = vsel %vm470, %v1646, %v1648
    %v1660 = vsel %vm470, %v1648, %v1650
    %v1661 = vsel %vm470, %v1650, %v1652
    %v1672 = vsel %vm262, %v1627, 0
    %v1675 = vsel %vm262, %v1628, 0
    %1677 = vmatpush.msra.mxu0 0.0
    %1678 = vmatpush.msra.mxu0 0.0
    %1679 = vmatpush.msra.mxu0 0.0
    %1680 = vmatpush.msra.mxu0 0.0
    %1681 = vmatpush.msra.mxu0 0.0
    %1682 = vmatpush.msra.mxu0 0.0
    %1683 = vmatpush.msra.mxu0 0.0
    %1684 = vmatpush.msra.mxu0 0.0
    %1685 = vmatpush.msra.mxu0 0.0
    %1686 = vmatpush.msra.mxu0 0.0
    %1687 = vmatpush.msra.mxu0 0.0
    %1688 = vmatpush.msra.mxu0 0.0
    %1689 = vmatpush.msra.mxu0 0.0
    %1690 = vmatpush.msra.mxu0 %v1659
    %1691 = vmatpush.msra.mxu0 %v1656
    %1692 = vmatpush.msra.mxu0 %v1653
    %1693 = vmatmul.f32.gmra.mxu0 %v1672
    %v1694 = vpop.f32.mrf.mxu0
    %v1695 = vadd.f32 0.0, %v1694
    %1696 = vmatmul.f32.gmra.mxu0 %v1675
    %v1697 = vpop.f32.mrf.mxu0
    %v1698 = vadd.f32 0.0, %v1697
    %1699 = vdwg.mxu0
    %1700 = vmatpush.msra.mxu0 0.0
    %1701 = vmatpush.msra.mxu0 0.0
    %1702 = vmatpush.msra.mxu0 0.0
    %1703 = vmatpush.msra.mxu0 0.0
    %1704 = vmatpush.msra.mxu0 0.0
    %1705 = vmatpush.msra.mxu0 0.0
    %1706 = vmatpush.msra.mxu0 0.0
    %1707 = vmatpush.msra.mxu0 0.0
    %1708 = vmatpush.msra.mxu0 0.0
    %1709 = vmatpush.msra.mxu0 0.0
    %1710 = vmatpush.msra.mxu0 0.0
    %1711 = vmatpush.msra.mxu0 0.0
    %1712 = vmatpush.msra.mxu0 0.0
    %1713 = vmatpush.msra.mxu0 %v1660
    %1714 = vmatpush.msra.mxu0 %v1657
    %1715 = vmatpush.msra.mxu0 %v1654
    %1716 = vmatmul.f32.gmra.mxu0 %v1672
    %v1717 = vpop.f32.mrf.mxu0
    %v1718 = vadd.f32 0.0, %v1717
    %1719 = vmatmul.f32.gmra.mxu0 %v1675
    %v1720 = vpop.f32.mrf.mxu0
    %v1721 = vadd.f32 0.0, %v1720
    %1722 = vdwg.mxu0
    %1723 = vmatpush.msra.mxu0 0.0
    %1724 = vmatpush.msra.mxu0 0.0
    %1725 = vmatpush.msra.mxu0 0.0
    %1726 = vmatpush.msra.mxu0 0.0
    %1727 = vmatpush.msra.mxu0 0.0
    %1728 = vmatpush.msra.mxu0 0.0
    %1729 = vmatpush.msra.mxu0 0.0
    %1730 = vmatpush.msra.mxu0 0.0
    %1731 = vmatpush.msra.mxu0 0.0
    %1732 = vmatpush.msra.mxu0 0.0
    %1733 = vmatpush.msra.mxu0 0.0
    %1734 = vmatpush.msra.mxu0 0.0
    %1735 = vmatpush.msra.mxu0 0.0
    %1736 = vmatpush.msra.mxu0 %v1661
    %1737 = vmatpush.msra.mxu0 %v1658
    %1738 = vmatpush.msra.mxu0 %v1655
    %1739 = vmatmul.f32.gmra.mxu0 %v1672
    %v1740 = vpop.f32.mrf.mxu0
    %v1741 = vadd.f32 0.0, %v1740
    %1742 = vmatmul.f32.gmra.mxu0 %v1675
    %v1743 = vpop.f32.mrf.mxu0
    %v1744 = vadd.f32 0.0, %v1743
    %1745 = vdwg.mxu0
    %v1746 = vadd.f32 %v1546, %v1695
    %v1747 = vadd.f32 %v1569, %v1718
    %v1748 = vadd.f32 %v1592, %v1741
    %v1749 = vadd.f32 %v1549, %v1698
    %v1750 = vadd.f32 %v1572, %v1721
    %v1751 = vadd.f32 %v1595, %v1744
    %v1752 = vadd.f32 %v1746, %v573
    %v1753 = vadd.f32 %v1747, %v573
    %v1754 = vadd.f32 %v1748, %v573
    %v1755 = vadd.f32 %v1749, %v578
    %v1756 = vadd.f32 %v1750, %v578
    %v1757 = vadd.f32 %v1751, %v578
    %v1758 = vmax.f32 %v1752, 0.0
    %v1759 = vmax.f32 %v1753, 0.0
    %v1760 = vmax.f32 %v1754, 0.0
    %v1761 = vmax.f32 %v1755, 0.0
    %v1762 = vmax.f32 %v1756, 0.0
    %v1763 = vmax.f32 %v1757, 0.0
    %v1764 = vmul.f32 %v1758, %v593
    %v1765 = vmul.f32 %v1759, %v594
    %v1766 = vmul.f32 %v1760, %v595
    %v1767 = vmul.f32 %v1761, %v593
    %v1768 = vmul.f32 %v1762, %v594
    %v1769 = vmul.f32 %v1763, %v595
    %1776 = vrot.lane.b32.xlu0 %v1764, 42
    %v1777 = vpop.permute.xlu0 %1776
    %1778 = vrot.lane.b32.xlu0 %v1765, 42
    %v1779 = vpop.permute.xlu0 %1778
    %1780 = vrot.lane.b32.xlu0 %v1766, 42
    %v1781 = vpop.permute.xlu0 %1780
    %1782 = vrot.lane.b32.xlu0 %v1767, 42
    %v1783 = vpop.permute.xlu0 %1782
    %1784 = vrot.lane.b32.xlu0 %v1768, 42
    %v1785 = vpop.permute.xlu0 %1784
    %1786 = vrot.lane.b32.xlu0 %v1769, 42
    %v1787 = vpop.permute.xlu0 %1786
    %v1788 = vsel %vm69, %v1777, %v1779
    %v1789 = vsel %vm69, %v1779, %v1781
    %v1790 = vsel %vm69, %v1783, %v1785
    %v1791 = vsel %vm69, %v1785, %v1787
    %1798 = vst.msk [vmem:[#allocation3] sm:$0xff] %vm633, %v1777
    %1799 = vst [vmem:[#allocation3 + $0x8] sm:$0xff] %v1788
    %1800 = vst.msk [vmem:[#allocation3 + $0x10] sm:$0xff] %vm636, %v1789
    %1801 = vst.msk [vmem:[#allocation3 + $0x20] sm:$0xff] %vm633, %v1783
    %1802 = vst [vmem:[#allocation3 + $0x28] sm:$0xff] %v1790
    %1803 = vst.msk [vmem:[#allocation3 + $0x30] sm:$0xff] %vm636, %v1791
    %v1804 = vld [vmem:[#allocation3] sm:$0xff]
    %v1805 = vld [vmem:[#allocation3 + $0x8] sm:$0xff]
    %v1806 = vld [vmem:[#allocation3 + $0x10] sm:$0xff]
    %v1807 = vld [vmem:[#allocation3 + $0x20] sm:$0xff]
    %v1808 = vld [vmem:[#allocation3 + $0x28] sm:$0xff]
    %v1809 = vld [vmem:[#allocation3 + $0x30] sm:$0xff]
    %1816 = vrot.lane.b32.xlu0 %v1804, 126
    %v1817 = vpop.permute.xlu0 %1816
    %1818 = vrot.lane.b32.xlu0 %v1805, 126
    %v1819 = vpop.permute.xlu0 %1818
    %1820 = vrot.lane.b32.xlu0 %v1806, 126
    %v1821 = vpop.permute.xlu0 %1820
    %1822 = vrot.lane.b32.xlu0 %v1807, 126
    %v1823 = vpop.permute.xlu0 %1822
    %1824 = vrot.lane.b32.xlu0 %v1808, 126
    %v1825 = vpop.permute.xlu0 %1824
    %1826 = vrot.lane.b32.xlu0 %v1809, 126
    %v1827 = vpop.permute.xlu0 %1826
    %v1828 = vsel %vm205, %v1817, %v1819
    %v1829 = vsel %vm205, %v1819, %v1821
    %v1830 = vsel %vm205, %v1823, %v1825
    %v1831 = vsel %vm205, %v1825, %v1827
    %1838 = vrot.lane.b32.xlu0 %v1804, 124
    %v1839 = vpop.permute.xlu0 %1838
    %1840 = vrot.lane.b32.xlu0 %v1805, 124
    %v1841 = vpop.permute.xlu0 %1840
    %1842 = vrot.lane.b32.xlu0 %v1806, 124
    %v1843 = vpop.permute.xlu0 %1842
    %1844 = vrot.lane.b32.xlu0 %v1807, 124
    %v1845 = vpop.permute.xlu0 %1844
    %1846 = vrot.lane.b32.xlu0 %v1808, 124
    %v1847 = vpop.permute.xlu0 %1846
    %1848 = vrot.lane.b32.xlu0 %v1809, 124
    %v1849 = vpop.permute.xlu0 %1848
    %v1850 = vsel %vm217, %v1839, %v1841
    %v1851 = vsel %vm217, %v1841, %v1843
    %v1852 = vsel %vm217, %v1845, %v1847
    %v1853 = vsel %vm217, %v1847, %v1849
    %v1860 = vld [vmem:[#allocation7] sm:$0xff]
    %v1861 = vld [vmem:[#allocation7 + $0x8] sm:$0xff]
    %v1862 = vld [vmem:[%s699] sm:$0xff]
    %v1863 = vld [vmem:[%s699 + $0x8] sm:$0xff]
    %1864 = vrot.lane.b32.xlu0 %v1804, 88
    %v1865 = vpop.permute.xlu0 %1864
    %1866 = vrot.lane.b32.xlu0 %v1805, 88
    %v1867 = vpop.permute.xlu0 %1866
    %1868 = vrot.lane.b32.xlu0 %v1806, 88
    %v1869 = vpop.permute.xlu0 %1868
    %1870 = vrot.lane.b32.xlu0 %v1807, 88
    %v1871 = vpop.permute.xlu0 %1870
    %1872 = vrot.lane.b32.xlu0 %v1808, 88
    %v1873 = vpop.permute.xlu0 %1872
    %1874 = vrot.lane.b32.xlu0 %v1809, 88
    %v1875 = vpop.permute.xlu0 %1874
    %1876 = vrot.lane.b32.xlu0 %v1828, 88
    %v1877 = vpop.permute.xlu0 %1876
    %1878 = vrot.lane.b32.xlu0 %v1829, 88
    %v1879 = vpop.permute.xlu0 %1878
    %1880 = vrot.lane.b32.xlu0 %v1821, 88
    %v1881 = vpop.permute.xlu0 %1880
    %1882 = vrot.lane.b32.xlu0 %v1830, 88
    %v1883 = vpop.permute.xlu0 %1882
    %1884 = vrot.lane.b32.xlu0 %v1831, 88
    %v1885 = vpop.permute.xlu0 %1884
    %1886 = vrot.lane.b32.xlu0 %v1827, 88
    %v1887 = vpop.permute.xlu0 %1886
    %1888 = vrot.lane.b32.xlu0 %v1850, 88
    %v1889 = vpop.permute.xlu0 %1888
    %1890 = vrot.lane.b32.xlu0 %v1851, 88
    %v1891 = vpop.permute.xlu0 %1890
    %1892 = vrot.lane.b32.xlu0 %v1843, 88
    %v1893 = vpop.permute.xlu0 %1892
    %1894 = vrot.lane.b32.xlu0 %v1852, 88
    %v1895 = vpop.permute.xlu0 %1894
    %1896 = vrot.lane.b32.xlu0 %v1853, 88
    %v1897 = vpop.permute.xlu0 %1896
    %1898 = vrot.lane.b32.xlu0 %v1849, 88
    %v1899 = vpop.permute.xlu0 %1898
    %v1900 = vsel %vm246, %v1865, %v1867
    %v1901 = vsel %vm246, %v1867, %v1869
    %v1902 = vsel %vm246, %v1871, %v1873
    %v1903 = vsel %vm246, %v1873, %v1875
    %v1904 = vsel %vm246, %v1877, %v1879
    %v1905 = vsel %vm246, %v1879, %v1881
    %v1906 = vsel %vm246, %v1883, %v1885
    %v1907 = vsel %vm246, %v1885, %v1887
    %v1908 = vsel %vm246, %v1889, %v1891
    %v1909 = vsel %vm246, %v1891, %v1893
    %v1910 = vsel %vm246, %v1895, %v1897
    %v1911 = vsel %vm246, %v1897, %v1899
    %v1931 = vsel %vm470, %v1862, 0
    %v1934 = vsel %vm470, %v1863, 0
    %1936 = vmatpush.msra.mxu0 0.0
    %1937 = vmatpush.msra.mxu0 0.0
    %1938 = vmatpush.msra.mxu0 0.0
    %1939 = vmatpush.msra.mxu0 0.0
    %1940 = vmatpush.msra.mxu0 0.0
    %1941 = vmatpush.msra.mxu0 0.0
    %1942 = vmatpush.msra.mxu0 0.0
    %1943 = vmatpush.msra.mxu0 0.0
    %1944 = vmatpush.msra.mxu0 0.0
    %1945 = vmatpush.msra.mxu0 0.0
    %1946 = vmatpush.msra.mxu0 %v1910
    %1947 = vmatpush.msra.mxu0 %v1908
    %1948 = vmatpush.msra.mxu0 %v1906
    %1949 = vmatpush.msra.mxu0 %v1904
    %1950 = vmatpush.msra.mxu0 %v1902
    %1951 = vmatpush.msra.mxu0 %v1900
    %1952 = vmatmul.f32.gmra.mxu0 %v1931
    %v1953 = vpop.f32.mrf.mxu0
    %v1954 = vadd.f32 0.0, %v1953
    %1955 = vmatmul.f32.gmra.mxu0 %v1934
    %v1956 = vpop.f32.mrf.mxu0
    %v1957 = vadd.f32 0.0, %v1956
    %1958 = vdwg.mxu0
    %1959 = vmatpush.msra.mxu0 0.0
    %1960 = vmatpush.msra.mxu0 0.0
    %1961 = vmatpush.msra.mxu0 0.0
    %1962 = vmatpush.msra.mxu0 0.0
    %1963 = vmatpush.msra.mxu0 0.0
    %1964 = vmatpush.msra.mxu0 0.0
    %1965 = vmatpush.msra.mxu0 0.0
    %1966 = vmatpush.msra.mxu0 0.0
    %1967 = vmatpush.msra.mxu0 0.0
    %1968 = vmatpush.msra.mxu0 0.0
    %1969 = vmatpush.msra.mxu0 %v1911
    %1970 = vmatpush.msra.mxu0 %v1909
    %1971 = vmatpush.msra.mxu0 %v1907
    %1972 = vmatpush.msra.mxu0 %v1905
    %1973 = vmatpush.msra.mxu0 %v1903
    %1974 = vmatpush.msra.mxu0 %v1901
    %1975 = vmatmul.f32.gmra.mxu0 %v1931
    %v1976 = vpop.f32.mrf.mxu0
    %v1977 = vadd.f32 0.0, %v1976
    %1978 = vmatmul.f32.gmra.mxu0 %v1934
    %v1979 = vpop.f32.mrf.mxu0
    %v1980 = vadd.f32 0.0, %v1979
    %1981 = vdwg.mxu0
    %1982 = vmatpush.msra.mxu0 0.0
    %1983 = vmatpush.msra.mxu0 0.0
    %1984 = vmatpush.msra.mxu0 0.0
    %1985 = vmatpush.msra.mxu0 0.0
    %1986 = vmatpush.msra.mxu0 0.0
    %1987 = vmatpush.msra.mxu0 0.0
    %1988 = vmatpush.msra.mxu0 0.0
    %1989 = vmatpush.msra.mxu0 0.0
    %1990 = vmatpush.msra.mxu0 0.0
    %1991 = vmatpush.msra.mxu0 0.0
    %1992 = vmatpush.msra.mxu0 %v1899
    %1993 = vmatpush.msra.mxu0 %v1893
    %1994 = vmatpush.msra.mxu0 %v1887
    %1995 = vmatpush.msra.mxu0 %v1881
    %1996 = vmatpush.msra.mxu0 %v1875
    %1997 = vmatpush.msra.mxu0 %v1869
    %1998 = vmatmul.f32.gmra.mxu0 %v1931
    %v1999 = vpop.f32.mrf.mxu0
    %v2000 = vadd.f32 0.0, %v1999
    %2001 = vmatmul.f32.gmra.mxu0 %v1934
    %v2002 = vpop.f32.mrf.mxu0
    %v2003 = vadd.f32 0.0, %v2002
    %2004 = vdwg.mxu0
    %v2006 = vsel %vm470, %v1860, 0
    %v2009 = vsel %vm470, %v1861, 0
    %2011 = vmatpush.msra.mxu0 0.0
    %2012 = vmatpush.msra.mxu0 0.0
    %2013 = vmatpush.msra.mxu0 0.0
    %2014 = vmatpush.msra.mxu0 0.0
    %2015 = vmatpush.msra.mxu0 0.0
    %2016 = vmatpush.msra.mxu0 0.0
    %2017 = vmatpush.msra.mxu0 0.0
    %2018 = vmatpush.msra.mxu0 0.0
    %2019 = vmatpush.msra.mxu0 0.0
    %2020 = vmatpush.msra.mxu0 0.0
    %2021 = vmatpush.msra.mxu0 %v1852
    %2022 = vmatpush.msra.mxu0 %v1850
    %2023 = vmatpush.msra.mxu0 %v1830
    %2024 = vmatpush.msra.mxu0 %v1828
    %2025 = vmatpush.msra.mxu0 %v1807
    %2026 = vmatpush.msra.mxu0 %v1804
    %2027 = vmatmul.f32.gmra.mxu0 %v2006
    %v2028 = vpop.f32.mrf.mxu0
    %v2029 = vadd.f32 %v1954, %v2028
    %2030 = vmatmul.f32.gmra.mxu0 %v2009
    %v2031 = vpop.f32.mrf.mxu0
    %v2032 = vadd.f32 %v1957, %v2031
    %2033 = vdwg.mxu0
    %2034 = vmatpush.msra.mxu0 0.0
    %2035 = vmatpush.msra.mxu0 0.0
    %2036 = vmatpush.msra.mxu0 0.0
    %2037 = vmatpush.msra.mxu0 0.0
    %2038 = vmatpush.msra.mxu0 0.0
    %2039 = vmatpush.msra.mxu0 0.0
    %2040 = vmatpush.msra.mxu0 0.0
    %2041 = vmatpush.msra.mxu0 0.0
    %2042 = vmatpush.msra.mxu0 0.0
    %2043 = vmatpush.msra.mxu0 0.0
    %2044 = vmatpush.msra.mxu0 %v1853
    %2045 = vmatpush.msra.mxu0 %v1851
    %2046 = vmatpush.msra.mxu0 %v1831
    %2047 = vmatpush.msra.mxu0 %v1829
    %2048 = vmatpush.msra.mxu0 %v1808
    %2049 = vmatpush.msra.mxu0 %v1805
    %2050 = vmatmul.f32.gmra.mxu0 %v2006
    %v2051 = vpop.f32.mrf.mxu0
    %v2052 = vadd.f32 %v1977, %v2051
    %2053 = vmatmul.f32.gmra.mxu0 %v2009
    %v2054 = vpop.f32.mrf.mxu0
    %v2055 = vadd.f32 %v1980, %v2054
    %2056 = vdwg.mxu0
    %2057 = vmatpush.msra.mxu0 0.0
    %2058 = vmatpush.msra.mxu0 0.0
    %2059 = vmatpush.msra.mxu0 0.0
    %2060 = vmatpush.msra.mxu0 0.0
    %2061 = vmatpush.msra.mxu0 0.0
    %2062 = vmatpush.msra.mxu0 0.0
    %2063 = vmatpush.msra.mxu0 0.0
    %2064 = vmatpush.msra.mxu0 0.0
    %2065 = vmatpush.msra.mxu0 0.0
    %2066 = vmatpush.msra.mxu0 0.0
    %2067 = vmatpush.msra.mxu0 %v1849
    %2068 = vmatpush.msra.mxu0 %v1843
    %2069 = vmatpush.msra.mxu0 %v1827
    %2070 = vmatpush.msra.mxu0 %v1821
    %2071 = vmatpush.msra.mxu0 %v1809
    %2072 = vmatpush.msra.mxu0 %v1806
    %2073 = vmatmul.f32.gmra.mxu0 %v2006
    %v2074 = vpop.f32.mrf.mxu0
    %v2075 = vadd.f32 %v2000, %v2074
    %2076 = vmatmul.f32.gmra.mxu0 %v2009
    %v2077 = vpop.f32.mrf.mxu0
    %v2078 = vadd.f32 %v2003, %v2077
    %2079 = vdwg.mxu0
    %v2080 = vld [vmem:[#allocation3] sm:$0xff]
    %v2081 = vld [vmem:[#allocation3 + $0x8] sm:$0xff]
    %v2082 = vld [vmem:[#allocation3 + $0x10] sm:$0xff]
    %v2083 = vld [vmem:[#allocation3 + $0x18] sm:$0xff]
    %v2084 = vld [vmem:[#allocation3 + $0x20] sm:$0xff]
    %v2085 = vld [vmem:[#allocation3 + $0x28] sm:$0xff]
    %v2086 = vld [vmem:[#allocation3 + $0x30] sm:$0xff]
    %v2087 = vld [vmem:[#allocation3 + $0x38] sm:$0xff]
    %2096 = vrot.lane.b32.xlu0 %v2080, 126
    %v2097 = vpop.permute.xlu0 %2096
    %2098 = vrot.lane.b32.xlu0 %v2081, 126
    %v2099 = vpop.permute.xlu0 %2098
    %2100 = vrot.lane.b32.xlu0 %v2082, 126
    %v2101 = vpop.permute.xlu0 %2100
    %2102 = vrot.lane.b32.xlu0 %v2083, 126
    %v2103 = vpop.permute.xlu0 %2102
    %2104 = vrot.lane.b32.xlu0 %v2084, 126
    %v2105 = vpop.permute.xlu0 %2104
    %2106 = vrot.lane.b32.xlu0 %v2085, 126
    %v2107 = vpop.permute.xlu0 %2106
    %2108 = vrot.lane.b32.xlu0 %v2086, 126
    %v2109 = vpop.permute.xlu0 %2108
    %2110 = vrot.lane.b32.xlu0 %v2087, 126
    %v2111 = vpop.permute.xlu0 %2110
    %v2112 = vsel %vm205, %v2097, %v2099
    %v2113 = vsel %vm205, %v2099, %v2101
    %v2114 = vsel %vm205, %v2101, %v2103
    %v2115 = vsel %vm205, %v2105, %v2107
    %v2116 = vsel %vm205, %v2107, %v2109
    %v2117 = vsel %vm205, %v2109, %v2111
    %2118 = vrot.lane.b32.xlu0 %v2080, 124
    %v2119 = vpop.permute.xlu0 %2118
    %2120 = vrot.lane.b32.xlu0 %v2081, 124
    %v2121 = vpop.permute.xlu0 %2120
    %2122 = vrot.lane.b32.xlu0 %v2082, 124
    %v2123 = vpop.permute.xlu0 %2122
    %2124 = vrot.lane.b32.xlu0 %v2083, 124
    %v2125 = vpop.permute.xlu0 %2124
    %2126 = vrot.lane.b32.xlu0 %v2084, 124
    %v2127 = vpop.permute.xlu0 %2126
    %2128 = vrot.lane.b32.xlu0 %v2085, 124
    %v2129 = vpop.permute.xlu0 %2128
    %2130 = vrot.lane.b32.xlu0 %v2086, 124
    %v2131 = vpop.permute.xlu0 %2130
    %2132 = vrot.lane.b32.xlu0 %v2087, 124
    %v2133 = vpop.permute.xlu0 %2132
    %v2134 = vsel %vm217, %v2119, %v2121
    %v2135 = vsel %vm217, %v2121, %v2123
    %v2136 = vsel %vm217, %v2123, %v2125
    %v2137 = vsel %vm217, %v2127, %v2129
    %v2138 = vsel %vm217, %v2129, %v2131
    %v2139 = vsel %vm217, %v2131, %v2133
    %v2140 = vld [vmem:[%s978] sm:$0xff]
    %v2141 = vld [vmem:[%s978 + $0x8] sm:$0xff]
    %2142 = vrot.lane.b32.xlu0 %v2080, 48
    %v2143 = vpop.permute.xlu0 %2142
    %2144 = vrot.lane.b32.xlu0 %v2081, 48
    %v2145 = vpop.permute.xlu0 %2144
    %2146 = vrot.lane.b32.xlu0 %v2082, 48
    %v2147 = vpop.permute.xlu0 %2146
    %2148 = vrot.lane.b32.xlu0 %v2083, 48
    %v2149 = vpop.permute.xlu0 %2148
    %2150 = vrot.lane.b32.xlu0 %v2084, 48
    %v2151 = vpop.permute.xlu0 %2150
    %2152 = vrot.lane.b32.xlu0 %v2085, 48
    %v2153 = vpop.permute.xlu0 %2152
    %2154 = vrot.lane.b32.xlu0 %v2086, 48
    %v2155 = vpop.permute.xlu0 %2154
    %2156 = vrot.lane.b32.xlu0 %v2087, 48
    %v2157 = vpop.permute.xlu0 %2156
    %2158 = vrot.lane.b32.xlu0 %v2112, 48
    %v2159 = vpop.permute.xlu0 %2158
    %2160 = vrot.lane.b32.xlu0 %v2113, 48
    %v2161 = vpop.permute.xlu0 %2160
    %2162 = vrot.lane.b32.xlu0 %v2114, 48
    %v2163 = vpop.permute.xlu0 %2162
    %2164 = vrot.lane.b32.xlu0 %v2103, 48
    %v2165 = vpop.permute.xlu0 %2164
    %2166 = vrot.lane.b32.xlu0 %v2115, 48
    %v2167 = vpop.permute.xlu0 %2166
    %2168 = vrot.lane.b32.xlu0 %v2116, 48
    %v2169 = vpop.permute.xlu0 %2168
    %2170 = vrot.lane.b32.xlu0 %v2117, 48
    %v2171 = vpop.permute.xlu0 %2170
    %2172 = vrot.lane.b32.xlu0 %v2111, 48
    %v2173 = vpop.permute.xlu0 %2172
    %2174 = vrot.lane.b32.xlu0 %v2134, 48
    %v2175 = vpop.permute.xlu0 %2174
    %2176 = vrot.lane.b32.xlu0 %v2135, 48
    %v2177 = vpop.permute.xlu0 %2176
    %2178 = vrot.lane.b32.xlu0 %v2136, 48
    %v2179 = vpop.permute.xlu0 %2178
    %2180 = vrot.lane.b32.xlu0 %v2125, 48
    %v2181 = vpop.permute.xlu0 %2180
    %2182 = vrot.lane.b32.xlu0 %v2137, 48
    %v2183 = vpop.permute.xlu0 %2182
    %2184 = vrot.lane.b32.xlu0 %v2138, 48
    %v2185 = vpop.permute.xlu0 %2184
    %2186 = vrot.lane.b32.xlu0 %v2139, 48
    %v2187 = vpop.permute.xlu0 %2186
    %2188 = vrot.lane.b32.xlu0 %v2133, 48
    %v2189 = vpop.permute.xlu0 %2188
    %v2190 = vsel %vm470, %v2143, %v2145
    %v2191 = vsel %vm470, %v2145, %v2147
    %v2192 = vsel %vm470, %v2147, %v2149
    %v2193 = vsel %vm470, %v2151, %v2153
    %v2194 = vsel %vm470, %v2153, %v2155
    %v2195 = vsel %vm470, %v2155, %v2157
    %v2196 = vsel %vm470, %v2159, %v2161
    %v2197 = vsel %vm470, %v2161, %v2163
    %v2198 = vsel %vm470, %v2163, %v2165
    %v2199 = vsel %vm470, %v2167, %v2169
    %v2200 = vsel %vm470, %v2169, %v2171
    %v2201 = vsel %vm470, %v2171, %v2173
    %v2202 = vsel %vm470, %v2175, %v2177
    %v2203 = vsel %vm470, %v2177, %v2179
    %v2204 = vsel %vm470, %v2179, %v2181
    %v2205 = vsel %vm470, %v2183, %v2185
    %v2206 = vsel %vm470, %v2185, %v2187
    %v2207 = vsel %vm470, %v2187, %v2189
    %v2227 = vsel %vm470, %v2140, 0
    %v2230 = vsel %vm470, %v2141, 0
    %2232 = vmatpush.msra.mxu0 0.0
    %2233 = vmatpush.msra.mxu0 0.0
    %2234 = vmatpush.msra.mxu0 0.0
    %2235 = vmatpush.msra.mxu0 0.0
    %2236 = vmatpush.msra.mxu0 0.0
    %2237 = vmatpush.msra.mxu0 0.0
    %2238 = vmatpush.msra.mxu0 0.0
    %2239 = vmatpush.msra.mxu0 0.0
    %2240 = vmatpush.msra.mxu0 0.0
    %2241 = vmatpush.msra.mxu0 0.0
    %2242 = vmatpush.msra.mxu0 %v2205
    %2243 = vmatpush.msra.mxu0 %v2202
    %2244 = vmatpush.msra.mxu0 %v2199
    %2245 = vmatpush.msra.mxu0 %v2196
    %2246 = vmatpush.msra.mxu0 %v2193
    %2247 = vmatpush.msra.mxu0 %v2190
    %2248 = vmatmul.f32.gmra.mxu0 %v2227
    %v2249 = vpop.f32.mrf.mxu0
    %v2250 = vadd.f32 0.0, %v2249
    %2251 = vmatmul.f32.gmra.mxu0 %v2230
    %v2252 = vpop.f32.mrf.mxu0
    %v2253 = vadd.f32 0.0, %v2252
    %2254 = vdwg.mxu0
    %2255 = vmatpush.msra.mxu0 0.0
    %2256 = vmatpush.msra.mxu0 0.0
    %2257 = vmatpush.msra.mxu0 0.0
    %2258 = vmatpush.msra.mxu0 0.0
    %2259 = vmatpush.msra.mxu0 0.0
    %2260 = vmatpush.msra.mxu0 0.0
    %2261 = vmatpush.msra.mxu0 0.0
    %2262 = vmatpush.msra.mxu0 0.0
    %2263 = vmatpush.msra.mxu0 0.0
    %2264 = vmatpush.msra.mxu0 0.0
    %2265 = vmatpush.msra.mxu0 %v2206
    %2266 = vmatpush.msra.mxu0 %v2203
    %2267 = vmatpush.msra.mxu0 %v2200
    %2268 = vmatpush.msra.mxu0 %v2197
    %2269 = vmatpush.msra.mxu0 %v2194
    %2270 = vmatpush.msra.mxu0 %v2191
    %2271 = vmatmul.f32.gmra.mxu0 %v2227
    %v2272 = vpop.f32.mrf.mxu0
    %v2273 = vadd.f32 0.0, %v2272
    %2274 = vmatmul.f32.gmra.mxu0 %v2230
    %v2275 = vpop.f32.mrf.mxu0
    %v2276 = vadd.f32 0.0, %v2275
    %2277 = vdwg.mxu0
    %2278 = vmatpush.msra.mxu0 0.0
    %2279 = vmatpush.msra.mxu0 0.0
    %2280 = vmatpush.msra.mxu0 0.0
    %2281 = vmatpush.msra.mxu0 0.0
    %2282 = vmatpush.msra.mxu0 0.0
    %2283 = vmatpush.msra.mxu0 0.0
    %2284 = vmatpush.msra.mxu0 0.0
    %2285 = vmatpush.msra.mxu0 0.0
    %2286 = vmatpush.msra.mxu0 0.0
    %2287 = vmatpush.msra.mxu0 0.0
    %2288 = vmatpush.msra.mxu0 %v2207
    %2289 = vmatpush.msra.mxu0 %v2204
    %2290 = vmatpush.msra.mxu0 %v2201
    %2291 = vmatpush.msra.mxu0 %v2198
    %2292 = vmatpush.msra.mxu0 %v2195
    %2293 = vmatpush.msra.mxu0 %v2192
    %2294 = vmatmul.f32.gmra.mxu0 %v2227
    %v2295 = vpop.f32.mrf.mxu0
    %v2296 = vadd.f32 0.0, %v2295
    %2297 = vmatmul.f32.gmra.mxu0 %v2230
    %v2298 = vpop.f32.mrf.mxu0
    %v2299 = vadd.f32 0.0, %v2298
    %2300 = vdwg.mxu0
    %v2301 = vadd.f32 %v2029, %v2250
    %v2302 = vadd.f32 %v2052, %v2273
    %v2303 = vadd.f32 %v2075, %v2296
    %v2304 = vadd.f32 %v2032, %v2253
    %v2305 = vadd.f32 %v2055, %v2276
    %v2306 = vadd.f32 %v2078, %v2299
    %v2307 = vld [vmem:[#allocation2] sm:$0xff]
    %v2308 = vld [vmem:[#allocation2 + $0x8] sm:$0xff]
    %v2309 = vld [vmem:[#allocation2 + $0x10] sm:$0xff]
    %v2310 = vld [vmem:[%s4] sm:$0xff]
    %v2311 = vld [vmem:[%s4 + $0x8] sm:$0xff]
    %2315 = vrot.lane.b32.xlu0 %v2307, 86
    %v2316 = vpop.permute.xlu0 %2315
    %2317 = vrot.lane.b32.xlu0 %v2308, 86
    %v2318 = vpop.permute.xlu0 %2317
    %2319 = vrot.lane.b32.xlu0 %v2309, 86
    %v2320 = vpop.permute.xlu0 %2319
    %v2321 = vsel %vm1160, %v2316, %v2318
    %v2322 = vsel %vm1160, %v2318, %v2320
    %v2327 = vsel %vm1166, %v2310, 0
    %v2330 = vsel %vm1166, %v2311, 0
    %2332 = vmatpush.msra.mxu0 0.0
    %2333 = vmatpush.msra.mxu0 0.0
    %2334 = vmatpush.msra.mxu0 0.0
    %2335 = vmatpush.msra.mxu0 0.0
    %2336 = vmatpush.msra.mxu0 0.0
    %2337 = vmatpush.msra.mxu0 0.0
    %2338 = vmatpush.msra.mxu0 0.0
    %2339 = vmatpush.msra.mxu0 0.0
    %2340 = vmatpush.msra.mxu0 0.0
    %2341 = vmatpush.msra.mxu0 0.0
    %2342 = vmatpush.msra.mxu0 0.0
    %2343 = vmatpush.msra.mxu0 0.0
    %2344 = vmatpush.msra.mxu0 0.0
    %2345 = vmatpush.msra.mxu0 0.0
    %2346 = vmatpush.msra.mxu0 0.0
    %2347 = vmatpush.msra.mxu0 %v2321
    %2348 = vmatmul.f32.gmra.mxu0 %v2327
    %v2349 = vpop.f32.mrf.mxu0
    %v2350 = vadd.f32 0.0, %v2349
    %2351 = vmatmul.f32.gmra.mxu0 %v2330
    %v2352 = vpop.f32.mrf.mxu0
    %v2353 = vadd.f32 0.0, %v2352
    %2354 = vdwg.mxu0
    %2355 = vmatpush.msra.mxu0 0.0
    %2356 = vmatpush.msra.mxu0 0.0
    %2357 = vmatpush.msra.mxu0 0.0
    %2358 = vmatpush.msra.mxu0 0.0
    %2359 = vmatpush.msra.mxu0 0.0
    %2360 = vmatpush.msra.mxu0 0.0
    %2361 = vmatpush.msra.mxu0 0.0
    %2362 = vmatpush.msra.mxu0 0.0
    %2363 = vmatpush.msra.mxu0 0.0
    %2364 = vmatpush.msra.mxu0 0.0
    %2365 = vmatpush.msra.mxu0 0.0
    %2366 = vmatpush.msra.mxu0 0.0
    %2367 = vmatpush.msra.mxu0 0.0
    %2368 = vmatpush.msra.mxu0 0.0
    %2369 = vmatpush.msra.mxu0 0.0
    %2370 = vmatpush.msra.mxu0 %v2322
    %2371 = vmatmul.f32.gmra.mxu0 %v2327
    %v2372 = vpop.f32.mrf.mxu0
    %v2373 = vadd.f32 0.0, %v2372
    %2374 = vmatmul.f32.gmra.mxu0 %v2330
    %v2375 = vpop.f32.mrf.mxu0
    %v2376 = vadd.f32 0.0, %v2375
    %2377 = vdwg.mxu0
    %2378 = vmatpush.msra.mxu0 0.0
    %2379 = vmatpush.msra.mxu0 0.0
    %2380 = vmatpush.msra.mxu0 0.0
    %2381 = vmatpush.msra.mxu0 0.0
    %2382 = vmatpush.msra.mxu0 0.0
    %2383 = vmatpush.msra.mxu0 0.0
    %2384 = vmatpush.msra.mxu0 0.0
    %2385 = vmatpush.msra.mxu0 0.0
    %2386 = vmatpush.msra.mxu0 0.0
    %2387 = vmatpush.msra.mxu0 0.0
    %2388 = vmatpush.msra.mxu0 0.0
    %2389 = vmatpush.msra.mxu0 0.0
    %2390 = vmatpush.msra.mxu0 0.0
    %2391 = vmatpush.msra.mxu0 0.0
    %2392 = vmatpush.msra.mxu0 0.0
    %2393 = vmatpush.msra.mxu0 %v2320
    %2394 = vmatmul.f32.gmra.mxu0 %v2327
    %v2395 = vpop.f32.mrf.mxu0
    %v2396 = vadd.f32 0.0, %v2395
    %2397 = vmatmul.f32.gmra.mxu0 %v2330
    %v2398 = vpop.f32.mrf.mxu0
    %v2399 = vadd.f32 0.0, %v2398
    %2400 = vdwg.mxu0
    %v2401 = vadd.f32 %v2301, %v2350
    %v2402 = vadd.f32 %v2302, %v2373
    %v2403 = vadd.f32 %v2303, %v2396
    %v2404 = vadd.f32 %v2304, %v2353
    %v2405 = vadd.f32 %v2305, %v2376
    %v2406 = vadd.f32 %v2306, %v2399
    %v2407 = vadd.f32 %v2401, %v1251
    %v2408 = vadd.f32 %v2402, %v1251
    %v2409 = vadd.f32 %v2403, %v1251
    %v2410 = vadd.f32 %v2404, %v1256
    %v2411 = vadd.f32 %v2405, %v1256
    %v2412 = vadd.f32 %v2406, %v1256
    %v2413 = vmax.f32 %v2407, 0.0
    %v2414 = vmax.f32 %v2408, 0.0
    %v2415 = vmax.f32 %v2409, 0.0
    %v2416 = vmax.f32 %v2410, 0.0
    %v2417 = vmax.f32 %v2411, 0.0
    %v2418 = vmax.f32 %v2412, 0.0
    %v2419 = vmul.f32 %v2413, %v593
    %v2420 = vmul.f32 %v2414, %v594
    %v2421 = vmul.f32 %v2415, %v595
    %v2422 = vmul.f32 %v2416, %v593
    %v2423 = vmul.f32 %v2417, %v594
    %v2424 = vmul.f32 %v2418, %v595
    %s2425 = scalar_lea.vmem [#allocation9], 48
    %2426 = vst [vmem:[%s2425] sm:$0xff] %v2419
    %2427 = vst [vmem:[%s2425 + $0x8] sm:$0xff] %v2420
    %2428 = vst.msk [vmem:[%s2425 + $0x10] sm:$0xff] %vm1278, %v2421
    %2429 = vst [vmem:[%s2425 + $0x18] sm:$0xff] %v2422
    %2430 = vst [vmem:[%s2425 + $0x20] sm:$0xff] %v2423
    %2431 = vst.msk [vmem:[%s2425 + $0x28] sm:$0xff] %vm1278, %v2424
    // Predicated region
    $region38: #{tpu_custom_call.1} parent=1 // pred_check
      _
    $region39: #{tpu_custom_call.1} parent=1 // pred_check_branch
      %2433 = sbr.rel (0) target = $region41
    $region40: #{tpu_custom_call.1} parent=1 // pred_region
      %2435 = vsyncadd [#allocation6], 0
      %s2436 = sshll.u32 [#allocation9], 4
      %s2437 = int_to_ptr.vmem [resolvable:$true] %s2436
      %s2438 = sshll.u32 %s7, 4
      %s2439 = int_to_ptr.hbm [resolvable:$true] %s2438
      %2444 = dma.vmem_to_hbm [thread:$0]  %s2437, 1536, %s2439, [#allocation6], 384, 384, 24
    $region41: #{tpu_custom_call.1} parent=1 // pred_fallthru
      _
    // Predicated region
    $region42: #{tpu_custom_call.1} parent=1 // pred_check
      _
    $region43: #{tpu_custom_call.1} parent=1 // pred_check_branch
      %2446 = sbr.rel (0) target = $region45
    $region44: #{tpu_custom_call.1} parent=1 // pred_region
      %2448 = dma.done [#allocation6], 1536
    $region45: #{tpu_custom_call.1} parent=1 // pred_fallthru
      _
    %2449 = vsyncpa [#allocation5], 1
    %2450 = vsyncpa [#allocation8], 1
    %2451 = vsyncpa [#allocation6], 1

</llo_original>
